<compile_context>
chip_gen: v7x
topology: tpu7x:2x2x1
jax: 0.10.0
libtpu: 0.0.40
codegen_flags: <defaults>
</compile_context>

<pallas_src>
import functools

import jax
import jax.numpy as jnp
from jax import lax
from jax.experimental import pallas as pl
from jax.experimental.pallas import tpu as pltpu

EPS = 1e-5
NEG_SLOPE = 0.2
VMEM_LIMIT = 32 * 1024 * 1024   # safe on v5e/v6e/v7x; tiles below are far smaller anyway
_CONV_TM = 512                  # row tile for the conv blocks (≈85% HBM roofline per guide)
_MLP_TN = 256                   # row tile for the MLP head


def _round_up(a, b):
    return (a + b - 1) // b * b


# ----------------------------------------------------------------------------- kernels
def conv_matmul_stats_kernel(p_ref, w_ref, y_ref, s_ref, ss_ref):
    """Pass 1: im2col-conv as matmul + per-channel sum / sum-of-squares accumulation.

    p_ref:  [TM, K]    patch tile (bf16), padded rows are zero
    w_ref:  [K, Cout]  conv weight (bf16)
    y_ref:  [TM, Cout] pre-BN conv output tile (bf16)
    s_ref, ss_ref: [1, Cout] f32 accumulators (grid-resident across the M axis)
    """
    @pl.when(pl.program_id(0) == 0)
    def _():
        s_ref[...] = jnp.zeros_like(s_ref)
        ss_ref[...] = jnp.zeros_like(ss_ref)

    y = jnp.dot(p_ref[...], w_ref[...], preferred_element_type=jnp.float32)
    y_ref[...] = y.astype(y_ref.dtype)
    # Zero-padded rows contribute exactly zero to both sums (no conv bias here).
    s_ref[...] += jnp.sum(y, axis=0, keepdims=True)
    ss_ref[...] += jnp.sum(y * y, axis=0, keepdims=True)


def bn_lrelu_kernel(y_ref, s_ref, ss_ref, g_ref, b_ref, o_ref, *, inv_m):
    """Pass 2: BatchNorm (training-mode batch stats, biased var, eps=1e-5) + LeakyReLU."""
    y = y_ref[...].astype(jnp.float32)
    mean = s_ref[...] * inv_m
    var = ss_ref[...] * inv_m - mean * mean          # single-sweep stats
    scale = lax.rsqrt(var + EPS) * g_ref[...]
    yn = (y - mean) * scale + b_ref[...]
    o_ref[...] = jnp.where(yn > 0, yn, NEG_SLOPE * yn).astype(o_ref.dtype)


def mlp_head_kernel(x_ref, w1_ref, b1_ref, w2_ref, b2_ref, w3_ref, b3_ref, o_ref):
    """Fused Linear(800,32)+LReLU -> Linear(32,32)+LReLU -> Linear(32,2) on a row tile."""
    h = jnp.dot(x_ref[...], w1_ref[...], preferred_element_type=jnp.float32) + b1_ref[...]
    h = jnp.where(h > 0, h, NEG_SLOPE * h)
    h = jnp.dot(h.astype(jnp.bfloat16), w2_ref[...],
                preferred_element_type=jnp.float32) + b2_ref[...]
    h = jnp.where(h > 0, h, NEG_SLOPE * h)
    o_ref[...] = jnp.dot(h.astype(jnp.bfloat16), w3_ref[...],
                         preferred_element_type=jnp.float32) + b3_ref[...]


# ----------------------------------------------------------------------------- glue
def im2col_nhwc(x, k, stride):
    """x: [N, H, W, C] -> patches [N*Hout*Wout, k*k*C], column order (kh, kw, c)."""
    n, h, w, c = x.shape
    hout = (h - k) // stride + 1
    wout = (w - k) // stride + 1
    cols = []
    for kh in range(k):
        for kw in range(k):
            cols.append(x[:, kh:kh + stride * (hout - 1) + 1:stride,
                             kw:kw + stride * (wout - 1) + 1:stride, :])
    p = jnp.concatenate(cols, axis=-1)                       # [N, Hout, Wout, k*k*C]
    return p.reshape(n * hout * wout, k * k * c), hout, wout


def conv_bn_lrelu_block(x_nhwc, w, gamma, beta, stride=2):
    """x_nhwc: [N, H, W, Cin] (bf16); w: [Cout, Cin, K, K] (PyTorch OIHW, f32).

    Returns [N, Hout, Wout, Cout] in bf16.  Conv bias omitted on purpose: training-mode
    BatchNorm's per-channel mean subtraction cancels it exactly.
    """
    n = x_nhwc.shape[0]
    cout, cin, k, _ = w.shape
    patches, hout, wout = im2col_nhwc(x_nhwc, k, stride)
    kdim = cin * k * k
    m = n * hout * wout

    tm = min(_CONV_TM, _round_up(m, 8))
    m_pad = _round_up(m, tm)
    if m_pad != m:
        patches = jnp.pad(patches, ((0, m_pad - m), (0, 0)))   # zero rows -> zero stats
    grid = (m_pad // tm,)

    # [Cout, Cin, kh, kw] -> [kh*kw*Cin, Cout] to match the (kh, kw, c) patch columns.
    w_mat = jnp.transpose(w, (2, 3, 1, 0)).reshape(kdim, cout).astype(jnp.bfloat16)

    # --- pass 1: matmul + stats ------------------------------------------------------
    y, s, ss = pl.pallas_call(
        conv_matmul_stats_kernel,
        out_shape=(jax.ShapeDtypeStruct((m_pad, cout), jnp.bfloat16),
                   jax.ShapeDtypeStruct((1, cout), jnp.float32),
                   jax.ShapeDtypeStruct((1, cout), jnp.float32)),
        grid=grid,
        in_specs=[pl.BlockSpec((tm, kdim), lambda i: (i, 0)),
                  pl.BlockSpec((kdim, cout), lambda i: (0, 0))],
        out_specs=(pl.BlockSpec((tm, cout), lambda i: (i, 0)),
                   pl.BlockSpec((1, cout), lambda i: (0, 0)),
                   pl.BlockSpec((1, cout), lambda i: (0, 0))),
        compiler_params=pltpu.CompilerParams(
            dimension_semantics=("arbitrary",),     # stats accumulate across this axis
            vmem_limit_bytes=VMEM_LIMIT),
        cost_estimate=pl.CostEstimate(
            flops=2 * m_pad * kdim * cout,
            transcendentals=0,
            bytes_accessed=2 * m_pad * kdim + 2 * kdim * cout + 2 * m_pad * cout + 8 * cout),
    )(patches, w_mat)

    # --- pass 2: normalize + LeakyReLU -----------------------------------------------
    out = pl.pallas_call(
        functools.partial(bn_lrelu_kernel, inv_m=1.0 / m),
        out_shape=jax.ShapeDtypeStruct((m_pad, cout), jnp.bfloat16),
        grid=grid,
        in_specs=[pl.BlockSpec((tm, cout), lambda i: (i, 0)),
                  pl.BlockSpec((1, cout), lambda i: (0, 0)),
                  pl.BlockSpec((1, cout), lambda i: (0, 0)),
                  pl.BlockSpec((1, cout), lambda i: (0, 0)),
                  pl.BlockSpec((1, cout), lambda i: (0, 0))],
        out_specs=pl.BlockSpec((tm, cout), lambda i: (i, 0)),
        compiler_params=pltpu.CompilerParams(
            dimension_semantics=("parallel",),      # independent row tiles -> megacore
            vmem_limit_bytes=VMEM_LIMIT),
        cost_estimate=pl.CostEstimate(
            flops=8 * m_pad * cout,
            transcendentals=cout,
            bytes_accessed=4 * m_pad * cout + 16 * cout),
    )(y, s, ss,
      gamma.reshape(1, cout).astype(jnp.float32),
      beta.reshape(1, cout).astype(jnp.float32))

    return out[:m].reshape(n, hout, wout, cout)


def mlp_head(x_flat, w1, b1, w2, b2, w3, b3):
    """x_flat: [N, 800] bf16 (NHWC flatten order) -> [N, 2] f32."""
    n, d_in = x_flat.shape
    d_h = w1.shape[1]
    d_out = w3.shape[1]

    tn = min(_MLP_TN, _round_up(n, 8))
    n_pad = _round_up(n, tn)
    if n_pad != n:
        x_flat = jnp.pad(x_flat, ((0, n_pad - n), (0, 0)))
    grid = (n_pad // tn,)

    out = pl.pallas_call(
        mlp_head_kernel,
        out_shape=jax.ShapeDtypeStruct((n_pad, d_out), jnp.float32),
        grid=grid,
        in_specs=[pl.BlockSpec((tn, d_in), lambda i: (i, 0)),
                  pl.BlockSpec((d_in, d_h), lambda i: (0, 0)),
                  pl.BlockSpec((1, d_h), lambda i: (0, 0)),
                  pl.BlockSpec((d_h, d_h), lambda i: (0, 0)),
                  pl.BlockSpec((1, d_h), lambda i: (0, 0)),
                  pl.BlockSpec((d_h, d_out), lambda i: (0, 0)),
                  pl.BlockSpec((1, d_out), lambda i: (0, 0))],
        out_specs=pl.BlockSpec((tn, d_out), lambda i: (i, 0)),
        compiler_params=pltpu.CompilerParams(
            dimension_semantics=("parallel",),
            vmem_limit_bytes=VMEM_LIMIT),
        cost_estimate=pl.CostEstimate(
            flops=2 * n_pad * (d_in * d_h + d_h * d_h + d_h * d_out),
            transcendentals=0,
            bytes_accessed=2 * n_pad * d_in + 2 * (d_in * d_h + d_h * d_h + d_h * d_out)
                           + 4 * n_pad * d_out),
    )(x_flat.astype(jnp.bfloat16),
      w1.astype(jnp.bfloat16), b1.reshape(1, d_h).astype(jnp.float32),
      w2.astype(jnp.bfloat16), b2.reshape(1, d_h).astype(jnp.float32),
      w3.astype(jnp.bfloat16), b3.reshape(1, d_out).astype(jnp.float32))
    return out[:n]


def init_params(key, im_chan=1, hidden_dim=16, projection_dim=2, kernel_size=4):
    ks = jax.random.split(key, 8)
    flat = (kernel_size + 1) ** 2 * (hidden_dim * 2)   # (4+1)^2 * 32 = 800
    s = 0.05
    p = {}
    # block1 conv + BN
    p["w1"] = s * jax.random.normal(ks[0], (hidden_dim, im_chan, kernel_size, kernel_size), jnp.float32)
    p["b1"] = s * jax.random.normal(ks[1], (hidden_dim,), jnp.float32)   # cancelled by BN (kept for reference)
    p["g1"] = jnp.ones((hidden_dim,), jnp.float32)
    p["bt1"] = jnp.zeros((hidden_dim,), jnp.float32)
    # block2 conv + BN
    p["w2"] = s * jax.random.normal(ks[2], (hidden_dim * 2, hidden_dim, kernel_size, kernel_size), jnp.float32)
    p["b2"] = s * jax.random.normal(ks[3], (hidden_dim * 2,), jnp.float32)
    p["g2"] = jnp.ones((hidden_dim * 2,), jnp.float32)
    p["bt2"] = jnp.zeros((hidden_dim * 2,), jnp.float32)
    # block3 MLP head: Linear(800,32) -> Linear(32,32) -> Linear(32,2)
    p["fw1"] = s * jax.random.normal(ks[4], (flat, hidden_dim * 2), jnp.float32)
    p["fb1"] = s * jax.random.normal(ks[5], (hidden_dim * 2,), jnp.float32)
    p["fw2"] = s * jax.random.normal(ks[6], (hidden_dim * 2, hidden_dim * 2), jnp.float32)
    p["fb2"] = jnp.zeros((hidden_dim * 2,), jnp.float32)
    p["fw3"] = s * jax.random.normal(ks[7], (hidden_dim * 2, projection_dim), jnp.float32)
    p["fb3"] = jnp.zeros((projection_dim,), jnp.float32)
    return p


@jax.jit
def embedding_net_forward(x, p):
    """x: [N, 1, 28, 28] (NCHW f32, like PyTorch) -> [N, 2] f32."""
    # Single NCHW->NHWC relayout at entry; everything downstream stays NHWC / [M, C].
    x_nhwc = jnp.transpose(x, (0, 2, 3, 1)).astype(jnp.bfloat16)
    h1 = conv_bn_lrelu_block(x_nhwc, p["w1"], p["g1"], p["bt1"])      # [N,13,13,16]
    h2 = conv_bn_lrelu_block(h1, p["w2"], p["g2"], p["bt2"])          # [N, 5, 5,32]

    n, hout, wout, cout = h2.shape
    flat = h2.reshape(n, hout * wout * cout)                          # NHWC flatten
    # Permute fw1's rows once so it consumes NHWC flatten order (h,w,c) instead of
    # PyTorch's NCHW flatten order (c,h,w).  Bit-exact re-layout of the weight.
    fw1 = (p["fw1"].reshape(cout, hout, wout, -1)
           .transpose(1, 2, 0, 3)
           .reshape(hout * wout * cout, -1))
    return mlp_head(flat, fw1, p["fb1"], p["fw2"], p["fb2"], p["fw3"], p["fb3"])


# ----------------------------------------------------------------------------- reference (pure JAX, f32, NCHW)
def reference_forward(x, p):
    def block(x, w, b, g, bt):
        y = lax.conv_general_dilated(x, w, (2, 2), "VALID",
                                     dimension_numbers=("NCHW", "OIHW", "NCHW"))
        y = y + b.reshape(1, -1, 1, 1)
        mean = jnp.mean(y, axis=(0, 2, 3), keepdims=True)
        var = jnp.mean((y - mean) ** 2, axis=(0, 2, 3), keepdims=True)
        y = (y - mean) * lax.rsqrt(var + EPS) * g.reshape(1, -1, 1, 1) + bt.reshape(1, -1, 1, 1)
        return jnp.where(y > 0, y, NEG_SLOPE * y)

    h = block(x, p["w1"], p["b1"], p["g1"], p["bt1"])
    h = block(h, p["w2"], p["b2"], p["g2"], p["bt2"])
    h = h.reshape(h.shape[0], -1)                                     # NCHW flatten
    h = h @ p["fw1"] + p["fb1"]
    h = jnp.where(h > 0, h, NEG_SLOPE * h)
    h = h @ p["fw2"] + p["fb2"]
    h = jnp.where(h > 0, h, NEG_SLOPE * h)
    return h @ p["fw3"] + p["fb3"]


if __name__ == "__main__":
    key = jax.random.PRNGKey(0)
    kx, kp = jax.random.split(key)
    # batch=2, im_chan=1, 28x28 (28 required so the flatten is 800, matching
    # Linear(_get_flattened_shape(4, 32)=800, 32) in the PyTorch module).
    x = jax.random.normal(kx, (2, 1, 28, 28), jnp.float32)
    params = init_params(kp)

    out = jax.block_until_ready(embedding_net_forward(x, params))
    assert out.shape == (2, 2) and out.dtype == jnp.float32

    ref = jax.block_until_ready(reference_forward(x, params))
    # bf16 matmul operands / bf16 intermediates vs f32 reference; observed error ~1e-3.
    assert jnp.allclose(out, ref, rtol=2e-2, atol=2e-2), (out, ref)

    print("KERNEL_OK")
</pallas_src>

<mosaic_0001>
module attributes {stable_mosaic.version = 11 : i64} {
  func.func @conv_matmul_stats_kernel(%arg0: i32, %arg1: memref<344x16xbf16, #tpu.memory_space<vmem>>, %arg2: memref<16x16xbf16, #tpu.memory_space<vmem>>, %arg3: memref<344x16xbf16, #tpu.memory_space<vmem>>, %arg4: memref<1x16xf32, #tpu.memory_space<vmem>>, %arg5: memref<1x16xf32, #tpu.memory_space<vmem>>) attributes {dimension_semantics = [#tpu.dimension_semantics<arbitrary>], iteration_bounds = array<i64: 1>, scalar_prefetch = 0 : i64, scratch_operands = 0 : i64, tpu.core_type = #tpu.core_type<tc>, window_params = [{transform_indices = @transform_0, window_bounds = array<i64: 344, 16>}, {pipeline_mode = #tpu.pipeline_mode<synchronous>, transform_indices = @transform_1, window_bounds = array<i64: 16, 16>}, {transform_indices = @transform_2, window_bounds = array<i64: 344, 16>}, {pipeline_mode = #tpu.pipeline_mode<synchronous>, transform_indices = @transform_3, window_bounds = array<i64: 1, 16>}, {pipeline_mode = #tpu.pipeline_mode<synchronous>, transform_indices = @transform_4, window_bounds = array<i64: 1, 16>}]} {
    %c0_i32 = arith.constant 0 : i32
    %0 = arith.cmpi eq, %arg0, %c0_i32 : i32
    %1 = arith.extui %0 : i1 to i32
    %c0_i32_0 = arith.constant 0 : i32
    %2 = arith.cmpi ne, %1, %c0_i32_0 : i32
    scf.if %2 {
      %cst_16 = arith.constant 0.000000e+00 : f32
      %19 = vector.broadcast %cst_16 : f32 to vector<1x16xf32>
      %c0_17 = arith.constant 0 : index
      %c0_18 = arith.constant 0 : index
      %20 = vector.load %arg4[%c0_17, %c0_18] : memref<1x16xf32, #tpu.memory_space<vmem>>, vector<1x16xf32>
      tpu.vector_store %arg4[%c0_17, %c0_18], %19 {strides = array<i32>} : memref<1x16xf32, #tpu.memory_space<vmem>>, vector<1x16xf32>,
      %cst_19 = arith.constant 0.000000e+00 : f32
      %21 = vector.broadcast %cst_19 : f32 to vector<1x16xf32>
      %c0_20 = arith.constant 0 : index
      %c0_21 = arith.constant 0 : index
      %22 = vector.load %arg5[%c0_20, %c0_21] : memref<1x16xf32, #tpu.memory_space<vmem>>, vector<1x16xf32>
      tpu.vector_store %arg5[%c0_20, %c0_21], %21 {strides = array<i32>} : memref<1x16xf32, #tpu.memory_space<vmem>>, vector<1x16xf32>,
    } else {
    }
    %c0 = arith.constant 0 : index
    %c0_1 = arith.constant 0 : index
    %3 = vector.load %arg1[%c0, %c0_1] : memref<344x16xbf16, #tpu.memory_space<vmem>>, vector<344x16xbf16>
    %c0_2 = arith.constant 0 : index
    %c0_3 = arith.constant 0 : index
    %4 = vector.load %arg2[%c0_2, %c0_3] : memref<16x16xbf16, #tpu.memory_space<vmem>>, vector<16x16xbf16>
    %cst = arith.constant dense<0.000000e+00> : vector<344x16xf32>
    %5 = tpu.matmul %3, %4, %cst {dimension_numbers = #tpu.dot_dimension_numbers<[1], [0], [0], [1], [0, 0, 1, 1], [], []>} : vector<344x16xbf16>, vector<16x16xbf16>, vector<344x16xf32> -> vector<344x16xf32>
    %6 = arith.truncf %5 : vector<344x16xf32> to vector<344x16xbf16>
    %c0_4 = arith.constant 0 : index
    %c0_5 = arith.constant 0 : index
    %7 = vector.load %arg3[%c0_4, %c0_5] : memref<344x16xbf16, #tpu.memory_space<vmem>>, vector<344x16xbf16>
    tpu.vector_store %arg3[%c0_4, %c0_5], %6 {strides = array<i32>} : memref<344x16xbf16, #tpu.memory_space<vmem>>, vector<344x16xbf16>,
    %c0_6 = arith.constant 0 : index
    %c0_7 = arith.constant 0 : index
    %8 = vector.load %arg4[%c0_6, %c0_7] : memref<1x16xf32, #tpu.memory_space<vmem>>, vector<1x16xf32>
    %cst_8 = arith.constant dense<0.000000e+00> : vector<16xf32>
    %9 = vector.multi_reduction <add>, %5, %cst_8 [0] : vector<344x16xf32> to vector<16xf32>
    %10 = vector.shape_cast %9 : vector<16xf32> to vector<1x16xf32>
    %11 = arith.addf %8, %10 : vector<1x16xf32>
    %c0_9 = arith.constant 0 : index
    %c0_10 = arith.constant 0 : index
    %12 = vector.load %arg4[%c0_9, %c0_10] : memref<1x16xf32, #tpu.memory_space<vmem>>, vector<1x16xf32>
    tpu.vector_store %arg4[%c0_9, %c0_10], %11 {strides = array<i32>} : memref<1x16xf32, #tpu.memory_space<vmem>>, vector<1x16xf32>,
    %c0_11 = arith.constant 0 : index
    %c0_12 = arith.constant 0 : index
    %13 = vector.load %arg5[%c0_11, %c0_12] : memref<1x16xf32, #tpu.memory_space<vmem>>, vector<1x16xf32>
    %14 = arith.mulf %5, %5 : vector<344x16xf32>
    %cst_13 = arith.constant dense<0.000000e+00> : vector<16xf32>
    %15 = vector.multi_reduction <add>, %14, %cst_13 [0] : vector<344x16xf32> to vector<16xf32>
    %16 = vector.shape_cast %15 : vector<16xf32> to vector<1x16xf32>
    %17 = arith.addf %13, %16 : vector<1x16xf32>
    %c0_14 = arith.constant 0 : index
    %c0_15 = arith.constant 0 : index
    %18 = vector.load %arg5[%c0_14, %c0_15] : memref<1x16xf32, #tpu.memory_space<vmem>>, vector<1x16xf32>
    tpu.vector_store %arg5[%c0_14, %c0_15], %17 {strides = array<i32>} : memref<1x16xf32, #tpu.memory_space<vmem>>, vector<1x16xf32>,
    return
  }
  func.func @transform_0(%arg0: i32) -> (i32, i32) {
    %c0_i32 = arith.constant 0 : i32
    %c0_i32_0 = arith.constant 0 : i32
    return %arg0, %c0_i32 : i32, i32
  }
  func.func @transform_1(%arg0: i32) -> (i32, i32) {
    %c0_i32 = arith.constant 0 : i32
    %c0_i32_0 = arith.constant 0 : i32
    %c0_i32_1 = arith.constant 0 : i32
    return %c0_i32, %c0_i32_0 : i32, i32
  }
  func.func @transform_2(%arg0: i32) -> (i32, i32) {
    %c0_i32 = arith.constant 0 : i32
    %c0_i32_0 = arith.constant 0 : i32
    return %arg0, %c0_i32 : i32, i32
  }
  func.func @transform_3(%arg0: i32) -> (i32, i32) {
    %c0_i32 = arith.constant 0 : i32
    %c0_i32_0 = arith.constant 0 : i32
    %c0_i32_1 = arith.constant 0 : i32
    return %c0_i32, %c0_i32_0 : i32, i32
  }
  func.func @transform_4(%arg0: i32) -> (i32, i32) {
    %c0_i32 = arith.constant 0 : i32
    %c0_i32_0 = arith.constant 0 : i32
    %c0_i32_1 = arith.constant 0 : i32
    return %c0_i32, %c0_i32_0 : i32, i32
  }
}

module attributes {stable_mosaic.version = 11 : i64} {
  func.func @bn_lrelu_kernel(%arg0: i32, %arg1: memref<344x16xbf16, #tpu.memory_space<vmem>>, %arg2: memref<1x16xf32, #tpu.memory_space<vmem>>, %arg3: memref<1x16xf32, #tpu.memory_space<vmem>>, %arg4: memref<1x16xf32, #tpu.memory_space<vmem>>, %arg5: memref<1x16xf32, #tpu.memory_space<vmem>>, %arg6: memref<344x16xbf16, #tpu.memory_space<vmem>>) attributes {dimension_semantics = [#tpu.dimension_semantics<parallel>], iteration_bounds = array<i64: 1>, scalar_prefetch = 0 : i64, scratch_operands = 0 : i64, tpu.core_type = #tpu.core_type<tc>, window_params = [{transform_indices = @transform_0, window_bounds = array<i64: 344, 16>}, {pipeline_mode = #tpu.pipeline_mode<synchronous>, transform_indices = @transform_1, window_bounds = array<i64: 1, 16>}, {pipeline_mode = #tpu.pipeline_mode<synchronous>, transform_indices = @transform_2, window_bounds = array<i64: 1, 16>}, {pipeline_mode = #tpu.pipeline_mode<synchronous>, transform_indices = @transform_3, window_bounds = array<i64: 1, 16>}, {pipeline_mode = #tpu.pipeline_mode<synchronous>, transform_indices = @transform_4, window_bounds = array<i64: 1, 16>}, {transform_indices = @transform_5, window_bounds = array<i64: 344, 16>}]} {
    %c0 = arith.constant 0 : index
    %c0_0 = arith.constant 0 : index
    %0 = vector.load %arg1[%c0, %c0_0] : memref<344x16xbf16, #tpu.memory_space<vmem>>, vector<344x16xbf16>
    %1 = arith.extf %0 : vector<344x16xbf16> to vector<344x16xf32>
    %c0_1 = arith.constant 0 : index
    %c0_2 = arith.constant 0 : index
    %2 = vector.load %arg2[%c0_1, %c0_2] : memref<1x16xf32, #tpu.memory_space<vmem>>, vector<1x16xf32>
    %cst = arith.constant 2.958580e-03 : f32
    %3 = vector.broadcast %cst : f32 to vector<1x16xf32>
    %4 = arith.mulf %2, %3 : vector<1x16xf32>
    %c0_3 = arith.constant 0 : index
    %c0_4 = arith.constant 0 : index
    %5 = vector.load %arg3[%c0_3, %c0_4] : memref<1x16xf32, #tpu.memory_space<vmem>>, vector<1x16xf32>
    %cst_5 = arith.constant 2.958580e-03 : f32
    %6 = vector.broadcast %cst_5 : f32 to vector<1x16xf32>
    %7 = arith.mulf %5, %6 : vector<1x16xf32>
    %8 = arith.mulf %4, %4 : vector<1x16xf32>
    %9 = arith.subf %7, %8 : vector<1x16xf32>
    %cst_6 = arith.constant 9.99999974E-6 : f32
    %10 = vector.broadcast %cst_6 : f32 to vector<1x16xf32>
    %11 = arith.addf %9, %10 : vector<1x16xf32>
    %12 = math.rsqrt %11 : vector<1x16xf32>
    %c0_7 = arith.constant 0 : index
    %c0_8 = arith.constant 0 : index
    %13 = vector.load %arg4[%c0_7, %c0_8] : memref<1x16xf32, #tpu.memory_space<vmem>>, vector<1x16xf32>
    %14 = arith.mulf %12, %13 : vector<1x16xf32>
    %15 = vector.broadcast %4 : vector<1x16xf32> to vector<344x16xf32>
    %16 = arith.subf %1, %15 : vector<344x16xf32>
    %17 = vector.broadcast %14 : vector<1x16xf32> to vector<344x16xf32>
    %18 = arith.mulf %16, %17 : vector<344x16xf32>
    %c0_9 = arith.constant 0 : index
    %c0_10 = arith.constant 0 : index
    %19 = vector.load %arg5[%c0_9, %c0_10] : memref<1x16xf32, #tpu.memory_space<vmem>>, vector<1x16xf32>
    %20 = vector.broadcast %19 : vector<1x16xf32> to vector<344x16xf32>
    %21 = arith.addf %18, %20 : vector<344x16xf32>
    %cst_11 = arith.constant 0.000000e+00 : f32
    %22 = vector.broadcast %cst_11 : f32 to vector<344x16xf32>
    %23 = arith.cmpf ogt, %21, %22 : vector<344x16xf32>
    %cst_12 = arith.constant 2.000000e-01 : f32
    %24 = vector.broadcast %cst_12 : f32 to vector<344x16xf32>
    %25 = arith.mulf %24, %21 : vector<344x16xf32>
    %26 = arith.select %23, %21, %25 : vector<344x16xi1>, vector<344x16xf32>
    %27 = arith.truncf %26 : vector<344x16xf32> to vector<344x16xbf16>
    %c0_13 = arith.constant 0 : index
    %c0_14 = arith.constant 0 : index
    %28 = vector.load %arg6[%c0_13, %c0_14] : memref<344x16xbf16, #tpu.memory_space<vmem>>, vector<344x16xbf16>
    tpu.vector_store %arg6[%c0_13, %c0_14], %27 {strides = array<i32>} : memref<344x16xbf16, #tpu.memory_space<vmem>>, vector<344x16xbf16>,
    return
  }
  func.func @transform_0(%arg0: i32) -> (i32, i32) {
    %c0_i32 = arith.constant 0 : i32
    %c0_i32_0 = arith.constant 0 : i32
    return %arg0, %c0_i32 : i32, i32
  }
  func.func @transform_1(%arg0: i32) -> (i32, i32) {
    %c0_i32 = arith.constant 0 : i32
    %c0_i32_0 = arith.constant 0 : i32
    %c0_i32_1 = arith.constant 0 : i32
    return %c0_i32, %c0_i32_0 : i32, i32
  }
  func.func @transform_2(%arg0: i32) -> (i32, i32) {
    %c0_i32 = arith.constant 0 : i32
    %c0_i32_0 = arith.constant 0 : i32
    %c0_i32_1 = arith.constant 0 : i32
    return %c0_i32, %c0_i32_0 : i32, i32
  }
  func.func @transform_3(%arg0: i32) -> (i32, i32) {
    %c0_i32 = arith.constant 0 : i32
    %c0_i32_0 = arith.constant 0 : i32
    %c0_i32_1 = arith.constant 0 : i32
    return %c0_i32, %c0_i32_0 : i32, i32
  }
  func.func @transform_4(%arg0: i32) -> (i32, i32) {
    %c0_i32 = arith.constant 0 : i32
    %c0_i32_0 = arith.constant 0 : i32
    %c0_i32_1 = arith.constant 0 : i32
    return %c0_i32, %c0_i32_0 : i32, i32
  }
  func.func @transform_5(%arg0: i32) -> (i32, i32) {
    %c0_i32 = arith.constant 0 : i32
    %c0_i32_0 = arith.constant 0 : i32
    return %arg0, %c0_i32 : i32, i32
  }
}

module attributes {stable_mosaic.version = 11 : i64} {
  func.func @bn_lrelu_kernel(%arg0: i32, %arg1: memref<56x32xbf16, #tpu.memory_space<vmem>>, %arg2: memref<1x32xf32, #tpu.memory_space<vmem>>, %arg3: memref<1x32xf32, #tpu.memory_space<vmem>>, %arg4: memref<1x32xf32, #tpu.memory_space<vmem>>, %arg5: memref<1x32xf32, #tpu.memory_space<vmem>>, %arg6: memref<56x32xbf16, #tpu.memory_space<vmem>>) attributes {dimension_semantics = [#tpu.dimension_semantics<parallel>], iteration_bounds = array<i64: 1>, scalar_prefetch = 0 : i64, scratch_operands = 0 : i64, tpu.core_type = #tpu.core_type<tc>, window_params = [{transform_indices = @transform_0, window_bounds = array<i64: 56, 32>}, {pipeline_mode = #tpu.pipeline_mode<synchronous>, transform_indices = @transform_1, window_bounds = array<i64: 1, 32>}, {pipeline_mode = #tpu.pipeline_mode<synchronous>, transform_indices = @transform_2, window_bounds = array<i64: 1, 32>}, {pipeline_mode = #tpu.pipeline_mode<synchronous>, transform_indices = @transform_3, window_bounds = array<i64: 1, 32>}, {pipeline_mode = #tpu.pipeline_mode<synchronous>, transform_indices = @transform_4, window_bounds = array<i64: 1, 32>}, {transform_indices = @transform_5, window_bounds = array<i64: 56, 32>}]} {
    %c0 = arith.constant 0 : index
    %c0_0 = arith.constant 0 : index
    %0 = vector.load %arg1[%c0, %c0_0] : memref<56x32xbf16, #tpu.memory_space<vmem>>, vector<56x32xbf16>
    %1 = arith.extf %0 : vector<56x32xbf16> to vector<56x32xf32>
    %c0_1 = arith.constant 0 : index
    %c0_2 = arith.constant 0 : index
    %2 = vector.load %arg2[%c0_1, %c0_2] : memref<1x32xf32, #tpu.memory_space<vmem>>, vector<1x32xf32>
    %cst = arith.constant 2.000000e-02 : f32
    %3 = vector.broadcast %cst : f32 to vector<1x32xf32>
    %4 = arith.mulf %2, %3 : vector<1x32xf32>
    %c0_3 = arith.constant 0 : index
    %c0_4 = arith.constant 0 : index
    %5 = vector.load %arg3[%c0_3, %c0_4] : memref<1x32xf32, #tpu.memory_space<vmem>>, vector<1x32xf32>
    %cst_5 = arith.constant 2.000000e-02 : f32
    %6 = vector.broadcast %cst_5 : f32 to vector<1x32xf32>
    %7 = arith.mulf %5, %6 : vector<1x32xf32>
    %8 = arith.mulf %4, %4 : vector<1x32xf32>
    %9 = arith.subf %7, %8 : vector<1x32xf32>
    %cst_6 = arith.constant 9.99999974E-6 : f32
    %10 = vector.broadcast %cst_6 : f32 to vector<1x32xf32>
    %11 = arith.addf %9, %10 : vector<1x32xf32>
    %12 = math.rsqrt %11 : vector<1x32xf32>
    %c0_7 = arith.constant 0 : index
    %c0_8 = arith.constant 0 : index
    %13 = vector.load %arg4[%c0_7, %c0_8] : memref<1x32xf32, #tpu.memory_space<vmem>>, vector<1x32xf32>
    %14 = arith.mulf %12, %13 : vector<1x32xf32>
    %15 = vector.broadcast %4 : vector<1x32xf32> to vector<56x32xf32>
    %16 = arith.subf %1, %15 : vector<56x32xf32>
    %17 = vector.broadcast %14 : vector<1x32xf32> to vector<56x32xf32>
    %18 = arith.mulf %16, %17 : vector<56x32xf32>
    %c0_9 = arith.constant 0 : index
    %c0_10 = arith.constant 0 : index
    %19 = vector.load %arg5[%c0_9, %c0_10] : memref<1x32xf32, #tpu.memory_space<vmem>>, vector<1x32xf32>
    %20 = vector.broadcast %19 : vector<1x32xf32> to vector<56x32xf32>
    %21 = arith.addf %18, %20 : vector<56x32xf32>
    %cst_11 = arith.constant 0.000000e+00 : f32
    %22 = vector.broadcast %cst_11 : f32 to vector<56x32xf32>
    %23 = arith.cmpf ogt, %21, %22 : vector<56x32xf32>
    %cst_12 = arith.constant 2.000000e-01 : f32
    %24 = vector.broadcast %cst_12 : f32 to vector<56x32xf32>
    %25 = arith.mulf %24, %21 : vector<56x32xf32>
    %26 = arith.select %23, %21, %25 : vector<56x32xi1>, vector<56x32xf32>
    %27 = arith.truncf %26 : vector<56x32xf32> to vector<56x32xbf16>
    %c0_13 = arith.constant 0 : index
    %c0_14 = arith.constant 0 : index
    %28 = vector.load %arg6[%c0_13, %c0_14] : memref<56x32xbf16, #tpu.memory_space<vmem>>, vector<56x32xbf16>
    tpu.vector_store %arg6[%c0_13, %c0_14], %27 {strides = array<i32>} : memref<56x32xbf16, #tpu.memory_space<vmem>>, vector<56x32xbf16>,
    return
  }
  func.func @transform_0(%arg0: i32) -> (i32, i32) {
    %c0_i32 = arith.constant 0 : i32
    %c0_i32_0 = arith.constant 0 : i32
    return %arg0, %c0_i32 : i32, i32
  }
  func.func @transform_1(%arg0: i32) -> (i32, i32) {
    %c0_i32 = arith.constant 0 : i32
    %c0_i32_0 = arith.constant 0 : i32
    %c0_i32_1 = arith.constant 0 : i32
    return %c0_i32, %c0_i32_0 : i32, i32
  }
  func.func @transform_2(%arg0: i32) -> (i32, i32) {
    %c0_i32 = arith.constant 0 : i32
    %c0_i32_0 = arith.constant 0 : i32
    %c0_i32_1 = arith.constant 0 : i32
    return %c0_i32, %c0_i32_0 : i32, i32
  }
  func.func @transform_3(%arg0: i32) -> (i32, i32) {
    %c0_i32 = arith.constant 0 : i32
    %c0_i32_0 = arith.constant 0 : i32
    %c0_i32_1 = arith.constant 0 : i32
    return %c0_i32, %c0_i32_0 : i32, i32
  }
  func.func @transform_4(%arg0: i32) -> (i32, i32) {
    %c0_i32 = arith.constant 0 : i32
    %c0_i32_0 = arith.constant 0 : i32
    %c0_i32_1 = arith.constant 0 : i32
    return %c0_i32, %c0_i32_0 : i32, i32
  }
  func.func @transform_5(%arg0: i32) -> (i32, i32) {
    %c0_i32 = arith.constant 0 : i32
    %c0_i32_0 = arith.constant 0 : i32
    return %arg0, %c0_i32 : i32, i32
  }
}

module attributes {stable_mosaic.version = 11 : i64} {
  func.func @conv_matmul_stats_kernel(%arg0: i32, %arg1: memref<56x256xbf16, #tpu.memory_space<vmem>>, %arg2: memref<256x32xbf16, #tpu.memory_space<vmem>>, %arg3: memref<56x32xbf16, #tpu.memory_space<vmem>>, %arg4: memref<1x32xf32, #tpu.memory_space<vmem>>, %arg5: memref<1x32xf32, #tpu.memory_space<vmem>>) attributes {dimension_semantics = [#tpu.dimension_semantics<arbitrary>], iteration_bounds = array<i64: 1>, scalar_prefetch = 0 : i64, scratch_operands = 0 : i64, tpu.core_type = #tpu.core_type<tc>, window_params = [{transform_indices = @transform_0, window_bounds = array<i64: 56, 256>}, {pipeline_mode = #tpu.pipeline_mode<synchronous>, transform_indices = @transform_1, window_bounds = array<i64: 256, 32>}, {transform_indices = @transform_2, window_bounds = array<i64: 56, 32>}, {pipeline_mode = #tpu.pipeline_mode<synchronous>, transform_indices = @transform_3, window_bounds = array<i64: 1, 32>}, {pipeline_mode = #tpu.pipeline_mode<synchronous>, transform_indices = @transform_4, window_bounds = array<i64: 1, 32>}]} {
    %c0_i32 = arith.constant 0 : i32
    %0 = arith.cmpi eq, %arg0, %c0_i32 : i32
    %1 = arith.extui %0 : i1 to i32
    %c0_i32_0 = arith.constant 0 : i32
    %2 = arith.cmpi ne, %1, %c0_i32_0 : i32
    scf.if %2 {
      %cst_16 = arith.constant 0.000000e+00 : f32
      %19 = vector.broadcast %cst_16 : f32 to vector<1x32xf32>
      %c0_17 = arith.constant 0 : index
      %c0_18 = arith.constant 0 : index
      %20 = vector.load %arg4[%c0_17, %c0_18] : memref<1x32xf32, #tpu.memory_space<vmem>>, vector<1x32xf32>
      tpu.vector_store %arg4[%c0_17, %c0_18], %19 {strides = array<i32>} : memref<1x32xf32, #tpu.memory_space<vmem>>, vector<1x32xf32>,
      %cst_19 = arith.constant 0.000000e+00 : f32
      %21 = vector.broadcast %cst_19 : f32 to vector<1x32xf32>
      %c0_20 = arith.constant 0 : index
      %c0_21 = arith.constant 0 : index
      %22 = vector.load %arg5[%c0_20, %c0_21] : memref<1x32xf32, #tpu.memory_space<vmem>>, vector<1x32xf32>
      tpu.vector_store %arg5[%c0_20, %c0_21], %21 {strides = array<i32>} : memref<1x32xf32, #tpu.memory_space<vmem>>, vector<1x32xf32>,
    } else {
    }
    %c0 = arith.constant 0 : index
    %c0_1 = arith.constant 0 : index
    %3 = vector.load %arg1[%c0, %c0_1] : memref<56x256xbf16, #tpu.memory_space<vmem>>, vector<56x256xbf16>
    %c0_2 = arith.constant 0 : index
    %c0_3 = arith.constant 0 : index
    %4 = vector.load %arg2[%c0_2, %c0_3] : memref<256x32xbf16, #tpu.memory_space<vmem>>, vector<256x32xbf16>
    %cst = arith.constant dense<0.000000e+00> : vector<56x32xf32>
    %5 = tpu.matmul %3, %4, %cst {dimension_numbers = #tpu.dot_dimension_numbers<[1], [0], [0], [1], [0, 0, 1, 1], [], []>} : vector<56x256xbf16>, vector<256x32xbf16>, vector<56x32xf32> -> vector<56x32xf32>
    %6 = arith.truncf %5 : vector<56x32xf32> to vector<56x32xbf16>
    %c0_4 = arith.constant 0 : index
    %c0_5 = arith.constant 0 : index
    %7 = vector.load %arg3[%c0_4, %c0_5] : memref<56x32xbf16, #tpu.memory_space<vmem>>, vector<56x32xbf16>
    tpu.vector_store %arg3[%c0_4, %c0_5], %6 {strides = array<i32>} : memref<56x32xbf16, #tpu.memory_space<vmem>>, vector<56x32xbf16>,
    %c0_6 = arith.constant 0 : index
    %c0_7 = arith.constant 0 : index
    %8 = vector.load %arg4[%c0_6, %c0_7] : memref<1x32xf32, #tpu.memory_space<vmem>>, vector<1x32xf32>
    %cst_8 = arith.constant dense<0.000000e+00> : vector<32xf32>
    %9 = vector.multi_reduction <add>, %5, %cst_8 [0] : vector<56x32xf32> to vector<32xf32>
    %10 = vector.shape_cast %9 : vector<32xf32> to vector<1x32xf32>
    %11 = arith.addf %8, %10 : vector<1x32xf32>
    %c0_9 = arith.constant 0 : index
    %c0_10 = arith.constant 0 : index
    %12 = vector.load %arg4[%c0_9, %c0_10] : memref<1x32xf32, #tpu.memory_space<vmem>>, vector<1x32xf32>
    tpu.vector_store %arg4[%c0_9, %c0_10], %11 {strides = array<i32>} : memref<1x32xf32, #tpu.memory_space<vmem>>, vector<1x32xf32>,
    %c0_11 = arith.constant 0 : index
    %c0_12 = arith.constant 0 : index
    %13 = vector.load %arg5[%c0_11, %c0_12] : memref<1x32xf32, #tpu.memory_space<vmem>>, vector<1x32xf32>
    %14 = arith.mulf %5, %5 : vector<56x32xf32>
    %cst_13 = arith.constant dense<0.000000e+00> : vector<32xf32>
    %15 = vector.multi_reduction <add>, %14, %cst_13 [0] : vector<56x32xf32> to vector<32xf32>
    %16 = vector.shape_cast %15 : vector<32xf32> to vector<1x32xf32>
    %17 = arith.addf %13, %16 : vector<1x32xf32>
    %c0_14 = arith.constant 0 : index
    %c0_15 = arith.constant 0 : index
    %18 = vector.load %arg5[%c0_14, %c0_15] : memref<1x32xf32, #tpu.memory_space<vmem>>, vector<1x32xf32>
    tpu.vector_store %arg5[%c0_14, %c0_15], %17 {strides = array<i32>} : memref<1x32xf32, #tpu.memory_space<vmem>>, vector<1x32xf32>,
    return
  }
  func.func @transform_0(%arg0: i32) -> (i32, i32) {
    %c0_i32 = arith.constant 0 : i32
    %c0_i32_0 = arith.constant 0 : i32
    return %arg0, %c0_i32 : i32, i32
  }
  func.func @transform_1(%arg0: i32) -> (i32, i32) {
    %c0_i32 = arith.constant 0 : i32
    %c0_i32_0 = arith.constant 0 : i32
    %c0_i32_1 = arith.constant 0 : i32
    return %c0_i32, %c0_i32_0 : i32, i32
  }
  func.func @transform_2(%arg0: i32) -> (i32, i32) {
    %c0_i32 = arith.constant 0 : i32
    %c0_i32_0 = arith.constant 0 : i32
    return %arg0, %c0_i32 : i32, i32
  }
  func.func @transform_3(%arg0: i32) -> (i32, i32) {
    %c0_i32 = arith.constant 0 : i32
    %c0_i32_0 = arith.constant 0 : i32
    %c0_i32_1 = arith.constant 0 : i32
    return %c0_i32, %c0_i32_0 : i32, i32
  }
  func.func @transform_4(%arg0: i32) -> (i32, i32) {
    %c0_i32 = arith.constant 0 : i32
    %c0_i32_0 = arith.constant 0 : i32
    %c0_i32_1 = arith.constant 0 : i32
    return %c0_i32, %c0_i32_0 : i32, i32
  }
}

module attributes {stable_mosaic.version = 11 : i64} {
  func.func @mlp_head_kernel(%arg0: i32, %arg1: memref<8x800xbf16, #tpu.memory_space<vmem>>, %arg2: memref<800x32xbf16, #tpu.memory_space<vmem>>, %arg3: memref<1x32xf32, #tpu.memory_space<vmem>>, %arg4: memref<32x32xbf16, #tpu.memory_space<vmem>>, %arg5: memref<1x32xf32, #tpu.memory_space<vmem>>, %arg6: memref<32x2xbf16, #tpu.memory_space<vmem>>, %arg7: memref<1x2xf32, #tpu.memory_space<vmem>>, %arg8: memref<8x2xf32, #tpu.memory_space<vmem>>) attributes {dimension_semantics = [#tpu.dimension_semantics<parallel>], iteration_bounds = array<i64: 1>, scalar_prefetch = 0 : i64, scratch_operands = 0 : i64, tpu.core_type = #tpu.core_type<tc>, window_params = [{transform_indices = @transform_0, window_bounds = array<i64: 8, 800>}, {pipeline_mode = #tpu.pipeline_mode<synchronous>, transform_indices = @transform_1, window_bounds = array<i64: 800, 32>}, {pipeline_mode = #tpu.pipeline_mode<synchronous>, transform_indices = @transform_2, window_bounds = array<i64: 1, 32>}, {pipeline_mode = #tpu.pipeline_mode<synchronous>, transform_indices = @transform_3, window_bounds = array<i64: 32, 32>}, {pipeline_mode = #tpu.pipeline_mode<synchronous>, transform_indices = @transform_4, window_bounds = array<i64: 1, 32>}, {pipeline_mode = #tpu.pipeline_mode<synchronous>, transform_indices = @transform_5, window_bounds = array<i64: 32, 2>}, {pipeline_mode = #tpu.pipeline_mode<synchronous>, transform_indices = @transform_6, window_bounds = array<i64: 1, 2>}, {transform_indices = @transform_7, window_bounds = array<i64: 8, 2>}]} {
    %c0 = arith.constant 0 : index
    %c0_0 = arith.constant 0 : index
    %0 = vector.load %arg1[%c0, %c0_0] : memref<8x800xbf16, #tpu.memory_space<vmem>>, vector<8x800xbf16>
    %c0_1 = arith.constant 0 : index
    %c0_2 = arith.constant 0 : index
    %1 = vector.load %arg2[%c0_1, %c0_2] : memref<800x32xbf16, #tpu.memory_space<vmem>>, vector<800x32xbf16>
    %cst = arith.constant dense<0.000000e+00> : vector<8x32xf32>
    %2 = tpu.matmul %0, %1, %cst {dimension_numbers = #tpu.dot_dimension_numbers<[1], [0], [0], [1], [0, 0, 1, 1], [], []>} : vector<8x800xbf16>, vector<800x32xbf16>, vector<8x32xf32> -> vector<8x32xf32>
    %c0_3 = arith.constant 0 : index
    %c0_4 = arith.constant 0 : index
    %3 = vector.load %arg3[%c0_3, %c0_4] : memref<1x32xf32, #tpu.memory_space<vmem>>, vector<1x32xf32>
    %4 = vector.broadcast %3 : vector<1x32xf32> to vector<8x32xf32>
    %5 = arith.addf %2, %4 : vector<8x32xf32>
    %cst_5 = arith.constant 0.000000e+00 : f32
    %6 = vector.broadcast %cst_5 : f32 to vector<8x32xf32>
    %7 = arith.cmpf ogt, %5, %6 : vector<8x32xf32>
    %cst_6 = arith.constant 2.000000e-01 : f32
    %8 = vector.broadcast %cst_6 : f32 to vector<8x32xf32>
    %9 = arith.mulf %8, %5 : vector<8x32xf32>
    %10 = arith.select %7, %5, %9 : vector<8x32xi1>, vector<8x32xf32>
    %11 = arith.truncf %10 : vector<8x32xf32> to vector<8x32xbf16>
    %c0_7 = arith.constant 0 : index
    %c0_8 = arith.constant 0 : index
    %12 = vector.load %arg4[%c0_7, %c0_8] : memref<32x32xbf16, #tpu.memory_space<vmem>>, vector<32x32xbf16>
    %cst_9 = arith.constant dense<0.000000e+00> : vector<8x32xf32>
    %13 = tpu.matmul %11, %12, %cst_9 {dimension_numbers = #tpu.dot_dimension_numbers<[1], [0], [0], [1], [0, 0, 1, 1], [], []>} : vector<8x32xbf16>, vector<32x32xbf16>, vector<8x32xf32> -> vector<8x32xf32>
    %c0_10 = arith.constant 0 : index
    %c0_11 = arith.constant 0 : index
    %14 = vector.load %arg5[%c0_10, %c0_11] : memref<1x32xf32, #tpu.memory_space<vmem>>, vector<1x32xf32>
    %15 = vector.broadcast %14 : vector<1x32xf32> to vector<8x32xf32>
    %16 = arith.addf %13, %15 : vector<8x32xf32>
    %cst_12 = arith.constant 0.000000e+00 : f32
    %17 = vector.broadcast %cst_12 : f32 to vector<8x32xf32>
    %18 = arith.cmpf ogt, %16, %17 : vector<8x32xf32>
    %cst_13 = arith.constant 2.000000e-01 : f32
    %19 = vector.broadcast %cst_13 : f32 to vector<8x32xf32>
    %20 = arith.mulf %19, %16 : vector<8x32xf32>
    %21 = arith.select %18, %16, %20 : vector<8x32xi1>, vector<8x32xf32>
    %22 = arith.truncf %21 : vector<8x32xf32> to vector<8x32xbf16>
    %c0_14 = arith.constant 0 : index
    %c0_15 = arith.constant 0 : index
    %23 = vector.load %arg6[%c0_14, %c0_15] : memref<32x2xbf16, #tpu.memory_space<vmem>>, vector<32x2xbf16>
    %cst_16 = arith.constant dense<0.000000e+00> : vector<8x2xf32>
    %24 = tpu.matmul %22, %23, %cst_16 {dimension_numbers = #tpu.dot_dimension_numbers<[1], [0], [0], [1], [0, 0, 1, 1], [], []>} : vector<8x32xbf16>, vector<32x2xbf16>, vector<8x2xf32> -> vector<8x2xf32>
    %c0_17 = arith.constant 0 : index
    %c0_18 = arith.constant 0 : index
    %25 = vector.load %arg7[%c0_17, %c0_18] : memref<1x2xf32, #tpu.memory_space<vmem>>, vector<1x2xf32>
    %26 = vector.broadcast %25 : vector<1x2xf32> to vector<8x2xf32>
    %27 = arith.addf %24, %26 : vector<8x2xf32>
    %c0_19 = arith.constant 0 : index
    %c0_20 = arith.constant 0 : index
    %28 = vector.load %arg8[%c0_19, %c0_20] : memref<8x2xf32, #tpu.memory_space<vmem>>, vector<8x2xf32>
    tpu.vector_store %arg8[%c0_19, %c0_20], %27 {strides = array<i32>} : memref<8x2xf32, #tpu.memory_space<vmem>>, vector<8x2xf32>,
    return
  }
  func.func @transform_0(%arg0: i32) -> (i32, i32) {
    %c0_i32 = arith.constant 0 : i32
    %c0_i32_0 = arith.constant 0 : i32
    return %arg0, %c0_i32 : i32, i32
  }
  func.func @transform_1(%arg0: i32) -> (i32, i32) {
    %c0_i32 = arith.constant 0 : i32
    %c0_i32_0 = arith.constant 0 : i32
    %c0_i32_1 = arith.constant 0 : i32
    return %c0_i32, %c0_i32_0 : i32, i32
  }
  func.func @transform_2(%arg0: i32) -> (i32, i32) {
    %c0_i32 = arith.constant 0 : i32
    %c0_i32_0 = arith.constant 0 : i32
    %c0_i32_1 = arith.constant 0 : i32
    return %c0_i32, %c0_i32_0 : i32, i32
  }
  func.func @transform_3(%arg0: i32) -> (i32, i32) {
    %c0_i32 = arith.constant 0 : i32
    %c0_i32_0 = arith.constant 0 : i32
    %c0_i32_1 = arith.constant 0 : i32
    return %c0_i32, %c0_i32_0 : i32, i32
  }
  func.func @transform_4(%arg0: i32) -> (i32, i32) {
    %c0_i32 = arith.constant 0 : i32
    %c0_i32_0 = arith.constant 0 : i32
    %c0_i32_1 = arith.constant 0 : i32
    return %c0_i32, %c0_i32_0 : i32, i32
  }
  func.func @transform_5(%arg0: i32) -> (i32, i32) {
    %c0_i32 = arith.constant 0 : i32
    %c0_i32_0 = arith.constant 0 : i32
    %c0_i32_1 = arith.constant 0 : i32
    return %c0_i32, %c0_i32_0 : i32, i32
  }
  func.func @transform_6(%arg0: i32) -> (i32, i32) {
    %c0_i32 = arith.constant 0 : i32
    %c0_i32_0 = arith.constant 0 : i32
    %c0_i32_1 = arith.constant 0 : i32
    return %c0_i32, %c0_i32_0 : i32, i32
  }
  func.func @transform_7(%arg0: i32) -> (i32, i32) {
    %c0_i32 = arith.constant 0 : i32
    %c0_i32_0 = arith.constant 0 : i32
    return %arg0, %c0_i32 : i32, i32
  }
}

</mosaic_0001>

<llo_original>
// kernel: embedding_net_forward.6
$region0: #{embedding_net_forward.6}
  #allocation0 [shape = 'u32[]', space=smem, size = 0x4, offset = 0x4, fixed_abs, tag = 'smem constant byte address 0x4 - core index']
  #allocation1 [shape = 'u32[144,128]{1,0:T(1,128)}', space=vmem, size = 0x12000, scoped, tag = 'internal scratch']
  %s0 = inlined_call_operand.vmem [shape: bf16[344,16], index: 0, kind: input, shape index: {}]
  %s1 = inlined_call_operand.vmem [shape: f32[1,16], index: 1, kind: input, shape index: {}]
  %s2 = inlined_call_operand.vmem [shape: f32[1,16], index: 2, kind: input, shape index: {}]
  %s3 = inlined_call_operand.vmem [shape: f32[1,16], index: 3, kind: input, shape index: {}]
  %s4 = inlined_call_operand.vmem [shape: f32[1,16], index: 4, kind: input, shape index: {}]
  %s5 = inlined_call_operand.vmem [shape: bf16[344,16], index: 5, kind: output, shape index: {}]
  %s6 = sld [smem:[#allocation0]]
  $region30: #{embedding_net_forward.6} parent=0
    _
  %s8 = ssub.s32 1, %s6
  %s9 = scalar_select 0, %s8, %s6
  // Predicated region
  $region2: #{embedding_net_forward.6} parent=0 // pred_check
    _
  $region3: #{embedding_net_forward.6} parent=0 // pred_check_branch
    %11 = sbr.rel (0) target = $region5
  $region4: #{embedding_net_forward.6} parent=0 // pred_region
    _
  $region5: #{embedding_net_forward.6} parent=0 // pred_fallthru
    _
  // Predicated region
  $region6: #{embedding_net_forward.6} parent=0 // pred_check
    _
  $region7: #{embedding_net_forward.6} parent=0 // pred_check_branch
    %13 = sbr.rel (0) target = $region9
  $region8: #{embedding_net_forward.6} parent=0 // pred_region
    _
  $region9: #{embedding_net_forward.6} parent=0 // pred_fallthru
    _
  // Predicated region
  $region10: #{embedding_net_forward.6} parent=0 // pred_check
    _
  $region11: #{embedding_net_forward.6} parent=0 // pred_check_branch
    %15 = sbr.rel (0) target = $region13
  $region12: #{embedding_net_forward.6} parent=0 // pred_region
    _
  $region13: #{embedding_net_forward.6} parent=0 // pred_fallthru
    _
  // Predicated region
  $region14: #{embedding_net_forward.6} parent=0 // pred_check
    _
  $region15: #{embedding_net_forward.6} parent=0 // pred_check_branch
    %17 = sbr.rel (0) target = $region17
  $region16: #{embedding_net_forward.6} parent=0 // pred_region
    _
  $region17: #{embedding_net_forward.6} parent=0 // pred_fallthru
    _
  // Predicated region
  $region18: #{embedding_net_forward.6} parent=0 // pred_check
    _
  $region19: #{embedding_net_forward.6} parent=0 // pred_check_branch
    %19 = sbr.rel (0) target = $region21
  $region20: #{embedding_net_forward.6} parent=0 // pred_region
    _
  $region21: #{embedding_net_forward.6} parent=0 // pred_fallthru
    _
  %v20 = vld [vmem:[%s0] sm:$0xf]
  %v21 = vld [vmem:[%s0 + $0x4] sm:$0xf]
  %v22 = vld [vmem:[%s0 + $0x8] sm:$0xf]
  %v23 = vld [vmem:[%s0 + $0xc] sm:$0xf]
  %v24 = vld [vmem:[%s0 + $0x10] sm:$0xf]
  %v25 = vld [vmem:[%s0 + $0x14] sm:$0xf]
  %v26 = vld [vmem:[%s0 + $0x18] sm:$0xf]
  %v27 = vld [vmem:[%s0 + $0x1c] sm:$0xf]
  %v28 = vld [vmem:[%s0 + $0x20] sm:$0xf]
  %v29 = vld [vmem:[%s0 + $0x24] sm:$0xf]
  %v30 = vld [vmem:[%s0 + $0x28] sm:$0xf]
  %v31 = vld [vmem:[%s0 + $0x2c] sm:$0xf]
  %v32 = vld [vmem:[%s0 + $0x30] sm:$0xf]
  %v33 = vld [vmem:[%s0 + $0x34] sm:$0xf]
  %v34 = vld [vmem:[%s0 + $0x38] sm:$0xf]
  %v35 = vld [vmem:[%s0 + $0x3c] sm:$0xf]
  %v36 = vld [vmem:[%s0 + $0x40] sm:$0xf]
  %v37 = vld [vmem:[%s0 + $0x44] sm:$0xf]
  %v38 = vld [vmem:[%s0 + $0x48] sm:$0xf]
  %v39 = vld [vmem:[%s0 + $0x4c] sm:$0xf]
  %v40 = vld [vmem:[%s0 + $0x50] sm:$0xf]
  %v41 = vld [vmem:[%s0 + $0x54] sm:$0xf]
  %v42 = vld [vmem:[%s0 + $0x58] sm:$0xf]
  %v43 = vld [vmem:[%s0 + $0x5c] sm:$0xf]
  %v44 = vld [vmem:[%s0 + $0x60] sm:$0xf]
  %v45 = vld [vmem:[%s0 + $0x64] sm:$0xf]
  %v46 = vld [vmem:[%s0 + $0x68] sm:$0xf]
  %v47 = vld [vmem:[%s0 + $0x6c] sm:$0xf]
  %v48 = vld [vmem:[%s0 + $0x70] sm:$0xf]
  %v49 = vld [vmem:[%s0 + $0x74] sm:$0xf]
  %v50 = vld [vmem:[%s0 + $0x78] sm:$0xf]
  %v51 = vld [vmem:[%s0 + $0x7c] sm:$0xf]
  %v52 = vld [vmem:[%s0 + $0x80] sm:$0xf]
  %v53 = vld [vmem:[%s0 + $0x84] sm:$0xf]
  %v54 = vld [vmem:[%s0 + $0x88] sm:$0xf]
  %v55 = vld [vmem:[%s0 + $0x8c] sm:$0xf]
  %v56 = vld [vmem:[%s0 + $0x90] sm:$0xf]
  %v57 = vld [vmem:[%s0 + $0x94] sm:$0xf]
  %v58 = vld [vmem:[%s0 + $0x98] sm:$0xf]
  %v59 = vld [vmem:[%s0 + $0x9c] sm:$0xf]
  %v60 = vld [vmem:[%s0 + $0xa0] sm:$0xf]
  %v61 = vld [vmem:[%s0 + $0xa4] sm:$0xf]
  %v62 = vld [vmem:[%s0 + $0xa8] sm:$0xf]
  %v63 = vunpack.c.l.bf16 %v20
  %v64 = vunpack.c.l.bf16 %v21
  %v65 = vunpack.c.l.bf16 %v22
  %v66 = vunpack.c.l.bf16 %v23
  %v67 = vunpack.c.l.bf16 %v24
  %v68 = vunpack.c.l.bf16 %v25
  %v69 = vunpack.c.l.bf16 %v26
  %v70 = vunpack.c.l.bf16 %v27
  %v71 = vunpack.c.l.bf16 %v28
  %v72 = vunpack.c.l.bf16 %v29
  %v73 = vunpack.c.l.bf16 %v30
  %v74 = vunpack.c.l.bf16 %v31
  %v75 = vunpack.c.l.bf16 %v32
  %v76 = vunpack.c.l.bf16 %v33
  %v77 = vunpack.c.l.bf16 %v34
  %v78 = vunpack.c.l.bf16 %v35
  %v79 = vunpack.c.l.bf16 %v36
  %v80 = vunpack.c.l.bf16 %v37
  %v81 = vunpack.c.l.bf16 %v38
  %v82 = vunpack.c.l.bf16 %v39
  %v83 = vunpack.c.l.bf16 %v40
  %v84 = vunpack.c.l.bf16 %v41
  %v85 = vunpack.c.l.bf16 %v42
  %v86 = vunpack.c.l.bf16 %v43
  %v87 = vunpack.c.l.bf16 %v44
  %v88 = vunpack.c.l.bf16 %v45
  %v89 = vunpack.c.l.bf16 %v46
  %v90 = vunpack.c.l.bf16 %v47
  %v91 = vunpack.c.l.bf16 %v48
  %v92 = vunpack.c.l.bf16 %v49
  %v93 = vunpack.c.l.bf16 %v50
  %v94 = vunpack.c.l.bf16 %v51
  %v95 = vunpack.c.l.bf16 %v52
  %v96 = vunpack.c.l.bf16 %v53
  %v97 = vunpack.c.l.bf16 %v54
  %v98 = vunpack.c.l.bf16 %v55
  %v99 = vunpack.c.l.bf16 %v56
  %v100 = vunpack.c.l.bf16 %v57
  %v101 = vunpack.c.l.bf16 %v58
  %v102 = vunpack.c.l.bf16 %v59
  %v103 = vunpack.c.l.bf16 %v60
  %v104 = vunpack.c.l.bf16 %v61
  %v105 = vunpack.c.l.bf16 %v62
  %v106 = vld [vmem:[%s1] sm:$0x1]
  %v107 = vmul.f32 %v106, 0.00295858
  %v108 = vld [vmem:[%s2] sm:$0x1]
  %v109 = vmul.f32 %v108, 0.00295858
  %v110 = vmul.f32 %v107, %v107
  %v111 = vsub.f32 %v109, %v110
  %v112 = vadd.f32 %v111, 1e-05
  %v113 = vrsqrt.pop %v112
  %v114 = vld [vmem:[%s3] sm:$0x1]
  %v115 = vmul.f32 %v113, %v114
  %v117 = vlaneseq
  %v118 = vshrl.u32 %v117, 7
  %v119 = vsub.s32 0, %v118
  %v120 = vrot.slane %v107, %v119
  %v122 = vsub.f32 %v63, %v120
  %v123 = vsub.f32 %v64, %v120
  %v124 = vsub.f32 %v65, %v120
  %v125 = vsub.f32 %v66, %v120
  %v126 = vsub.f32 %v67, %v120
  %v127 = vsub.f32 %v68, %v120
  %v128 = vsub.f32 %v69, %v120
  %v129 = vsub.f32 %v70, %v120
  %v130 = vsub.f32 %v71, %v120
  %v131 = vsub.f32 %v72, %v120
  %v132 = vsub.f32 %v73, %v120
  %v133 = vsub.f32 %v74, %v120
  %v134 = vsub.f32 %v75, %v120
  %v135 = vsub.f32 %v76, %v120
  %v136 = vsub.f32 %v77, %v120
  %v137 = vsub.f32 %v78, %v120
  %v138 = vsub.f32 %v79, %v120
  %v139 = vsub.f32 %v80, %v120
  %v140 = vsub.f32 %v81, %v120
  %v141 = vsub.f32 %v82, %v120
  %v142 = vsub.f32 %v83, %v120
  %v143 = vsub.f32 %v84, %v120
  %v144 = vsub.f32 %v85, %v120
  %v145 = vsub.f32 %v86, %v120
  %v146 = vsub.f32 %v87, %v120
  %v147 = vsub.f32 %v88, %v120
  %v148 = vsub.f32 %v89, %v120
  %v149 = vsub.f32 %v90, %v120
  %v150 = vsub.f32 %v91, %v120
  %v151 = vsub.f32 %v92, %v120
  %v152 = vsub.f32 %v93, %v120
  %v153 = vsub.f32 %v94, %v120
  %v154 = vsub.f32 %v95, %v120
  %v155 = vsub.f32 %v96, %v120
  %v156 = vsub.f32 %v97, %v120
  %v157 = vsub.f32 %v98, %v120
  %v158 = vsub.f32 %v99, %v120
  %v159 = vsub.f32 %v100, %v120
  %v160 = vsub.f32 %v101, %v120
  %v161 = vsub.f32 %v102, %v120
  %v162 = vsub.f32 %v103, %v120
  %v163 = vsub.f32 %v104, %v120
  %v164 = vsub.f32 %v105, %v120
  %v166 = vlaneseq
  %v167 = vshrl.u32 %v166, 7
  %v168 = vsub.s32 0, %v167
  %v169 = vrot.slane %v115, %v168
  %v171 = vmul.f32 %v122, %v169
  %v172 = vmul.f32 %v123, %v169
  %v173 = vmul.f32 %v124, %v169
  %v174 = vmul.f32 %v125, %v169
  %v175 = vmul.f32 %v126, %v169
  %v176 = vmul.f32 %v127, %v169
  %v177 = vmul.f32 %v128, %v169
  %v178 = vmul.f32 %v129, %v169
  %v179 = vmul.f32 %v130, %v169
  %v180 = vmul.f32 %v131, %v169
  %v181 = vmul.f32 %v132, %v169
  %v182 = vmul.f32 %v133, %v169
  %v183 = vmul.f32 %v134, %v169
  %v184 = vmul.f32 %v135, %v169
  %v185 = vmul.f32 %v136, %v169
  %v186 = vmul.f32 %v137, %v169
  %v187 = vmul.f32 %v138, %v169
  %v188 = vmul.f32 %v139, %v169
  %v189 = vmul.f32 %v140, %v169
  %v190 = vmul.f32 %v141, %v169
  %v191 = vmul.f32 %v142, %v169
  %v192 = vmul.f32 %v143, %v169
  %v193 = vmul.f32 %v144, %v169
  %v194 = vmul.f32 %v145, %v169
  %v195 = vmul.f32 %v146, %v169
  %v196 = vmul.f32 %v147, %v169
  %v197 = vmul.f32 %v148, %v169
  %v198 = vmul.f32 %v149, %v169
  %v199 = vmul.f32 %v150, %v169
  %v200 = vmul.f32 %v151, %v169
  %v201 = vmul.f32 %v152, %v169
  %v202 = vmul.f32 %v153, %v169
  %v203 = vmul.f32 %v154, %v169
  %v204 = vmul.f32 %v155, %v169
  %v205 = vmul.f32 %v156, %v169
  %v206 = vmul.f32 %v157, %v169
  %v207 = vmul.f32 %v158, %v169
  %v208 = vmul.f32 %v159, %v169
  %v209 = vmul.f32 %v160, %v169
  %v210 = vmul.f32 %v161, %v169
  %v211 = vmul.f32 %v162, %v169
  %v212 = vmul.f32 %v163, %v169
  %v213 = vmul.f32 %v164, %v169
  %v214 = vld [vmem:[%s4] sm:$0x1]
  %v216 = vlaneseq
  %v217 = vshrl.u32 %v216, 7
  %v218 = vsub.s32 0, %v217
  %v219 = vrot.slane %v214, %v218
  %v221 = vadd.f32 %v171, %v219
  %v222 = vadd.f32 %v172, %v219
  %v223 = vadd.f32 %v173, %v219
  %v224 = vadd.f32 %v174, %v219
  %v225 = vadd.f32 %v175, %v219
  %v226 = vadd.f32 %v176, %v219
  %v227 = vadd.f32 %v177, %v219
  %v228 = vadd.f32 %v178, %v219
  %v229 = vadd.f32 %v179, %v219
  %v230 = vadd.f32 %v180, %v219
  %v231 = vadd.f32 %v181, %v219
  %v232 = vadd.f32 %v182, %v219
  %v233 = vadd.f32 %v183, %v219
  %v234 = vadd.f32 %v184, %v219
  %v235 = vadd.f32 %v185, %v219
  %v236 = vadd.f32 %v186, %v219
  %v237 = vadd.f32 %v187, %v219
  %v238 = vadd.f32 %v188, %v219
  %v239 = vadd.f32 %v189, %v219
  %v240 = vadd.f32 %v190, %v219
  %v241 = vadd.f32 %v191, %v219
  %v242 = vadd.f32 %v192, %v219
  %v243 = vadd.f32 %v193, %v219
  %v244 = vadd.f32 %v194, %v219
  %v245 = vadd.f32 %v195, %v219
  %v246 = vadd.f32 %v196, %v219
  %v247 = vadd.f32 %v197, %v219
  %v248 = vadd.f32 %v198, %v219
  %v249 = vadd.f32 %v199, %v219
  %v250 = vadd.f32 %v200, %v219
  %v251 = vadd.f32 %v201, %v219
  %v252 = vadd.f32 %v202, %v219
  %v253 = vadd.f32 %v203, %v219
  %v254 = vadd.f32 %v204, %v219
  %v255 = vadd.f32 %v205, %v219
  %v256 = vadd.f32 %v206, %v219
  %v257 = vadd.f32 %v207, %v219
  %v258 = vadd.f32 %v208, %v219
  %v259 = vadd.f32 %v209, %v219
  %v260 = vadd.f32 %v210, %v219
  %v261 = vadd.f32 %v211, %v219
  %v262 = vadd.f32 %v212, %v219
  %v263 = vadd.f32 %v213, %v219
  %vm264 = vcmp.gt.f32.partialorder %v221, 0.0
  %vm265 = vcmp.gt.f32.partialorder %v222, 0.0
  %vm266 = vcmp.gt.f32.partialorder %v223, 0.0
  %vm267 = vcmp.gt.f32.partialorder %v224, 0.0
  %vm268 = vcmp.gt.f32.partialorder %v225, 0.0
  %vm269 = vcmp.gt.f32.partialorder %v226, 0.0
  %vm270 = vcmp.gt.f32.partialorder %v227, 0.0
  %vm271 = vcmp.gt.f32.partialorder %v228, 0.0
  %vm272 = vcmp.gt.f32.partialorder %v229, 0.0
  %vm273 = vcmp.gt.f32.partialorder %v230, 0.0
  %vm274 = vcmp.gt.f32.partialorder %v231, 0.0
  %vm275 = vcmp.gt.f32.partialorder %v232, 0.0
  %vm276 = vcmp.gt.f32.partialorder %v233, 0.0
  %vm277 = vcmp.gt.f32.partialorder %v234, 0.0
  %vm278 = vcmp.gt.f32.partialorder %v235, 0.0
  %vm279 = vcmp.gt.f32.partialorder %v236, 0.0
  %vm280 = vcmp.gt.f32.partialorder %v237, 0.0
  %vm281 = vcmp.gt.f32.partialorder %v238, 0.0
  %vm282 = vcmp.gt.f32.partialorder %v239, 0.0
  %vm283 = vcmp.gt.f32.partialorder %v240, 0.0
  %vm284 = vcmp.gt.f32.partialorder %v241, 0.0
  %vm285 = vcmp.gt.f32.partialorder %v242, 0.0
  %vm286 = vcmp.gt.f32.partialorder %v243, 0.0
  %vm287 = vcmp.gt.f32.partialorder %v244, 0.0
  %vm288 = vcmp.gt.f32.partialorder %v245, 0.0
  %vm289 = vcmp.gt.f32.partialorder %v246, 0.0
  %vm290 = vcmp.gt.f32.partialorder %v247, 0.0
  %vm291 = vcmp.gt.f32.partialorder %v248, 0.0
  %vm292 = vcmp.gt.f32.partialorder %v249, 0.0
  %vm293 = vcmp.gt.f32.partialorder %v250, 0.0
  %vm294 = vcmp.gt.f32.partialorder %v251, 0.0
  %vm295 = vcmp.gt.f32.partialorder %v252, 0.0
  %vm296 = vcmp.gt.f32.partialorder %v253, 0.0
  %vm297 = vcmp.gt.f32.partialorder %v254, 0.0
  %vm298 = vcmp.gt.f32.partialorder %v255, 0.0
  %vm299 = vcmp.gt.f32.partialorder %v256, 0.0
  %vm300 = vcmp.gt.f32.partialorder %v257, 0.0
  %vm301 = vcmp.gt.f32.partialorder %v258, 0.0
  %vm302 = vcmp.gt.f32.partialorder %v259, 0.0
  %vm303 = vcmp.gt.f32.partialorder %v260, 0.0
  %vm304 = vcmp.gt.f32.partialorder %v261, 0.0
  %vm305 = vcmp.gt.f32.partialorder %v262, 0.0
  %vm306 = vcmp.gt.f32.partialorder %v263, 0.0
  %v307 = vmul.f32 %v221, 0.2
  %v308 = vmul.f32 %v222, 0.2
  %v309 = vmul.f32 %v223, 0.2
  %v310 = vmul.f32 %v224, 0.2
  %v311 = vmul.f32 %v225, 0.2
  %v312 = vmul.f32 %v226, 0.2
  %v313 = vmul.f32 %v227, 0.2
  %v314 = vmul.f32 %v228, 0.2
  %v315 = vmul.f32 %v229, 0.2
  %v316 = vmul.f32 %v230, 0.2
  %v317 = vmul.f32 %v231, 0.2
  %v318 = vmul.f32 %v232, 0.2
  %v319 = vmul.f32 %v233, 0.2
  %v320 = vmul.f32 %v234, 0.2
  %v321 = vmul.f32 %v235, 0.2
  %v322 = vmul.f32 %v236, 0.2
  %v323 = vmul.f32 %v237, 0.2
  %v324 = vmul.f32 %v238, 0.2
  %v325 = vmul.f32 %v239, 0.2
  %v326 = vmul.f32 %v240, 0.2
  %v327 = vmul.f32 %v241, 0.2
  %v328 = vmul.f32 %v242, 0.2
  %v329 = vmul.f32 %v243, 0.2
  %v330 = vmul.f32 %v244, 0.2
  %v331 = vmul.f32 %v245, 0.2
  %v332 = vmul.f32 %v246, 0.2
  %v333 = vmul.f32 %v247, 0.2
  %v334 = vmul.f32 %v248, 0.2
  %v335 = vmul.f32 %v249, 0.2
  %v336 = vmul.f32 %v250, 0.2
  %v337 = vmul.f32 %v251, 0.2
  %v338 = vmul.f32 %v252, 0.2
  %v339 = vmul.f32 %v253, 0.2
  %v340 = vmul.f32 %v254, 0.2
  %v341 = vmul.f32 %v255, 0.2
  %v342 = vmul.f32 %v256, 0.2
  %v343 = vmul.f32 %v257, 0.2
  %v344 = vmul.f32 %v258, 0.2
  %v345 = vmul.f32 %v259, 0.2
  %v346 = vmul.f32 %v260, 0.2
  %v347 = vmul.f32 %v261, 0.2
  %v348 = vmul.f32 %v262, 0.2
  %v349 = vmul.f32 %v263, 0.2
  %v350 = vsel %vm264, %v221, %v307
  %v351 = vsel %vm265, %v222, %v308
  %v352 = vsel %vm266, %v223, %v309
  %v353 = vsel %vm267, %v224, %v310
  %v354 = vsel %vm268, %v225, %v311
  %v355 = vsel %vm269, %v226, %v312
  %v356 = vsel %vm270, %v227, %v313
  %v357 = vsel %vm271, %v228, %v314
  %v358 = vsel %vm272, %v229, %v315
  %v359 = vsel %vm273, %v230, %v316
  %v360 = vsel %vm274, %v231, %v317
  %v361 = vsel %vm275, %v232, %v318
  %v362 = vsel %vm276, %v233, %v319
  %v363 = vsel %vm277, %v234, %v320
  %v364 = vsel %vm278, %v235, %v321
  %v365 = vsel %vm279, %v236, %v322
  %v366 = vsel %vm280, %v237, %v323
  %v367 = vsel %vm281, %v238, %v324
  %v368 = vsel %vm282, %v239, %v325
  %v369 = vsel %vm283, %v240, %v326
  %v370 = vsel %vm284, %v241, %v327
  %v371 = vsel %vm285, %v242, %v328
  %v372 = vsel %vm286, %v243, %v329
  %v373 = vsel %vm287, %v244, %v330
  %v374 = vsel %vm288, %v245, %v331
  %v375 = vsel %vm289, %v246, %v332
  %v376 = vsel %vm290, %v247, %v333
  %v377 = vsel %vm291, %v248, %v334
  %v378 = vsel %vm292, %v249, %v335
  %v379 = vsel %vm293, %v250, %v336
  %v380 = vsel %vm294, %v251, %v337
  %v381 = vsel %vm295, %v252, %v338
  %v382 = vsel %vm296, %v253, %v339
  %v383 = vsel %vm297, %v254, %v340
  %v384 = vsel %vm298, %v255, %v341
  %v385 = vsel %vm299, %v256, %v342
  %v386 = vsel %vm300, %v257, %v343
  %v387 = vsel %vm301, %v258, %v344
  %v388 = vsel %vm302, %v259, %v345
  %v389 = vsel %vm303, %v260, %v346
  %v390 = vsel %vm304, %v261, %v347
  %v391 = vsel %vm305, %v262, %v348
  %v392 = vsel %vm306, %v263, %v349
  %v393 = vpack.c.bf16 %v351, %v350
  %v394 = vpack.c.bf16 %v353, %v352
  %v395 = vpack.c.bf16 %v355, %v354
  %v396 = vpack.c.bf16 %v357, %v356
  %v397 = vpack.c.bf16 %v359, %v358
  %v398 = vpack.c.bf16 %v361, %v360
  %v399 = vpack.c.bf16 %v363, %v362
  %v400 = vpack.c.bf16 %v365, %v364
  %v401 = vpack.c.bf16 %v367, %v366
  %v402 = vpack.c.bf16 %v369, %v368
  %v403 = vpack.c.bf16 %v371, %v370
  %v404 = vpack.c.bf16 %v373, %v372
  %v405 = vpack.c.bf16 %v375, %v374
  %v406 = vpack.c.bf16 %v377, %v376
  %v407 = vpack.c.bf16 %v379, %v378
  %v408 = vpack.c.bf16 %v381, %v380
  %v409 = vpack.c.bf16 %v383, %v382
  %v410 = vpack.c.bf16 %v385, %v384
  %v411 = vpack.c.bf16 %v387, %v386
  %v412 = vpack.c.bf16 %v389, %v388
  %v413 = vpack.c.bf16 %v391, %v390
  %v414 = vpack.c.bf16 %v392, %v392
  %v437 = vunpack.c.l.b16 %v393
  %v438 = vunpack.c.h.b16 %v393
  %v439 = vunpack.c.l.b16 %v394
  %v440 = vunpack.c.h.b16 %v394
  %v441 = vunpack.c.l.b16 %v395
  %v442 = vunpack.c.h.b16 %v395
  %v443 = vunpack.c.l.b16 %v396
  %v444 = vunpack.c.h.b16 %v396
  %v445 = vunpack.c.l.b16 %v397
  %v446 = vunpack.c.h.b16 %v397
  %v447 = vunpack.c.l.b16 %v398
  %v448 = vunpack.c.h.b16 %v398
  %v449 = vunpack.c.l.b16 %v399
  %v450 = vunpack.c.h.b16 %v399
  %v451 = vunpack.c.l.b16 %v400
  %v452 = vunpack.c.h.b16 %v400
  %v453 = vunpack.c.l.b16 %v401
  %v454 = vunpack.c.h.b16 %v401
  %v455 = vunpack.c.l.b16 %v402
  %v456 = vunpack.c.h.b16 %v402
  %v457 = vunpack.c.l.b16 %v403
  %v458 = vunpack.c.h.b16 %v403
  %v459 = vunpack.c.l.b16 %v404
  %v460 = vunpack.c.h.b16 %v404
  %v461 = vunpack.c.l.b16 %v405
  %v462 = vunpack.c.h.b16 %v405
  %v463 = vunpack.c.l.b16 %v406
  %v464 = vunpack.c.h.b16 %v406
  %v465 = vunpack.c.l.b16 %v407
  %v466 = vunpack.c.h.b16 %v407
  %v467 = vunpack.c.l.b16 %v408
  %v468 = vunpack.c.h.b16 %v408
  %v469 = vunpack.c.l.b16 %v409
  %v470 = vunpack.c.h.b16 %v409
  %v471 = vunpack.c.l.b16 %v410
  %v472 = vunpack.c.h.b16 %v410
  %v473 = vunpack.c.l.b16 %v411
  %v474 = vunpack.c.h.b16 %v411
  %v475 = vunpack.c.l.b16 %v412
  %v476 = vunpack.c.h.b16 %v412
  %v477 = vunpack.c.l.b16 %v413
  %v478 = vunpack.c.h.b16 %v413
  %v479 = vunpack.c.l.b16 %v414
  %v480 = vpack.c.b16 %v437, %v437
  %v481 = vpack.c.b16 %v438, %v438
  %v482 = vpack.c.b16 %v439, %v439
  %v483 = vpack.c.b16 %v440, %v440
  %v484 = vpack.c.b16 %v441, %v441
  %v485 = vpack.c.b16 %v442, %v442
  %v486 = vpack.c.b16 %v443, %v443
  %v487 = vpack.c.b16 %v444, %v444
  %v488 = vpack.c.b16 %v445, %v445
  %v489 = vpack.c.b16 %v446, %v446
  %v490 = vpack.c.b16 %v447, %v447
  %v491 = vpack.c.b16 %v448, %v448
  %v492 = vpack.c.b16 %v449, %v449
  %v493 = vpack.c.b16 %v450, %v450
  %v494 = vpack.c.b16 %v451, %v451
  %v495 = vpack.c.b16 %v452, %v452
  %v496 = vpack.c.b16 %v453, %v453
  %v497 = vpack.c.b16 %v454, %v454
  %v498 = vpack.c.b16 %v455, %v455
  %v499 = vpack.c.b16 %v456, %v456
  %v500 = vpack.c.b16 %v457, %v457
  %v501 = vpack.c.b16 %v458, %v458
  %v502 = vpack.c.b16 %v459, %v459
  %v503 = vpack.c.b16 %v460, %v460
  %v504 = vpack.c.b16 %v461, %v461
  %v505 = vpack.c.b16 %v462, %v462
  %v506 = vpack.c.b16 %v463, %v463
  %v507 = vpack.c.b16 %v464, %v464
  %v508 = vpack.c.b16 %v465, %v465
  %v509 = vpack.c.b16 %v466, %v466
  %v510 = vpack.c.b16 %v467, %v467
  %v511 = vpack.c.b16 %v468, %v468
  %v512 = vpack.c.b16 %v469, %v469
  %v513 = vpack.c.b16 %v470, %v470
  %v514 = vpack.c.b16 %v471, %v471
  %v515 = vpack.c.b16 %v472, %v472
  %v516 = vpack.c.b16 %v473, %v473
  %v517 = vpack.c.b16 %v474, %v474
  %v518 = vpack.c.b16 %v475, %v475
  %v519 = vpack.c.b16 %v476, %v476
  %v520 = vpack.c.b16 %v477, %v477
  %v521 = vpack.c.b16 %v478, %v478
  %v522 = vpack.c.b16 %v479, %v479
  %vm566 = vcmask 125952
  %567 = vst.msk [vmem:[%s5] sm:$0xf] %vm566, %v480
  %568 = vst.msk [vmem:[%s5 + $0x4] sm:$0xf] %vm566, %v481
  %569 = vst.msk [vmem:[%s5 + $0x8] sm:$0xf] %vm566, %v482
  %570 = vst.msk [vmem:[%s5 + $0xc] sm:$0xf] %vm566, %v483
  %571 = vst.msk [vmem:[%s5 + $0x10] sm:$0xf] %vm566, %v484
  %572 = vst.msk [vmem:[%s5 + $0x14] sm:$0xf] %vm566, %v485
  %573 = vst.msk [vmem:[%s5 + $0x18] sm:$0xf] %vm566, %v486
  %574 = vst.msk [vmem:[%s5 + $0x1c] sm:$0xf] %vm566, %v487
  %575 = vst.msk [vmem:[%s5 + $0x20] sm:$0xf] %vm566, %v488
  %576 = vst.msk [vmem:[%s5 + $0x24] sm:$0xf] %vm566, %v489
  %577 = vst.msk [vmem:[%s5 + $0x28] sm:$0xf] %vm566, %v490
  %578 = vst.msk [vmem:[%s5 + $0x2c] sm:$0xf] %vm566, %v491
  %579 = vst.msk [vmem:[%s5 + $0x30] sm:$0xf] %vm566, %v492
  %580 = vst.msk [vmem:[%s5 + $0x34] sm:$0xf] %vm566, %v493
  %581 = vst.msk [vmem:[%s5 + $0x38] sm:$0xf] %vm566, %v494
  %582 = vst.msk [vmem:[%s5 + $0x3c] sm:$0xf] %vm566, %v495
  %583 = vst.msk [vmem:[%s5 + $0x40] sm:$0xf] %vm566, %v496
  %584 = vst.msk [vmem:[%s5 + $0x44] sm:$0xf] %vm566, %v497
  %585 = vst.msk [vmem:[%s5 + $0x48] sm:$0xf] %vm566, %v498
  %586 = vst.msk [vmem:[%s5 + $0x4c] sm:$0xf] %vm566, %v499
  %587 = vst.msk [vmem:[%s5 + $0x50] sm:$0xf] %vm566, %v500
  %588 = vst.msk [vmem:[%s5 + $0x54] sm:$0xf] %vm566, %v501
  %589 = vst.msk [vmem:[%s5 + $0x58] sm:$0xf] %vm566, %v502
  %590 = vst.msk [vmem:[%s5 + $0x5c] sm:$0xf] %vm566, %v503
  %591 = vst.msk [vmem:[%s5 + $0x60] sm:$0xf] %vm566, %v504
  %592 = vst.msk [vmem:[%s5 + $0x64] sm:$0xf] %vm566, %v505
  %593 = vst.msk [vmem:[%s5 + $0x68] sm:$0xf] %vm566, %v506
  %594 = vst.msk [vmem:[%s5 + $0x6c] sm:$0xf] %vm566, %v507
  %595 = vst.msk [vmem:[%s5 + $0x70] sm:$0xf] %vm566, %v508
  %596 = vst.msk [vmem:[%s5 + $0x74] sm:$0xf] %vm566, %v509
  %597 = vst.msk [vmem:[%s5 + $0x78] sm:$0xf] %vm566, %v510
  %598 = vst.msk [vmem:[%s5 + $0x7c] sm:$0xf] %vm566, %v511
  %599 = vst.msk [vmem:[%s5 + $0x80] sm:$0xf] %vm566, %v512
  %600 = vst.msk [vmem:[%s5 + $0x84] sm:$0xf] %vm566, %v513
  %601 = vst.msk [vmem:[%s5 + $0x88] sm:$0xf] %vm566, %v514
  %602 = vst.msk [vmem:[%s5 + $0x8c] sm:$0xf] %vm566, %v515
  %603 = vst.msk [vmem:[%s5 + $0x90] sm:$0xf] %vm566, %v516
  %604 = vst.msk [vmem:[%s5 + $0x94] sm:$0xf] %vm566, %v517
  %605 = vst.msk [vmem:[%s5 + $0x98] sm:$0xf] %vm566, %v518
  %606 = vst.msk [vmem:[%s5 + $0x9c] sm:$0xf] %vm566, %v519
  %607 = vst.msk [vmem:[%s5 + $0xa0] sm:$0xf] %vm566, %v520
  %608 = vst.msk [vmem:[%s5 + $0xa4] sm:$0xf] %vm566, %v521
  %609 = vst.msk [vmem:[%s5 + $0xa8] sm:$0xf] %vm566, %v522
  // Predicated region
  $region22: #{embedding_net_forward.6} parent=0 // pred_check
    _
  $region23: #{embedding_net_forward.6} parent=0 // pred_check_branch
    %611 = sbr.rel (0) target = $region25
  $region24: #{embedding_net_forward.6} parent=0 // pred_region
    _
  $region25: #{embedding_net_forward.6} parent=0 // pred_fallthru
    _
  // Predicated region
  $region26: #{embedding_net_forward.6} parent=0 // pred_check
    _
  $region27: #{embedding_net_forward.6} parent=0 // pred_check_branch
    %613 = sbr.rel (0) target = $region29
  $region28: #{embedding_net_forward.6} parent=0 // pred_region
    _
  $region29: #{embedding_net_forward.6} parent=0 // pred_fallthru
    _

// kernel: embedding_net_forward.5
$region0: #{embedding_net_forward.5}
  #allocation0 [shape = 'u32[]', space=smem, size = 0x4, offset = 0x4, fixed_abs, tag = 'smem constant byte address 0x4 - core index']
  #allocation1 [shape = 'u32[144,128]{1,0:T(1,128)}', space=vmem, size = 0x12000, scoped, tag = 'internal scratch']
  %s0 = inlined_call_operand.vmem [shape: bf16[344,16], index: 0, kind: input, shape index: {}]
  %s1 = inlined_call_operand.vmem [shape: bf16[16,16], index: 1, kind: input, shape index: {}]
  %s2 = inlined_call_operand.vmem [shape: bf16[344,16], index: 2, kind: output, shape index: {0}]
  %s3 = inlined_call_operand.vmem [shape: f32[1,16], index: 3, kind: output, shape index: {1}]
  %s4 = inlined_call_operand.vmem [shape: f32[1,16], index: 4, kind: output, shape index: {2}]
  %5 = xla_tuple %s2, %s3, %s4
  %s6 = sld [smem:[#allocation0]]
  $region38: #{embedding_net_forward.5} parent=0
    _
  %s8 = ssub.s32 1, %s6
  %s9 = scalar_select 0, %s8, %s6
  // Predicated region
  $region2: #{embedding_net_forward.5} parent=0 // pred_check
    _
  $region3: #{embedding_net_forward.5} parent=0 // pred_check_branch
    %11 = sbr.rel (0) target = $region5
  $region4: #{embedding_net_forward.5} parent=0 // pred_region
    _
  $region5: #{embedding_net_forward.5} parent=0 // pred_fallthru
    _
  // Predicated region
  $region6: #{embedding_net_forward.5} parent=0 // pred_check
    _
  $region7: #{embedding_net_forward.5} parent=0 // pred_check_branch
    %13 = sbr.rel (0) target = $region9
  $region8: #{embedding_net_forward.5} parent=0 // pred_region
    _
  $region9: #{embedding_net_forward.5} parent=0 // pred_fallthru
    _
  %p15 = scmp.eq.s32.totalorder 0, 0
  // Predicated region
  $region10: #{embedding_net_forward.5} parent=0 // pred_check
    %p16 = pneg %p15
  $region11: #{embedding_net_forward.5} parent=0 // pred_check_branch
    %18 = sbr.rel (%p16) target = $region13
  $region12: #{embedding_net_forward.5} parent=0 // pred_region
    %vm19 = vcmask 122880
    %20 = vst.msk [vmem:[%s3] sm:$0x1] %vm19, 0.0
    %21 = vst.msk [vmem:[%s4] sm:$0x1] %vm19, 0.0
  $region13: #{embedding_net_forward.5} parent=0 // pred_fallthru
    _
  %v22 = vld [vmem:[%s0] sm:$0xf]
  %v23 = vld [vmem:[%s0 + $0x4] sm:$0xf]
  %v24 = vld [vmem:[%s0 + $0x8] sm:$0xf]
  %v25 = vld [vmem:[%s0 + $0xc] sm:$0xf]
  %v26 = vld [vmem:[%s0 + $0x10] sm:$0xf]
  %v27 = vld [vmem:[%s0 + $0x14] sm:$0xf]
  %v28 = vld [vmem:[%s0 + $0x18] sm:$0xf]
  %v29 = vld [vmem:[%s0 + $0x1c] sm:$0xf]
  %v30 = vld [vmem:[%s0 + $0x20] sm:$0xf]
  %v31 = vld [vmem:[%s0 + $0x24] sm:$0xf]
  %v32 = vld [vmem:[%s0 + $0x28] sm:$0xf]
  %v33 = vld [vmem:[%s0 + $0x2c] sm:$0xf]
  %v34 = vld [vmem:[%s0 + $0x30] sm:$0xf]
  %v35 = vld [vmem:[%s0 + $0x34] sm:$0xf]
  %v36 = vld [vmem:[%s0 + $0x38] sm:$0xf]
  %v37 = vld [vmem:[%s0 + $0x3c] sm:$0xf]
  %v38 = vld [vmem:[%s0 + $0x40] sm:$0xf]
  %v39 = vld [vmem:[%s0 + $0x44] sm:$0xf]
  %v40 = vld [vmem:[%s0 + $0x48] sm:$0xf]
  %v41 = vld [vmem:[%s0 + $0x4c] sm:$0xf]
  %v42 = vld [vmem:[%s0 + $0x50] sm:$0xf]
  %v43 = vld [vmem:[%s0 + $0x54] sm:$0xf]
  %v44 = vld [vmem:[%s0 + $0x58] sm:$0xf]
  %v45 = vld [vmem:[%s0 + $0x5c] sm:$0xf]
  %v46 = vld [vmem:[%s0 + $0x60] sm:$0xf]
  %v47 = vld [vmem:[%s0 + $0x64] sm:$0xf]
  %v48 = vld [vmem:[%s0 + $0x68] sm:$0xf]
  %v49 = vld [vmem:[%s0 + $0x6c] sm:$0xf]
  %v50 = vld [vmem:[%s0 + $0x70] sm:$0xf]
  %v51 = vld [vmem:[%s0 + $0x74] sm:$0xf]
  %v52 = vld [vmem:[%s0 + $0x78] sm:$0xf]
  %v53 = vld [vmem:[%s0 + $0x7c] sm:$0xf]
  %v54 = vld [vmem:[%s0 + $0x80] sm:$0xf]
  %v55 = vld [vmem:[%s0 + $0x84] sm:$0xf]
  %v56 = vld [vmem:[%s0 + $0x88] sm:$0xf]
  %v57 = vld [vmem:[%s0 + $0x8c] sm:$0xf]
  %v58 = vld [vmem:[%s0 + $0x90] sm:$0xf]
  %v59 = vld [vmem:[%s0 + $0x94] sm:$0xf]
  %v60 = vld [vmem:[%s0 + $0x98] sm:$0xf]
  %v61 = vld [vmem:[%s0 + $0x9c] sm:$0xf]
  %v62 = vld [vmem:[%s0 + $0xa0] sm:$0xf]
  %v63 = vld [vmem:[%s0 + $0xa4] sm:$0xf]
  %v64 = vld [vmem:[%s0 + $0xa8] sm:$0xf]
  %v65 = vld [vmem:[%s1] sm:$0xf]
  %v66 = vld [vmem:[%s1 + $0x4] sm:$0xf]
  %v110 = vunpack.c.l.b16 %v22
  %v111 = vunpack.c.l.b16 %v23
  %v112 = vunpack.c.l.b16 %v24
  %v113 = vunpack.c.l.b16 %v25
  %v114 = vunpack.c.l.b16 %v26
  %v115 = vunpack.c.l.b16 %v27
  %v116 = vunpack.c.l.b16 %v28
  %v117 = vunpack.c.l.b16 %v29
  %v118 = vunpack.c.l.b16 %v30
  %v119 = vunpack.c.l.b16 %v31
  %v120 = vunpack.c.l.b16 %v32
  %v121 = vunpack.c.l.b16 %v33
  %v122 = vunpack.c.l.b16 %v34
  %v123 = vunpack.c.l.b16 %v35
  %v124 = vunpack.c.l.b16 %v36
  %v125 = vunpack.c.l.b16 %v37
  %v126 = vunpack.c.l.b16 %v38
  %v127 = vunpack.c.l.b16 %v39
  %v128 = vunpack.c.l.b16 %v40
  %v129 = vunpack.c.l.b16 %v41
  %v130 = vunpack.c.l.b16 %v42
  %v131 = vunpack.c.l.b16 %v43
  %v132 = vunpack.c.l.b16 %v44
  %v133 = vunpack.c.l.b16 %v45
  %v134 = vunpack.c.l.b16 %v46
  %v135 = vunpack.c.l.b16 %v47
  %v136 = vunpack.c.l.b16 %v48
  %v137 = vunpack.c.l.b16 %v49
  %v138 = vunpack.c.l.b16 %v50
  %v139 = vunpack.c.l.b16 %v51
  %v140 = vunpack.c.l.b16 %v52
  %v141 = vunpack.c.l.b16 %v53
  %v142 = vunpack.c.l.b16 %v54
  %v143 = vunpack.c.l.b16 %v55
  %v144 = vunpack.c.l.b16 %v56
  %v145 = vunpack.c.l.b16 %v57
  %v146 = vunpack.c.l.b16 %v58
  %v147 = vunpack.c.l.b16 %v59
  %v148 = vunpack.c.l.b16 %v60
  %v149 = vunpack.c.l.b16 %v61
  %v150 = vunpack.c.l.b16 %v62
  %v151 = vunpack.c.l.b16 %v63
  %v152 = vunpack.c.l.b16 %v64
  %v153 = vpack.c.b16 %v111, %v110
  %v154 = vpack.c.b16 %v113, %v112
  %v155 = vpack.c.b16 %v115, %v114
  %v156 = vpack.c.b16 %v117, %v116
  %v157 = vpack.c.b16 %v119, %v118
  %v158 = vpack.c.b16 %v121, %v120
  %v159 = vpack.c.b16 %v123, %v122
  %v160 = vpack.c.b16 %v125, %v124
  %v161 = vpack.c.b16 %v127, %v126
  %v162 = vpack.c.b16 %v129, %v128
  %v163 = vpack.c.b16 %v131, %v130
  %v164 = vpack.c.b16 %v133, %v132
  %v165 = vpack.c.b16 %v135, %v134
  %v166 = vpack.c.b16 %v137, %v136
  %v167 = vpack.c.b16 %v139, %v138
  %v168 = vpack.c.b16 %v141, %v140
  %v169 = vpack.c.b16 %v143, %v142
  %v170 = vpack.c.b16 %v145, %v144
  %v171 = vpack.c.b16 %v147, %v146
  %v172 = vpack.c.b16 %v149, %v148
  %v173 = vpack.c.b16 %v151, %v150
  %v174 = vpack.c.b16 %v152, %v152
  %v177 = vunpack.c.l.b16 %v65
  %v178 = vunpack.c.l.b16 %v66
  %v179 = vpack.c.b16 %v178, %v177
  %vm181 = vcmask 130048
  %v183 = vsel %vm181, %v153, 0
  %v186 = vsel %vm181, %v154, 0
  %v189 = vsel %vm181, %v155, 0
  %v192 = vsel %vm181, %v156, 0
  %v195 = vsel %vm181, %v157, 0
  %v198 = vsel %vm181, %v158, 0
  %v201 = vsel %vm181, %v159, 0
  %v204 = vsel %vm181, %v160, 0
  %v207 = vsel %vm181, %v161, 0
  %v210 = vsel %vm181, %v162, 0
  %v213 = vsel %vm181, %v163, 0
  %v216 = vsel %vm181, %v164, 0
  %v219 = vsel %vm181, %v165, 0
  %v222 = vsel %vm181, %v166, 0
  %v225 = vsel %vm181, %v167, 0
  %v228 = vsel %vm181, %v168, 0
  %v231 = vsel %vm181, %v169, 0
  %v234 = vsel %vm181, %v170, 0
  %v237 = vsel %vm181, %v171, 0
  %v240 = vsel %vm181, %v172, 0
  %v243 = vsel %vm181, %v173, 0
  %v246 = vsel %vm181, %v174, 0
  %248 = vmatprep.subr.bf16.mxu0 0
  %249 = vmatpush1.bf16.msra.mxu0 %v179
  %250 = vmatprep.subr.bf16.mxu0 0
  %251 = vmatpush1.bf16.msra.mxu0 0
  %252 = vmatprep.subr.bf16.mxu0 0
  %253 = vmatpush1.bf16.msra.mxu0 0
  %254 = vmatprep.subr.bf16.mxu0 0
  %255 = vmatpush1.bf16.msra.mxu0 0
  %256 = vmatprep.subr.bf16.mxu0 0
  %257 = vmatpush1.bf16.msra.mxu0 0
  %258 = vmatprep.subr.bf16.mxu0 0
  %259 = vmatpush1.bf16.msra.mxu0 0
  %260 = vmatprep.subr.bf16.mxu0 0
  %261 = vmatpush1.bf16.msra.mxu0 0
  %262 = vmatprep.subr.bf16.mxu0 0
  %263 = vmatpush1.bf16.msra.mxu0 0
  %264 = vmatprep.subr.bf16.mxu0 0
  %265 = vmatpush1.bf16.msra.mxu0 0
  %266 = vmatprep.subr.bf16.mxu0 0
  %267 = vmatpush1.bf16.msra.mxu0 0
  %268 = vmatprep.subr.bf16.mxu0 0
  %269 = vmatpush1.bf16.msra.mxu0 0
  %270 = vmatprep.subr.bf16.mxu0 0
  %271 = vmatpush1.bf16.msra.mxu0 0
  %272 = vmatprep.subr.bf16.mxu0 0
  %273 = vmatpush1.bf16.msra.mxu0 0
  %274 = vmatprep.subr.bf16.mxu0 0
  %275 = vmatpush1.bf16.msra.mxu0 0
  %276 = vmatprep.subr.bf16.mxu0 0
  %277 = vmatpush1.bf16.msra.mxu0 0
  %278 = vmatprep.subr.bf16.mxu0 0
  %279 = vmatpush1.bf16.msra.mxu0 0
  %280 = vmatprep.mubr.bf16.mxu0 0
  %281 = vmatmul.mubr.bf16.gmra.mrb[0].mxu0 %v183
  %v282 = vpop.f32.mrb[0].mxu0
  %v283 = vadd.f32 0.0, %v282
  %v284 = vpop.f32.mrb[0].mxu0
  %v285 = vpop.f32.mrb[0].mxu0
  %v286 = vadd.f32 0.0, %v285
  %v287 = vpop.f32.mrb[0].mxu0
  %288 = vmatprep.mubr.bf16.mxu0 0
  %289 = vmatmul.mubr.bf16.gmra.mrb[0].mxu0 %v186
  %v290 = vpop.f32.mrb[0].mxu0
  %v291 = vadd.f32 0.0, %v290
  %v292 = vpop.f32.mrb[0].mxu0
  %v293 = vpop.f32.mrb[0].mxu0
  %v294 = vadd.f32 0.0, %v293
  %v295 = vpop.f32.mrb[0].mxu0
  %296 = vmatprep.mubr.bf16.mxu0 0
  %297 = vmatmul.mubr.bf16.gmra.mrb[0].mxu0 %v189
  %v298 = vpop.f32.mrb[0].mxu0
  %v299 = vadd.f32 0.0, %v298
  %v300 = vpop.f32.mrb[0].mxu0
  %v301 = vpop.f32.mrb[0].mxu0
  %v302 = vadd.f32 0.0, %v301
  %v303 = vpop.f32.mrb[0].mxu0
  %304 = vmatprep.mubr.bf16.mxu0 0
  %305 = vmatmul.mubr.bf16.gmra.mrb[0].mxu0 %v192
  %v306 = vpop.f32.mrb[0].mxu0
  %v307 = vadd.f32 0.0, %v306
  %v308 = vpop.f32.mrb[0].mxu0
  %v309 = vpop.f32.mrb[0].mxu0
  %v310 = vadd.f32 0.0, %v309
  %v311 = vpop.f32.mrb[0].mxu0
  %312 = vmatprep.mubr.bf16.mxu0 0
  %313 = vmatmul.mubr.bf16.gmra.mrb[0].mxu0 %v195
  %v314 = vpop.f32.mrb[0].mxu0
  %v315 = vadd.f32 0.0, %v314
  %v316 = vpop.f32.mrb[0].mxu0
  %v317 = vpop.f32.mrb[0].mxu0
  %v318 = vadd.f32 0.0, %v317
  %v319 = vpop.f32.mrb[0].mxu0
  %320 = vmatprep.mubr.bf16.mxu0 0
  %321 = vmatmul.mubr.bf16.gmra.mrb[0].mxu0 %v198
  %v322 = vpop.f32.mrb[0].mxu0
  %v323 = vadd.f32 0.0, %v322
  %v324 = vpop.f32.mrb[0].mxu0
  %v325 = vpop.f32.mrb[0].mxu0
  %v326 = vadd.f32 0.0, %v325
  %v327 = vpop.f32.mrb[0].mxu0
  %328 = vmatprep.mubr.bf16.mxu0 0
  %329 = vmatmul.mubr.bf16.gmra.mrb[0].mxu0 %v201
  %v330 = vpop.f32.mrb[0].mxu0
  %v331 = vadd.f32 0.0, %v330
  %v332 = vpop.f32.mrb[0].mxu0
  %v333 = vpop.f32.mrb[0].mxu0
  %v334 = vadd.f32 0.0, %v333
  %v335 = vpop.f32.mrb[0].mxu0
  %336 = vmatprep.mubr.bf16.mxu0 0
  %337 = vmatmul.mubr.bf16.gmra.mrb[0].mxu0 %v204
  %v338 = vpop.f32.mrb[0].mxu0
  %v339 = vadd.f32 0.0, %v338
  %v340 = vpop.f32.mrb[0].mxu0
  %v341 = vpop.f32.mrb[0].mxu0
  %v342 = vadd.f32 0.0, %v341
  %v343 = vpop.f32.mrb[0].mxu0
  %344 = vmatprep.mubr.bf16.mxu0 0
  %345 = vmatmul.mubr.bf16.gmra.mrb[0].mxu0 %v207
  %v346 = vpop.f32.mrb[0].mxu0
  %v347 = vadd.f32 0.0, %v346
  %v348 = vpop.f32.mrb[0].mxu0
  %v349 = vpop.f32.mrb[0].mxu0
  %v350 = vadd.f32 0.0, %v349
  %v351 = vpop.f32.mrb[0].mxu0
  %352 = vmatprep.mubr.bf16.mxu0 0
  %353 = vmatmul.mubr.bf16.gmra.mrb[0].mxu0 %v210
  %v354 = vpop.f32.mrb[0].mxu0
  %v355 = vadd.f32 0.0, %v354
  %v356 = vpop.f32.mrb[0].mxu0
  %v357 = vpop.f32.mrb[0].mxu0
  %v358 = vadd.f32 0.0, %v357
  %v359 = vpop.f32.mrb[0].mxu0
  %360 = vmatprep.mubr.bf16.mxu0 0
  %361 = vmatmul.mubr.bf16.gmra.mrb[0].mxu0 %v213
  %v362 = vpop.f32.mrb[0].mxu0
  %v363 = vadd.f32 0.0, %v362
  %v364 = vpop.f32.mrb[0].mxu0
  %v365 = vpop.f32.mrb[0].mxu0
  %v366 = vadd.f32 0.0, %v365
  %v367 = vpop.f32.mrb[0].mxu0
  %368 = vmatprep.mubr.bf16.mxu0 0
  %369 = vmatmul.mubr.bf16.gmra.mrb[0].mxu0 %v216
  %v370 = vpop.f32.mrb[0].mxu0
  %v371 = vadd.f32 0.0, %v370
  %v372 = vpop.f32.mrb[0].mxu0
  %v373 = vpop.f32.mrb[0].mxu0
  %v374 = vadd.f32 0.0, %v373
  %v375 = vpop.f32.mrb[0].mxu0
  %376 = vmatprep.mubr.bf16.mxu0 0
  %377 = vmatmul.mubr.bf16.gmra.mrb[0].mxu0 %v219
  %v378 = vpop.f32.mrb[0].mxu0
  %v379 = vadd.f32 0.0, %v378
  %v380 = vpop.f32.mrb[0].mxu0
  %v381 = vpop.f32.mrb[0].mxu0
  %v382 = vadd.f32 0.0, %v381
  %v383 = vpop.f32.mrb[0].mxu0
  %384 = vmatprep.mubr.bf16.mxu0 0
  %385 = vmatmul.mubr.bf16.gmra.mrb[0].mxu0 %v222
  %v386 = vpop.f32.mrb[0].mxu0
  %v387 = vadd.f32 0.0, %v386
  %v388 = vpop.f32.mrb[0].mxu0
  %v389 = vpop.f32.mrb[0].mxu0
  %v390 = vadd.f32 0.0, %v389
  %v391 = vpop.f32.mrb[0].mxu0
  %392 = vmatprep.mubr.bf16.mxu0 0
  %393 = vmatmul.mubr.bf16.gmra.mrb[0].mxu0 %v225
  %v394 = vpop.f32.mrb[0].mxu0
  %v395 = vadd.f32 0.0, %v394
  %v396 = vpop.f32.mrb[0].mxu0
  %v397 = vpop.f32.mrb[0].mxu0
  %v398 = vadd.f32 0.0, %v397
  %v399 = vpop.f32.mrb[0].mxu0
  %400 = vmatprep.mubr.bf16.mxu0 0
  %401 = vmatmul.mubr.bf16.gmra.mrb[0].mxu0 %v228
  %v402 = vpop.f32.mrb[0].mxu0
  %v403 = vadd.f32 0.0, %v402
  %v404 = vpop.f32.mrb[0].mxu0
  %v405 = vpop.f32.mrb[0].mxu0
  %v406 = vadd.f32 0.0, %v405
  %v407 = vpop.f32.mrb[0].mxu0
  %408 = vmatprep.mubr.bf16.mxu0 0
  %409 = vmatmul.mubr.bf16.gmra.mrb[0].mxu0 %v231
  %v410 = vpop.f32.mrb[0].mxu0
  %v411 = vadd.f32 0.0, %v410
  %v412 = vpop.f32.mrb[0].mxu0
  %v413 = vpop.f32.mrb[0].mxu0
  %v414 = vadd.f32 0.0, %v413
  %v415 = vpop.f32.mrb[0].mxu0
  %416 = vmatprep.mubr.bf16.mxu0 0
  %417 = vmatmul.mubr.bf16.gmra.mrb[0].mxu0 %v234
  %v418 = vpop.f32.mrb[0].mxu0
  %v419 = vadd.f32 0.0, %v418
  %v420 = vpop.f32.mrb[0].mxu0
  %v421 = vpop.f32.mrb[0].mxu0
  %v422 = vadd.f32 0.0, %v421
  %v423 = vpop.f32.mrb[0].mxu0
  %424 = vmatprep.mubr.bf16.mxu0 0
  %425 = vmatmul.mubr.bf16.gmra.mrb[0].mxu0 %v237
  %v426 = vpop.f32.mrb[0].mxu0
  %v427 = vadd.f32 0.0, %v426
  %v428 = vpop.f32.mrb[0].mxu0
  %v429 = vpop.f32.mrb[0].mxu0
  %v430 = vadd.f32 0.0, %v429
  %v431 = vpop.f32.mrb[0].mxu0
  %432 = vmatprep.mubr.bf16.mxu0 0
  %433 = vmatmul.mubr.bf16.gmra.mrb[0].mxu0 %v240
  %v434 = vpop.f32.mrb[0].mxu0
  %v435 = vadd.f32 0.0, %v434
  %v436 = vpop.f32.mrb[0].mxu0
  %v437 = vpop.f32.mrb[0].mxu0
  %v438 = vadd.f32 0.0, %v437
  %v439 = vpop.f32.mrb[0].mxu0
  %440 = vmatprep.mubr.bf16.mxu0 0
  %441 = vmatmul.mubr.bf16.gmra.mrb[0].mxu0 %v243
  %v442 = vpop.f32.mrb[0].mxu0
  %v443 = vadd.f32 0.0, %v442
  %v444 = vpop.f32.mrb[0].mxu0
  %v445 = vpop.f32.mrb[0].mxu0
  %v446 = vadd.f32 0.0, %v445
  %v447 = vpop.f32.mrb[0].mxu0
  %448 = vmatprep.mubr.bf16.mxu0 0
  %449 = vmatmul.mubr.bf16.gmra.mrb[0].mxu0 %v246
  %v450 = vpop.f32.mrb[0].mxu0
  %v451 = vadd.f32 0.0, %v450
  %v452 = vpop.f32.mrb[0].mxu0
  %v453 = vpop.f32.mrb[0].mxu0
  %v454 = vpop.f32.mrb[0].mxu0
  %455 = vdwg.mxu0
  %v456 = vpack.c.bf16 %v286, %v283
  %v457 = vpack.c.bf16 %v294, %v291
  %v458 = vpack.c.bf16 %v302, %v299
  %v459 = vpack.c.bf16 %v310, %v307
  %v460 = vpack.c.bf16 %v318, %v315
  %v461 = vpack.c.bf16 %v326, %v323
  %v462 = vpack.c.bf16 %v334, %v331
  %v463 = vpack.c.bf16 %v342, %v339
  %v464 = vpack.c.bf16 %v350, %v347
  %v465 = vpack.c.bf16 %v358, %v355
  %v466 = vpack.c.bf16 %v366, %v363
  %v467 = vpack.c.bf16 %v374, %v371
  %v468 = vpack.c.bf16 %v382, %v379
  %v469 = vpack.c.bf16 %v390, %v387
  %v470 = vpack.c.bf16 %v398, %v395
  %v471 = vpack.c.bf16 %v406, %v403
  %v472 = vpack.c.bf16 %v414, %v411
  %v473 = vpack.c.bf16 %v422, %v419
  %v474 = vpack.c.bf16 %v430, %v427
  %v475 = vpack.c.bf16 %v438, %v435
  %v476 = vpack.c.bf16 %v446, %v443
  %v477 = vpack.c.bf16 %v451, %v451
  %v500 = vunpack.c.l.b16 %v456
  %v501 = vunpack.c.h.b16 %v456
  %v502 = vunpack.c.l.b16 %v457
  %v503 = vunpack.c.h.b16 %v457
  %v504 = vunpack.c.l.b16 %v458
  %v505 = vunpack.c.h.b16 %v458
  %v506 = vunpack.c.l.b16 %v459
  %v507 = vunpack.c.h.b16 %v459
  %v508 = vunpack.c.l.b16 %v460
  %v509 = vunpack.c.h.b16 %v460
  %v510 = vunpack.c.l.b16 %v461
  %v511 = vunpack.c.h.b16 %v461
  %v512 = vunpack.c.l.b16 %v462
  %v513 = vunpack.c.h.b16 %v462
  %v514 = vunpack.c.l.b16 %v463
  %v515 = vunpack.c.h.b16 %v463
  %v516 = vunpack.c.l.b16 %v464
  %v517 = vunpack.c.h.b16 %v464
  %v518 = vunpack.c.l.b16 %v465
  %v519 = vunpack.c.h.b16 %v465
  %v520 = vunpack.c.l.b16 %v466
  %v521 = vunpack.c.h.b16 %v466
  %v522 = vunpack.c.l.b16 %v467
  %v523 = vunpack.c.h.b16 %v467
  %v524 = vunpack.c.l.b16 %v468
  %v525 = vunpack.c.h.b16 %v468
  %v526 = vunpack.c.l.b16 %v469
  %v527 = vunpack.c.h.b16 %v469
  %v528 = vunpack.c.l.b16 %v470
  %v529 = vunpack.c.h.b16 %v470
  %v530 = vunpack.c.l.b16 %v471
  %v531 = vunpack.c.h.b16 %v471
  %v532 = vunpack.c.l.b16 %v472
  %v533 = vunpack.c.h.b16 %v472
  %v534 = vunpack.c.l.b16 %v473
  %v535 = vunpack.c.h.b16 %v473
  %v536 = vunpack.c.l.b16 %v474
  %v537 = vunpack.c.h.b16 %v474
  %v538 = vunpack.c.l.b16 %v475
  %v539 = vunpack.c.h.b16 %v475
  %v540 = vunpack.c.l.b16 %v476
  %v541 = vunpack.c.h.b16 %v476
  %v542 = vunpack.c.l.b16 %v477
  %v543 = vpack.c.b16 %v500, %v500
  %v544 = vpack.c.b16 %v501, %v501
  %v545 = vpack.c.b16 %v502, %v502
  %v546 = vpack.c.b16 %v503, %v503
  %v547 = vpack.c.b16 %v504, %v504
  %v548 = vpack.c.b16 %v505, %v505
  %v549 = vpack.c.b16 %v506, %v506
  %v550 = vpack.c.b16 %v507, %v507
  %v551 = vpack.c.b16 %v508, %v508
  %v552 = vpack.c.b16 %v509, %v509
  %v553 = vpack.c.b16 %v510, %v510
  %v554 = vpack.c.b16 %v511, %v511
  %v555 = vpack.c.b16 %v512, %v512
  %v556 = vpack.c.b16 %v513, %v513
  %v557 = vpack.c.b16 %v514, %v514
  %v558 = vpack.c.b16 %v515, %v515
  %v559 = vpack.c.b16 %v516, %v516
  %v560 = vpack.c.b16 %v517, %v517
  %v561 = vpack.c.b16 %v518, %v518
  %v562 = vpack.c.b16 %v519, %v519
  %v563 = vpack.c.b16 %v520, %v520
  %v564 = vpack.c.b16 %v521, %v521
  %v565 = vpack.c.b16 %v522, %v522
  %v566 = vpack.c.b16 %v523, %v523
  %v567 = vpack.c.b16 %v524, %v524
  %v568 = vpack.c.b16 %v525, %v525
  %v569 = vpack.c.b16 %v526, %v526
  %v570 = vpack.c.b16 %v527, %v527
  %v571 = vpack.c.b16 %v528, %v528
  %v572 = vpack.c.b16 %v529, %v529
  %v573 = vpack.c.b16 %v530, %v530
  %v574 = vpack.c.b16 %v531, %v531
  %v575 = vpack.c.b16 %v532, %v532
  %v576 = vpack.c.b16 %v533, %v533
  %v577 = vpack.c.b16 %v534, %v534
  %v578 = vpack.c.b16 %v535, %v535
  %v579 = vpack.c.b16 %v536, %v536
  %v580 = vpack.c.b16 %v537, %v537
  %v581 = vpack.c.b16 %v538, %v538
  %v582 = vpack.c.b16 %v539, %v539
  %v583 = vpack.c.b16 %v540, %v540
  %v584 = vpack.c.b16 %v541, %v541
  %v585 = vpack.c.b16 %v542, %v542
  %vm629 = vcmask 125952
  %630 = vst.msk [vmem:[%s2] sm:$0xf] %vm629, %v543
  %631 = vst.msk [vmem:[%s2 + $0x4] sm:$0xf] %vm629, %v544
  %632 = vst.msk [vmem:[%s2 + $0x8] sm:$0xf] %vm629, %v545
  %633 = vst.msk [vmem:[%s2 + $0xc] sm:$0xf] %vm629, %v546
  %634 = vst.msk [vmem:[%s2 + $0x10] sm:$0xf] %vm629, %v547
  %635 = vst.msk [vmem:[%s2 + $0x14] sm:$0xf] %vm629, %v548
  %636 = vst.msk [vmem:[%s2 + $0x18] sm:$0xf] %vm629, %v549
  %637 = vst.msk [vmem:[%s2 + $0x1c] sm:$0xf] %vm629, %v550
  %638 = vst.msk [vmem:[%s2 + $0x20] sm:$0xf] %vm629, %v551
  %639 = vst.msk [vmem:[%s2 + $0x24] sm:$0xf] %vm629, %v552
  %640 = vst.msk [vmem:[%s2 + $0x28] sm:$0xf] %vm629, %v553
  %641 = vst.msk [vmem:[%s2 + $0x2c] sm:$0xf] %vm629, %v554
  %642 = vst.msk [vmem:[%s2 + $0x30] sm:$0xf] %vm629, %v555
  %643 = vst.msk [vmem:[%s2 + $0x34] sm:$0xf] %vm629, %v556
  %644 = vst.msk [vmem:[%s2 + $0x38] sm:$0xf] %vm629, %v557
  %645 = vst.msk [vmem:[%s2 + $0x3c] sm:$0xf] %vm629, %v558
  %646 = vst.msk [vmem:[%s2 + $0x40] sm:$0xf] %vm629, %v559
  %647 = vst.msk [vmem:[%s2 + $0x44] sm:$0xf] %vm629, %v560
  %648 = vst.msk [vmem:[%s2 + $0x48] sm:$0xf] %vm629, %v561
  %649 = vst.msk [vmem:[%s2 + $0x4c] sm:$0xf] %vm629, %v562
  %650 = vst.msk [vmem:[%s2 + $0x50] sm:$0xf] %vm629, %v563
  %651 = vst.msk [vmem:[%s2 + $0x54] sm:$0xf] %vm629, %v564
  %652 = vst.msk [vmem:[%s2 + $0x58] sm:$0xf] %vm629, %v565
  %653 = vst.msk [vmem:[%s2 + $0x5c] sm:$0xf] %vm629, %v566
  %654 = vst.msk [vmem:[%s2 + $0x60] sm:$0xf] %vm629, %v567
  %655 = vst.msk [vmem:[%s2 + $0x64] sm:$0xf] %vm629, %v568
  %656 = vst.msk [vmem:[%s2 + $0x68] sm:$0xf] %vm629, %v569
  %657 = vst.msk [vmem:[%s2 + $0x6c] sm:$0xf] %vm629, %v570
  %658 = vst.msk [vmem:[%s2 + $0x70] sm:$0xf] %vm629, %v571
  %659 = vst.msk [vmem:[%s2 + $0x74] sm:$0xf] %vm629, %v572
  %660 = vst.msk [vmem:[%s2 + $0x78] sm:$0xf] %vm629, %v573
  %661 = vst.msk [vmem:[%s2 + $0x7c] sm:$0xf] %vm629, %v574
  %662 = vst.msk [vmem:[%s2 + $0x80] sm:$0xf] %vm629, %v575
  %663 = vst.msk [vmem:[%s2 + $0x84] sm:$0xf] %vm629, %v576
  %664 = vst.msk [vmem:[%s2 + $0x88] sm:$0xf] %vm629, %v577
  %665 = vst.msk [vmem:[%s2 + $0x8c] sm:$0xf] %vm629, %v578
  %666 = vst.msk [vmem:[%s2 + $0x90] sm:$0xf] %vm629, %v579
  %667 = vst.msk [vmem:[%s2 + $0x94] sm:$0xf] %vm629, %v580
  %668 = vst.msk [vmem:[%s2 + $0x98] sm:$0xf] %vm629, %v581
  %669 = vst.msk [vmem:[%s2 + $0x9c] sm:$0xf] %vm629, %v582
  %670 = vst.msk [vmem:[%s2 + $0xa0] sm:$0xf] %vm629, %v583
  %671 = vst.msk [vmem:[%s2 + $0xa4] sm:$0xf] %vm629, %v584
  %672 = vst.msk [vmem:[%s2 + $0xa8] sm:$0xf] %vm629, %v585
  %v673 = vld [vmem:[%s3] sm:$0x1]
  %v674 = vsel %vm181, %v283, 0.0
  %v675 = vsel %vm181, %v286, 0.0
  %v676 = vadd.f32 %v674, %v675
  %v677 = vsel %vm181, %v291, 0.0
  %v678 = vadd.f32 %v676, %v677
  %v679 = vsel %vm181, %v294, 0.0
  %v680 = vadd.f32 %v678, %v679
  %v681 = vsel %vm181, %v299, 0.0
  %v682 = vadd.f32 %v680, %v681
  %v683 = vsel %vm181, %v302, 0.0
  %v684 = vadd.f32 %v682, %v683
  %v685 = vsel %vm181, %v307, 0.0
  %v686 = vadd.f32 %v684, %v685
  %v687 = vsel %vm181, %v310, 0.0
  %v688 = vadd.f32 %v686, %v687
  %v689 = vsel %vm181, %v315, 0.0
  %v690 = vadd.f32 %v688, %v689
  %v691 = vsel %vm181, %v318, 0.0
  %v692 = vadd.f32 %v690, %v691
  %v693 = vsel %vm181, %v323, 0.0
  %v694 = vadd.f32 %v692, %v693
  %v695 = vsel %vm181, %v326, 0.0
  %v696 = vadd.f32 %v694, %v695
  %v697 = vsel %vm181, %v331, 0.0
  %v698 = vadd.f32 %v696, %v697
  %v699 = vsel %vm181, %v334, 0.0
  %v700 = vadd.f32 %v698, %v699
  %v701 = vsel %vm181, %v339, 0.0
  %v702 = vadd.f32 %v700, %v701
  %v703 = vsel %vm181, %v342, 0.0
  %v704 = vadd.f32 %v702, %v703
  %v705 = vsel %vm181, %v347, 0.0
  %v706 = vadd.f32 %v704, %v705
  %v707 = vsel %vm181, %v350, 0.0
  %v708 = vadd.f32 %v706, %v707
  %v709 = vsel %vm181, %v355, 0.0
  %v710 = vadd.f32 %v708, %v709
  %v711 = vsel %vm181, %v358, 0.0
  %v712 = vadd.f32 %v710, %v711
  %v713 = vsel %vm181, %v363, 0.0
  %v714 = vadd.f32 %v712, %v713
  %v715 = vsel %vm181, %v366, 0.0
  %v716 = vadd.f32 %v714, %v715
  %v717 = vsel %vm181, %v371, 0.0
  %v718 = vadd.f32 %v716, %v717
  %v719 = vsel %vm181, %v374, 0.0
  %v720 = vadd.f32 %v718, %v719
  %v721 = vsel %vm181, %v379, 0.0
  %v722 = vadd.f32 %v720, %v721
  %v723 = vsel %vm181, %v382, 0.0
  %v724 = vadd.f32 %v722, %v723
  %v725 = vsel %vm181, %v387, 0.0
  %v726 = vadd.f32 %v724, %v725
  %v727 = vsel %vm181, %v390, 0.0
  %v728 = vadd.f32 %v726, %v727
  %v729 = vsel %vm181, %v395, 0.0
  %v730 = vadd.f32 %v728, %v729
  %v731 = vsel %vm181, %v398, 0.0
  %v732 = vadd.f32 %v730, %v731
  %v733 = vsel %vm181, %v403, 0.0
  %v734 = vadd.f32 %v732, %v733
  %v735 = vsel %vm181, %v406, 0.0
  %v736 = vadd.f32 %v734, %v735
  %v737 = vsel %vm181, %v411, 0.0
  %v738 = vadd.f32 %v736, %v737
  %v739 = vsel %vm181, %v414, 0.0
  %v740 = vadd.f32 %v738, %v739
  %v741 = vsel %vm181, %v419, 0.0
  %v742 = vadd.f32 %v740, %v741
  %v743 = vsel %vm181, %v422, 0.0
  %v744 = vadd.f32 %v742, %v743
  %v745 = vsel %vm181, %v427, 0.0
  %v746 = vadd.f32 %v744, %v745
  %v747 = vsel %vm181, %v430, 0.0
  %v748 = vadd.f32 %v746, %v747
  %v749 = vsel %vm181, %v435, 0.0
  %v750 = vadd.f32 %v748, %v749
  %v751 = vsel %vm181, %v438, 0.0
  %v752 = vadd.f32 %v750, %v751
  %v753 = vsel %vm181, %v443, 0.0
  %v754 = vadd.f32 %v752, %v753
  %v755 = vsel %vm181, %v446, 0.0
  %v756 = vadd.f32 %v754, %v755
  %v757 = vsel %vm181, %v451, 0.0
  %v758 = vadd.f32 %v756, %v757
  %v759 = vrot.slane %v758, 4
  %v760 = vadd.f32 %v758, %v759
  %v761 = vrot.slane %v760, 2
  %v762 = vadd.f32 %v760, %v761
  %v763 = vrot.slane %v762, 1
  %v764 = vadd.f32 %v762, %v763
  %v765 = vadd.f32 %v673, %v764
  %vm766 = vcmask 122880
  %767 = vst.msk [vmem:[%s3] sm:$0x1] %vm766, %v765
  %v768 = vld [vmem:[%s4] sm:$0x1]
  %v769 = vmul.f32 %v283, %v283
  %v770 = vmul.f32 %v286, %v286
  %v771 = vmul.f32 %v291, %v291
  %v772 = vmul.f32 %v294, %v294
  %v773 = vmul.f32 %v299, %v299
  %v774 = vmul.f32 %v302, %v302
  %v775 = vmul.f32 %v307, %v307
  %v776 = vmul.f32 %v310, %v310
  %v777 = vmul.f32 %v315, %v315
  %v778 = vmul.f32 %v318, %v318
  %v779 = vmul.f32 %v323, %v323
  %v780 = vmul.f32 %v326, %v326
  %v781 = vmul.f32 %v331, %v331
  %v782 = vmul.f32 %v334, %v334
  %v783 = vmul.f32 %v339, %v339
  %v784 = vmul.f32 %v342, %v342
  %v785 = vmul.f32 %v347, %v347
  %v786 = vmul.f32 %v350, %v350
  %v787 = vmul.f32 %v355, %v355
  %v788 = vmul.f32 %v358, %v358
  %v789 = vmul.f32 %v363, %v363
  %v790 = vmul.f32 %v366, %v366
  %v791 = vmul.f32 %v371, %v371
  %v792 = vmul.f32 %v374, %v374
  %v793 = vmul.f32 %v379, %v379
  %v794 = vmul.f32 %v382, %v382
  %v795 = vmul.f32 %v387, %v387
  %v796 = vmul.f32 %v390, %v390
  %v797 = vmul.f32 %v395, %v395
  %v798 = vmul.f32 %v398, %v398
  %v799 = vmul.f32 %v403, %v403
  %v800 = vmul.f32 %v406, %v406
  %v801 = vmul.f32 %v411, %v411
  %v802 = vmul.f32 %v414, %v414
  %v803 = vmul.f32 %v419, %v419
  %v804 = vmul.f32 %v422, %v422
  %v805 = vmul.f32 %v427, %v427
  %v806 = vmul.f32 %v430, %v430
  %v807 = vmul.f32 %v435, %v435
  %v808 = vmul.f32 %v438, %v438
  %v809 = vmul.f32 %v443, %v443
  %v810 = vmul.f32 %v446, %v446
  %v811 = vmul.f32 %v451, %v451
  %v812 = vsel %vm181, %v769, 0.0
  %v813 = vsel %vm181, %v770, 0.0
  %v814 = vadd.f32 %v812, %v813
  %v815 = vsel %vm181, %v771, 0.0
  %v816 = vadd.f32 %v814, %v815
  %v817 = vsel %vm181, %v772, 0.0
  %v818 = vadd.f32 %v816, %v817
  %v819 = vsel %vm181, %v773, 0.0
  %v820 = vadd.f32 %v818, %v819
  %v821 = vsel %vm181, %v774, 0.0
  %v822 = vadd.f32 %v820, %v821
  %v823 = vsel %vm181, %v775, 0.0
  %v824 = vadd.f32 %v822, %v823
  %v825 = vsel %vm181, %v776, 0.0
  %v826 = vadd.f32 %v824, %v825
  %v827 = vsel %vm181, %v777, 0.0
  %v828 = vadd.f32 %v826, %v827
  %v829 = vsel %vm181, %v778, 0.0
  %v830 = vadd.f32 %v828, %v829
  %v831 = vsel %vm181, %v779, 0.0
  %v832 = vadd.f32 %v830, %v831
  %v833 = vsel %vm181, %v780, 0.0
  %v834 = vadd.f32 %v832, %v833
  %v835 = vsel %vm181, %v781, 0.0
  %v836 = vadd.f32 %v834, %v835
  %v837 = vsel %vm181, %v782, 0.0
  %v838 = vadd.f32 %v836, %v837
  %v839 = vsel %vm181, %v783, 0.0
  %v840 = vadd.f32 %v838, %v839
  %v841 = vsel %vm181, %v784, 0.0
  %v842 = vadd.f32 %v840, %v841
  %v843 = vsel %vm181, %v785, 0.0
  %v844 = vadd.f32 %v842, %v843
  %v845 = vsel %vm181, %v786, 0.0
  %v846 = vadd.f32 %v844, %v845
  %v847 = vsel %vm181, %v787, 0.0
  %v848 = vadd.f32 %v846, %v847
  %v849 = vsel %vm181, %v788, 0.0
  %v850 = vadd.f32 %v848, %v849
  %v851 = vsel %vm181, %v789, 0.0
  %v852 = vadd.f32 %v850, %v851
  %v853 = vsel %vm181, %v790, 0.0
  %v854 = vadd.f32 %v852, %v853
  %v855 = vsel %vm181, %v791, 0.0
  %v856 = vadd.f32 %v854, %v855
  %v857 = vsel %vm181, %v792, 0.0
  %v858 = vadd.f32 %v856, %v857
  %v859 = vsel %vm181, %v793, 0.0
  %v860 = vadd.f32 %v858, %v859
  %v861 = vsel %vm181, %v794, 0.0
  %v862 = vadd.f32 %v860, %v861
  %v863 = vsel %vm181, %v795, 0.0
  %v864 = vadd.f32 %v862, %v863
  %v865 = vsel %vm181, %v796, 0.0
  %v866 = vadd.f32 %v864, %v865
  %v867 = vsel %vm181, %v797, 0.0
  %v868 = vadd.f32 %v866, %v867
  %v869 = vsel %vm181, %v798, 0.0
  %v870 = vadd.f32 %v868, %v869
  %v871 = vsel %vm181, %v799, 0.0
  %v872 = vadd.f32 %v870, %v871
  %v873 = vsel %vm181, %v800, 0.0
  %v874 = vadd.f32 %v872, %v873
  %v875 = vsel %vm181, %v801, 0.0
  %v876 = vadd.f32 %v874, %v875
  %v877 = vsel %vm181, %v802, 0.0
  %v878 = vadd.f32 %v876, %v877
  %v879 = vsel %vm181, %v803, 0.0
  %v880 = vadd.f32 %v878, %v879
  %v881 = vsel %vm181, %v804, 0.0
  %v882 = vadd.f32 %v880, %v881
  %v883 = vsel %vm181, %v805, 0.0
  %v884 = vadd.f32 %v882, %v883
  %v885 = vsel %vm181, %v806, 0.0
  %v886 = vadd.f32 %v884, %v885
  %v887 = vsel %vm181, %v807, 0.0
  %v888 = vadd.f32 %v886, %v887
  %v889 = vsel %vm181, %v808, 0.0
  %v890 = vadd.f32 %v888, %v889
  %v891 = vsel %vm181, %v809, 0.0
  %v892 = vadd.f32 %v890, %v891
  %v893 = vsel %vm181, %v810, 0.0
  %v894 = vadd.f32 %v892, %v893
  %v895 = vsel %vm181, %v811, 0.0
  %v896 = vadd.f32 %v894, %v895
  %v897 = vrot.slane %v896, 4
  %v898 = vadd.f32 %v896, %v897
  %v899 = vrot.slane %v898, 2
  %v900 = vadd.f32 %v898, %v899
  %v901 = vrot.slane %v900, 1
  %v902 = vadd.f32 %v900, %v901
  %v903 = vadd.f32 %v768, %v902
  %904 = vst.msk [vmem:[%s4] sm:$0x1] %vm766, %v903
  // Predicated region
  $region14: #{embedding_net_forward.5} parent=0 // pred_check
    _
  $region15: #{embedding_net_forward.5} parent=0 // pred_check_branch
    %906 = sbr.rel (0) target = $region17
  $region16: #{embedding_net_forward.5} parent=0 // pred_region
    _
  $region17: #{embedding_net_forward.5} parent=0 // pred_fallthru
    _
  // Predicated region
  $region18: #{embedding_net_forward.5} parent=0 // pred_check
    _
  $region19: #{embedding_net_forward.5} parent=0 // pred_check_branch
    %908 = sbr.rel (0) target = $region21
  $region20: #{embedding_net_forward.5} parent=0 // pred_region
    _
  $region21: #{embedding_net_forward.5} parent=0 // pred_fallthru
    _
  // Predicated region
  $region22: #{embedding_net_forward.5} parent=0 // pred_check
    _
  $region23: #{embedding_net_forward.5} parent=0 // pred_check_branch
    %910 = sbr.rel (0) target = $region25
  $region24: #{embedding_net_forward.5} parent=0 // pred_region
    _
  $region25: #{embedding_net_forward.5} parent=0 // pred_fallthru
    _
  // Predicated region
  $region26: #{embedding_net_forward.5} parent=0 // pred_check
    _
  $region27: #{embedding_net_forward.5} parent=0 // pred_check_branch
    %912 = sbr.rel (0) target = $region29
  $region28: #{embedding_net_forward.5} parent=0 // pred_region
    _
  $region29: #{embedding_net_forward.5} parent=0 // pred_fallthru
    _
  // Predicated region
  $region30: #{embedding_net_forward.5} parent=0 // pred_check
    _
  $region31: #{embedding_net_forward.5} parent=0 // pred_check_branch
    %914 = sbr.rel (0) target = $region33
  $region32: #{embedding_net_forward.5} parent=0 // pred_region
    _
  $region33: #{embedding_net_forward.5} parent=0 // pred_fallthru
    _
  // Predicated region
  $region34: #{embedding_net_forward.5} parent=0 // pred_check
    _
  $region35: #{embedding_net_forward.5} parent=0 // pred_check_branch
    %916 = sbr.rel (0) target = $region37
  $region36: #{embedding_net_forward.5} parent=0 // pred_region
    _
  $region37: #{embedding_net_forward.5} parent=0 // pred_fallthru
    _

// kernel: embedding_net_forward.8
$region0: #{embedding_net_forward.8}
  #allocation0 [shape = 'u32[]', space=smem, size = 0x4, offset = 0x4, fixed_abs, tag = 'smem constant byte address 0x4 - core index']
  #allocation1 [shape = 'u32[144,128]{1,0:T(1,128)}', space=vmem, size = 0x12000, scoped, tag = 'internal scratch']
  %s0 = inlined_call_operand.vmem [shape: bf16[56,32], index: 0, kind: input, shape index: {}]
  %s1 = inlined_call_operand.vmem [shape: f32[1,32], index: 1, kind: input, shape index: {}]
  %s2 = inlined_call_operand.vmem [shape: f32[1,32], index: 2, kind: input, shape index: {}]
  %s3 = inlined_call_operand.vmem [shape: f32[1,32], index: 3, kind: input, shape index: {}]
  %s4 = inlined_call_operand.vmem [shape: f32[1,32], index: 4, kind: input, shape index: {}]
  %s5 = inlined_call_operand.vmem [shape: bf16[56,32], index: 5, kind: output, shape index: {}]
  %s6 = sld [smem:[#allocation0]]
  $region30: #{embedding_net_forward.8} parent=0
    _
  %s8 = ssub.s32 1, %s6
  %s9 = scalar_select 0, %s8, %s6
  // Predicated region
  $region2: #{embedding_net_forward.8} parent=0 // pred_check
    _
  $region3: #{embedding_net_forward.8} parent=0 // pred_check_branch
    %11 = sbr.rel (0) target = $region5
  $region4: #{embedding_net_forward.8} parent=0 // pred_region
    _
  $region5: #{embedding_net_forward.8} parent=0 // pred_fallthru
    _
  // Predicated region
  $region6: #{embedding_net_forward.8} parent=0 // pred_check
    _
  $region7: #{embedding_net_forward.8} parent=0 // pred_check_branch
    %13 = sbr.rel (0) target = $region9
  $region8: #{embedding_net_forward.8} parent=0 // pred_region
    _
  $region9: #{embedding_net_forward.8} parent=0 // pred_fallthru
    _
  // Predicated region
  $region10: #{embedding_net_forward.8} parent=0 // pred_check
    _
  $region11: #{embedding_net_forward.8} parent=0 // pred_check_branch
    %15 = sbr.rel (0) target = $region13
  $region12: #{embedding_net_forward.8} parent=0 // pred_region
    _
  $region13: #{embedding_net_forward.8} parent=0 // pred_fallthru
    _
  // Predicated region
  $region14: #{embedding_net_forward.8} parent=0 // pred_check
    _
  $region15: #{embedding_net_forward.8} parent=0 // pred_check_branch
    %17 = sbr.rel (0) target = $region17
  $region16: #{embedding_net_forward.8} parent=0 // pred_region
    _
  $region17: #{embedding_net_forward.8} parent=0 // pred_fallthru
    _
  // Predicated region
  $region18: #{embedding_net_forward.8} parent=0 // pred_check
    _
  $region19: #{embedding_net_forward.8} parent=0 // pred_check_branch
    %19 = sbr.rel (0) target = $region21
  $region20: #{embedding_net_forward.8} parent=0 // pred_region
    _
  $region21: #{embedding_net_forward.8} parent=0 // pred_fallthru
    _
  %v20 = vld [vmem:[%s0] sm:$0xf]
  %v21 = vld [vmem:[%s0 + $0x4] sm:$0xf]
  %v22 = vld [vmem:[%s0 + $0x8] sm:$0xf]
  %v23 = vld [vmem:[%s0 + $0xc] sm:$0xf]
  %v24 = vld [vmem:[%s0 + $0x10] sm:$0xf]
  %v25 = vld [vmem:[%s0 + $0x14] sm:$0xf]
  %v26 = vld [vmem:[%s0 + $0x18] sm:$0xf]
  %v27 = vunpack.c.l.bf16 %v20
  %v28 = vunpack.c.l.bf16 %v21
  %v29 = vunpack.c.l.bf16 %v22
  %v30 = vunpack.c.l.bf16 %v23
  %v31 = vunpack.c.l.bf16 %v24
  %v32 = vunpack.c.l.bf16 %v25
  %v33 = vunpack.c.l.bf16 %v26
  %v34 = vld [vmem:[%s1] sm:$0x1]
  %v35 = vmul.f32 %v34, 0.02
  %v36 = vld [vmem:[%s2] sm:$0x1]
  %v37 = vmul.f32 %v36, 0.02
  %v38 = vmul.f32 %v35, %v35
  %v39 = vsub.f32 %v37, %v38
  %v40 = vadd.f32 %v39, 1e-05
  %v41 = vrsqrt.pop %v40
  %v42 = vld [vmem:[%s3] sm:$0x1]
  %v43 = vmul.f32 %v41, %v42
  %v45 = vlaneseq
  %v46 = vshrl.u32 %v45, 7
  %v47 = vsub.s32 0, %v46
  %v48 = vrot.slane %v35, %v47
  %v50 = vsub.f32 %v27, %v48
  %v51 = vsub.f32 %v28, %v48
  %v52 = vsub.f32 %v29, %v48
  %v53 = vsub.f32 %v30, %v48
  %v54 = vsub.f32 %v31, %v48
  %v55 = vsub.f32 %v32, %v48
  %v56 = vsub.f32 %v33, %v48
  %v58 = vlaneseq
  %v59 = vshrl.u32 %v58, 7
  %v60 = vsub.s32 0, %v59
  %v61 = vrot.slane %v43, %v60
  %v63 = vmul.f32 %v50, %v61
  %v64 = vmul.f32 %v51, %v61
  %v65 = vmul.f32 %v52, %v61
  %v66 = vmul.f32 %v53, %v61
  %v67 = vmul.f32 %v54, %v61
  %v68 = vmul.f32 %v55, %v61
  %v69 = vmul.f32 %v56, %v61
  %v70 = vld [vmem:[%s4] sm:$0x1]
  %v72 = vlaneseq
  %v73 = vshrl.u32 %v72, 7
  %v74 = vsub.s32 0, %v73
  %v75 = vrot.slane %v70, %v74
  %v77 = vadd.f32 %v63, %v75
  %v78 = vadd.f32 %v64, %v75
  %v79 = vadd.f32 %v65, %v75
  %v80 = vadd.f32 %v66, %v75
  %v81 = vadd.f32 %v67, %v75
  %v82 = vadd.f32 %v68, %v75
  %v83 = vadd.f32 %v69, %v75
  %vm84 = vcmp.gt.f32.partialorder %v77, 0.0
  %vm85 = vcmp.gt.f32.partialorder %v78, 0.0
  %vm86 = vcmp.gt.f32.partialorder %v79, 0.0
  %vm87 = vcmp.gt.f32.partialorder %v80, 0.0
  %vm88 = vcmp.gt.f32.partialorder %v81, 0.0
  %vm89 = vcmp.gt.f32.partialorder %v82, 0.0
  %vm90 = vcmp.gt.f32.partialorder %v83, 0.0
  %v91 = vmul.f32 %v77, 0.2
  %v92 = vmul.f32 %v78, 0.2
  %v93 = vmul.f32 %v79, 0.2
  %v94 = vmul.f32 %v80, 0.2
  %v95 = vmul.f32 %v81, 0.2
  %v96 = vmul.f32 %v82, 0.2
  %v97 = vmul.f32 %v83, 0.2
  %v98 = vsel %vm84, %v77, %v91
  %v99 = vsel %vm85, %v78, %v92
  %v100 = vsel %vm86, %v79, %v93
  %v101 = vsel %vm87, %v80, %v94
  %v102 = vsel %vm88, %v81, %v95
  %v103 = vsel %vm89, %v82, %v96
  %v104 = vsel %vm90, %v83, %v97
  %v105 = vpack.c.bf16 %v99, %v98
  %v106 = vpack.c.bf16 %v101, %v100
  %v107 = vpack.c.bf16 %v103, %v102
  %v108 = vpack.c.bf16 %v104, %v104
  %v113 = vunpack.c.l.b16 %v105
  %v114 = vunpack.c.h.b16 %v105
  %v115 = vunpack.c.l.b16 %v106
  %v116 = vunpack.c.h.b16 %v106
  %v117 = vunpack.c.l.b16 %v107
  %v118 = vunpack.c.h.b16 %v107
  %v119 = vunpack.c.l.b16 %v108
  %v120 = vpack.c.b16 %v113, %v113
  %v121 = vpack.c.b16 %v114, %v114
  %v122 = vpack.c.b16 %v115, %v115
  %v123 = vpack.c.b16 %v116, %v116
  %v124 = vpack.c.b16 %v117, %v117
  %v125 = vpack.c.b16 %v118, %v118
  %v126 = vpack.c.b16 %v119, %v119
  %vm134 = vcmask 257024
  %135 = vst.msk [vmem:[%s5] sm:$0xf] %vm134, %v120
  %136 = vst.msk [vmem:[%s5 + $0x4] sm:$0xf] %vm134, %v121
  %137 = vst.msk [vmem:[%s5 + $0x8] sm:$0xf] %vm134, %v122
  %138 = vst.msk [vmem:[%s5 + $0xc] sm:$0xf] %vm134, %v123
  %139 = vst.msk [vmem:[%s5 + $0x10] sm:$0xf] %vm134, %v124
  %140 = vst.msk [vmem:[%s5 + $0x14] sm:$0xf] %vm134, %v125
  %141 = vst.msk [vmem:[%s5 + $0x18] sm:$0xf] %vm134, %v126
  // Predicated region
  $region22: #{embedding_net_forward.8} parent=0 // pred_check
    _
  $region23: #{embedding_net_forward.8} parent=0 // pred_check_branch
    %143 = sbr.rel (0) target = $region25
  $region24: #{embedding_net_forward.8} parent=0 // pred_region
    _
  $region25: #{embedding_net_forward.8} parent=0 // pred_fallthru
    _
  // Predicated region
  $region26: #{embedding_net_forward.8} parent=0 // pred_check
    _
  $region27: #{embedding_net_forward.8} parent=0 // pred_check_branch
    %145 = sbr.rel (0) target = $region29
  $region28: #{embedding_net_forward.8} parent=0 // pred_region
    _
  $region29: #{embedding_net_forward.8} parent=0 // pred_fallthru
    _

// kernel: embedding_net_forward.7
$region0: #{embedding_net_forward.7}
  #allocation0 [shape = 'u32[]', space=smem, size = 0x4, offset = 0x4, fixed_abs, tag = 'smem constant byte address 0x4 - core index']
  #allocation1 [shape = 'u32[144,128]{1,0:T(1,128)}', space=vmem, size = 0x12000, scoped, tag = 'internal scratch']
  %s0 = inlined_call_operand.vmem [shape: bf16[56,256], index: 0, kind: input, shape index: {}]
  %s1 = inlined_call_operand.vmem [shape: bf16[256,32], index: 1, kind: input, shape index: {}]
  %s2 = inlined_call_operand.vmem [shape: bf16[56,32], index: 2, kind: output, shape index: {0}]
  %s3 = inlined_call_operand.vmem [shape: f32[1,32], index: 3, kind: output, shape index: {1}]
  %s4 = inlined_call_operand.vmem [shape: f32[1,32], index: 4, kind: output, shape index: {2}]
  %5 = xla_tuple %s2, %s3, %s4
  %s6 = sld [smem:[#allocation0]]
  $region38: #{embedding_net_forward.7} parent=0
    _
  %s8 = ssub.s32 1, %s6
  %s9 = scalar_select 0, %s8, %s6
  // Predicated region
  $region2: #{embedding_net_forward.7} parent=0 // pred_check
    _
  $region3: #{embedding_net_forward.7} parent=0 // pred_check_branch
    %11 = sbr.rel (0) target = $region5
  $region4: #{embedding_net_forward.7} parent=0 // pred_region
    _
  $region5: #{embedding_net_forward.7} parent=0 // pred_fallthru
    _
  // Predicated region
  $region6: #{embedding_net_forward.7} parent=0 // pred_check
    _
  $region7: #{embedding_net_forward.7} parent=0 // pred_check_branch
    %13 = sbr.rel (0) target = $region9
  $region8: #{embedding_net_forward.7} parent=0 // pred_region
    _
  $region9: #{embedding_net_forward.7} parent=0 // pred_fallthru
    _
  %p15 = scmp.eq.s32.totalorder 0, 0
  // Predicated region
  $region10: #{embedding_net_forward.7} parent=0 // pred_check
    %p16 = pneg %p15
  $region11: #{embedding_net_forward.7} parent=0 // pred_check_branch
    %18 = sbr.rel (%p16) target = $region13
  $region12: #{embedding_net_forward.7} parent=0 // pred_region
    %vm19 = vcmask 253952
    %20 = vst.msk [vmem:[%s3] sm:$0x1] %vm19, 0.0
    %21 = vst.msk [vmem:[%s4] sm:$0x1] %vm19, 0.0
  $region13: #{embedding_net_forward.7} parent=0 // pred_fallthru
    _
  %v22 = vld [vmem:[%s0] sm:$0xff]
  %v23 = vld [vmem:[%s0 + $0x8] sm:$0xff]
  %v24 = vld [vmem:[%s0 + $0x10] sm:$0xff]
  %v25 = vld [vmem:[%s0 + $0x18] sm:$0xff]
  %v26 = vld [vmem:[%s0 + $0x20] sm:$0xff]
  %v27 = vld [vmem:[%s0 + $0x28] sm:$0xff]
  %v28 = vld [vmem:[%s0 + $0x30] sm:$0xff]
  %v29 = vld [vmem:[%s1] sm:$0xf]
  %v30 = vld [vmem:[%s1 + $0x4] sm:$0xf]
  %v31 = vld [vmem:[%s1 + $0x8] sm:$0xf]
  %v32 = vld [vmem:[%s1 + $0xc] sm:$0xf]
  %v33 = vld [vmem:[%s1 + $0x10] sm:$0xf]
  %v34 = vld [vmem:[%s1 + $0x14] sm:$0xf]
  %v35 = vld [vmem:[%s1 + $0x18] sm:$0xf]
  %v36 = vld [vmem:[%s1 + $0x1c] sm:$0xf]
  %v37 = vld [vmem:[%s1 + $0x20] sm:$0xf]
  %v38 = vld [vmem:[%s1 + $0x24] sm:$0xf]
  %v39 = vld [vmem:[%s1 + $0x28] sm:$0xf]
  %v40 = vld [vmem:[%s1 + $0x2c] sm:$0xf]
  %v41 = vld [vmem:[%s1 + $0x30] sm:$0xf]
  %v42 = vld [vmem:[%s1 + $0x34] sm:$0xf]
  %v43 = vld [vmem:[%s1 + $0x38] sm:$0xf]
  %v44 = vld [vmem:[%s1 + $0x3c] sm:$0xf]
  %v45 = vld [vmem:[%s1 + $0x40] sm:$0xf]
  %v46 = vld [vmem:[%s1 + $0x44] sm:$0xf]
  %v47 = vld [vmem:[%s1 + $0x48] sm:$0xf]
  %v48 = vld [vmem:[%s1 + $0x4c] sm:$0xf]
  %v49 = vld [vmem:[%s1 + $0x50] sm:$0xf]
  %v50 = vld [vmem:[%s1 + $0x54] sm:$0xf]
  %v51 = vld [vmem:[%s1 + $0x58] sm:$0xf]
  %v52 = vld [vmem:[%s1 + $0x5c] sm:$0xf]
  %v53 = vld [vmem:[%s1 + $0x60] sm:$0xf]
  %v54 = vld [vmem:[%s1 + $0x64] sm:$0xf]
  %v55 = vld [vmem:[%s1 + $0x68] sm:$0xf]
  %v56 = vld [vmem:[%s1 + $0x6c] sm:$0xf]
  %v57 = vld [vmem:[%s1 + $0x70] sm:$0xf]
  %v58 = vld [vmem:[%s1 + $0x74] sm:$0xf]
  %v59 = vld [vmem:[%s1 + $0x78] sm:$0xf]
  %v60 = vld [vmem:[%s1 + $0x7c] sm:$0xf]
  %v68 = vunpack.c.l.b16 %v22
  %v69 = vunpack.c.h.b16 %v22
  %v70 = vunpack.c.l.b16 %v23
  %v71 = vunpack.c.h.b16 %v23
  %v72 = vunpack.c.l.b16 %v24
  %v73 = vunpack.c.h.b16 %v24
  %v74 = vunpack.c.l.b16 %v25
  %v75 = vunpack.c.h.b16 %v25
  %v76 = vunpack.c.l.b16 %v26
  %v77 = vunpack.c.h.b16 %v26
  %v78 = vunpack.c.l.b16 %v27
  %v79 = vunpack.c.h.b16 %v27
  %v80 = vunpack.c.l.b16 %v28
  %v81 = vunpack.c.h.b16 %v28
  %v82 = vpack.c.b16 %v70, %v68
  %v83 = vpack.c.b16 %v71, %v69
  %v84 = vpack.c.b16 %v74, %v72
  %v85 = vpack.c.b16 %v75, %v73
  %v86 = vpack.c.b16 %v78, %v76
  %v87 = vpack.c.b16 %v79, %v77
  %v88 = vpack.c.b16 %v80, %v80
  %v89 = vpack.c.b16 %v81, %v81
  %v130 = vunpack.c.l.b16 %v29
  %v131 = vunpack.c.l.b16 %v30
  %v132 = vunpack.c.l.b16 %v31
  %v133 = vunpack.c.l.b16 %v32
  %v134 = vunpack.c.l.b16 %v33
  %v135 = vunpack.c.l.b16 %v34
  %v136 = vunpack.c.l.b16 %v35
  %v137 = vunpack.c.l.b16 %v36
  %v138 = vunpack.c.l.b16 %v37
  %v139 = vunpack.c.l.b16 %v38
  %v140 = vunpack.c.l.b16 %v39
  %v141 = vunpack.c.l.b16 %v40
  %v142 = vunpack.c.l.b16 %v41
  %v143 = vunpack.c.l.b16 %v42
  %v144 = vunpack.c.l.b16 %v43
  %v145 = vunpack.c.l.b16 %v44
  %v146 = vunpack.c.l.b16 %v45
  %v147 = vunpack.c.l.b16 %v46
  %v148 = vunpack.c.l.b16 %v47
  %v149 = vunpack.c.l.b16 %v48
  %v150 = vunpack.c.l.b16 %v49
  %v151 = vunpack.c.l.b16 %v50
  %v152 = vunpack.c.l.b16 %v51
  %v153 = vunpack.c.l.b16 %v52
  %v154 = vunpack.c.l.b16 %v53
  %v155 = vunpack.c.l.b16 %v54
  %v156 = vunpack.c.l.b16 %v55
  %v157 = vunpack.c.l.b16 %v56
  %v158 = vunpack.c.l.b16 %v57
  %v159 = vunpack.c.l.b16 %v58
  %v160 = vunpack.c.l.b16 %v59
  %v161 = vunpack.c.l.b16 %v60
  %v162 = vpack.c.b16 %v131, %v130
  %v163 = vpack.c.b16 %v133, %v132
  %v164 = vpack.c.b16 %v135, %v134
  %v165 = vpack.c.b16 %v137, %v136
  %v166 = vpack.c.b16 %v139, %v138
  %v167 = vpack.c.b16 %v141, %v140
  %v168 = vpack.c.b16 %v143, %v142
  %v169 = vpack.c.b16 %v145, %v144
  %v170 = vpack.c.b16 %v147, %v146
  %v171 = vpack.c.b16 %v149, %v148
  %v172 = vpack.c.b16 %v151, %v150
  %v173 = vpack.c.b16 %v153, %v152
  %v174 = vpack.c.b16 %v155, %v154
  %v175 = vpack.c.b16 %v157, %v156
  %v176 = vpack.c.b16 %v159, %v158
  %v177 = vpack.c.b16 %v161, %v160
  %194 = vmatprep.subr.bf16.mxu0 0
  %195 = vmatpush1.bf16.msra.mxu0 %v162
  %196 = vmatprep.subr.bf16.mxu0 0
  %197 = vmatpush1.bf16.msra.mxu0 %v163
  %198 = vmatprep.subr.bf16.mxu0 0
  %199 = vmatpush1.bf16.msra.mxu0 %v164
  %200 = vmatprep.subr.bf16.mxu0 0
  %201 = vmatpush1.bf16.msra.mxu0 %v165
  %202 = vmatprep.subr.bf16.mxu0 0
  %203 = vmatpush1.bf16.msra.mxu0 %v166
  %204 = vmatprep.subr.bf16.mxu0 0
  %205 = vmatpush1.bf16.msra.mxu0 %v167
  %206 = vmatprep.subr.bf16.mxu0 0
  %207 = vmatpush1.bf16.msra.mxu0 %v168
  %208 = vmatprep.subr.bf16.mxu0 0
  %209 = vmatpush1.bf16.msra.mxu0 %v169
  %210 = vmatprep.subr.bf16.mxu0 0
  %211 = vmatpush1.bf16.msra.mxu0 %v170
  %212 = vmatprep.subr.bf16.mxu0 0
  %213 = vmatpush1.bf16.msra.mxu0 %v171
  %214 = vmatprep.subr.bf16.mxu0 0
  %215 = vmatpush1.bf16.msra.mxu0 %v172
  %216 = vmatprep.subr.bf16.mxu0 0
  %217 = vmatpush1.bf16.msra.mxu0 %v173
  %218 = vmatprep.subr.bf16.mxu0 0
  %219 = vmatpush1.bf16.msra.mxu0 %v174
  %220 = vmatprep.subr.bf16.mxu0 0
  %221 = vmatpush1.bf16.msra.mxu0 %v175
  %222 = vmatprep.subr.bf16.mxu0 0
  %223 = vmatpush1.bf16.msra.mxu0 %v176
  %224 = vmatprep.subr.bf16.mxu0 0
  %225 = vmatpush1.bf16.msra.mxu0 %v177
  %226 = vmatprep.mubr.bf16.mxu0 %v83
  %227 = vmatmul.mubr.bf16.gmra.mrb[0].mxu0 %v82
  %v228 = vpop.f32.mrb[0].mxu0
  %v229 = vadd.f32 0.0, %v228
  %v230 = vpop.f32.mrb[0].mxu0
  %v231 = vpop.f32.mrb[0].mxu0
  %v232 = vadd.f32 0.0, %v231
  %v233 = vpop.f32.mrb[0].mxu0
  %234 = vmatprep.mubr.bf16.mxu0 %v85
  %235 = vmatmul.mubr.bf16.gmra.mrb[0].mxu0 %v84
  %v236 = vpop.f32.mrb[0].mxu0
  %v237 = vadd.f32 0.0, %v236
  %v238 = vpop.f32.mrb[0].mxu0
  %v239 = vpop.f32.mrb[0].mxu0
  %v240 = vadd.f32 0.0, %v239
  %v241 = vpop.f32.mrb[0].mxu0
  %242 = vmatprep.mubr.bf16.mxu0 %v87
  %243 = vmatmul.mubr.bf16.gmra.mrb[0].mxu0 %v86
  %v244 = vpop.f32.mrb[0].mxu0
  %v245 = vadd.f32 0.0, %v244
  %v246 = vpop.f32.mrb[0].mxu0
  %v247 = vpop.f32.mrb[0].mxu0
  %v248 = vadd.f32 0.0, %v247
  %v249 = vpop.f32.mrb[0].mxu0
  %250 = vmatprep.mubr.bf16.mxu0 %v89
  %251 = vmatmul.mubr.bf16.gmra.mrb[0].mxu0 %v88
  %v252 = vpop.f32.mrb[0].mxu0
  %v253 = vadd.f32 0.0, %v252
  %v254 = vpop.f32.mrb[0].mxu0
  %v255 = vpop.f32.mrb[0].mxu0
  %v256 = vpop.f32.mrb[0].mxu0
  %257 = vdwg.mxu0
  %v258 = vpack.c.bf16 %v232, %v229
  %v259 = vpack.c.bf16 %v240, %v237
  %v260 = vpack.c.bf16 %v248, %v245
  %v261 = vpack.c.bf16 %v253, %v253
  %v266 = vunpack.c.l.b16 %v258
  %v267 = vunpack.c.h.b16 %v258
  %v268 = vunpack.c.l.b16 %v259
  %v269 = vunpack.c.h.b16 %v259
  %v270 = vunpack.c.l.b16 %v260
  %v271 = vunpack.c.h.b16 %v260
  %v272 = vunpack.c.l.b16 %v261
  %v273 = vpack.c.b16 %v266, %v266
  %v274 = vpack.c.b16 %v267, %v267
  %v275 = vpack.c.b16 %v268, %v268
  %v276 = vpack.c.b16 %v269, %v269
  %v277 = vpack.c.b16 %v270, %v270
  %v278 = vpack.c.b16 %v271, %v271
  %v279 = vpack.c.b16 %v272, %v272
  %vm287 = vcmask 257024
  %288 = vst.msk [vmem:[%s2] sm:$0xf] %vm287, %v273
  %289 = vst.msk [vmem:[%s2 + $0x4] sm:$0xf] %vm287, %v274
  %290 = vst.msk [vmem:[%s2 + $0x8] sm:$0xf] %vm287, %v275
  %291 = vst.msk [vmem:[%s2 + $0xc] sm:$0xf] %vm287, %v276
  %292 = vst.msk [vmem:[%s2 + $0x10] sm:$0xf] %vm287, %v277
  %293 = vst.msk [vmem:[%s2 + $0x14] sm:$0xf] %vm287, %v278
  %294 = vst.msk [vmem:[%s2 + $0x18] sm:$0xf] %vm287, %v279
  %v295 = vld [vmem:[%s3] sm:$0x1]
  %vm296 = vcmask 261120
  %v297 = vsel %vm296, %v229, 0.0
  %v298 = vsel %vm296, %v232, 0.0
  %v299 = vadd.f32 %v297, %v298
  %v300 = vsel %vm296, %v237, 0.0
  %v301 = vadd.f32 %v299, %v300
  %v302 = vsel %vm296, %v240, 0.0
  %v303 = vadd.f32 %v301, %v302
  %v304 = vsel %vm296, %v245, 0.0
  %v305 = vadd.f32 %v303, %v304
  %v306 = vsel %vm296, %v248, 0.0
  %v307 = vadd.f32 %v305, %v306
  %v308 = vsel %vm296, %v253, 0.0
  %v309 = vadd.f32 %v307, %v308
  %v310 = vrot.slane %v309, 4
  %v311 = vadd.f32 %v309, %v310
  %v312 = vrot.slane %v311, 2
  %v313 = vadd.f32 %v311, %v312
  %v314 = vrot.slane %v313, 1
  %v315 = vadd.f32 %v313, %v314
  %v316 = vadd.f32 %v295, %v315
  %vm317 = vcmask 253952
  %318 = vst.msk [vmem:[%s3] sm:$0x1] %vm317, %v316
  %v319 = vld [vmem:[%s4] sm:$0x1]
  %v320 = vmul.f32 %v229, %v229
  %v321 = vmul.f32 %v232, %v232
  %v322 = vmul.f32 %v237, %v237
  %v323 = vmul.f32 %v240, %v240
  %v324 = vmul.f32 %v245, %v245
  %v325 = vmul.f32 %v248, %v248
  %v326 = vmul.f32 %v253, %v253
  %v327 = vsel %vm296, %v320, 0.0
  %v328 = vsel %vm296, %v321, 0.0
  %v329 = vadd.f32 %v327, %v328
  %v330 = vsel %vm296, %v322, 0.0
  %v331 = vadd.f32 %v329, %v330
  %v332 = vsel %vm296, %v323, 0.0
  %v333 = vadd.f32 %v331, %v332
  %v334 = vsel %vm296, %v324, 0.0
  %v335 = vadd.f32 %v333, %v334
  %v336 = vsel %vm296, %v325, 0.0
  %v337 = vadd.f32 %v335, %v336
  %v338 = vsel %vm296, %v326, 0.0
  %v339 = vadd.f32 %v337, %v338
  %v340 = vrot.slane %v339, 4
  %v341 = vadd.f32 %v339, %v340
  %v342 = vrot.slane %v341, 2
  %v343 = vadd.f32 %v341, %v342
  %v344 = vrot.slane %v343, 1
  %v345 = vadd.f32 %v343, %v344
  %v346 = vadd.f32 %v319, %v345
  %347 = vst.msk [vmem:[%s4] sm:$0x1] %vm317, %v346
  // Predicated region
  $region14: #{embedding_net_forward.7} parent=0 // pred_check
    _
  $region15: #{embedding_net_forward.7} parent=0 // pred_check_branch
    %349 = sbr.rel (0) target = $region17
  $region16: #{embedding_net_forward.7} parent=0 // pred_region
    _
  $region17: #{embedding_net_forward.7} parent=0 // pred_fallthru
    _
  // Predicated region
  $region18: #{embedding_net_forward.7} parent=0 // pred_check
    _
  $region19: #{embedding_net_forward.7} parent=0 // pred_check_branch
    %351 = sbr.rel (0) target = $region21
  $region20: #{embedding_net_forward.7} parent=0 // pred_region
    _
  $region21: #{embedding_net_forward.7} parent=0 // pred_fallthru
    _
  // Predicated region
  $region22: #{embedding_net_forward.7} parent=0 // pred_check
    _
  $region23: #{embedding_net_forward.7} parent=0 // pred_check_branch
    %353 = sbr.rel (0) target = $region25
  $region24: #{embedding_net_forward.7} parent=0 // pred_region
    _
  $region25: #{embedding_net_forward.7} parent=0 // pred_fallthru
    _
  // Predicated region
  $region26: #{embedding_net_forward.7} parent=0 // pred_check
    _
  $region27: #{embedding_net_forward.7} parent=0 // pred_check_branch
    %355 = sbr.rel (0) target = $region29
  $region28: #{embedding_net_forward.7} parent=0 // pred_region
    _
  $region29: #{embedding_net_forward.7} parent=0 // pred_fallthru
    _
  // Predicated region
  $region30: #{embedding_net_forward.7} parent=0 // pred_check
    _
  $region31: #{embedding_net_forward.7} parent=0 // pred_check_branch
    %357 = sbr.rel (0) target = $region33
  $region32: #{embedding_net_forward.7} parent=0 // pred_region
    _
  $region33: #{embedding_net_forward.7} parent=0 // pred_fallthru
    _
  // Predicated region
  $region34: #{embedding_net_forward.7} parent=0 // pred_check
    _
  $region35: #{embedding_net_forward.7} parent=0 // pred_check_branch
    %359 = sbr.rel (0) target = $region37
  $region36: #{embedding_net_forward.7} parent=0 // pred_region
    _
  $region37: #{embedding_net_forward.7} parent=0 // pred_fallthru
    _

// kernel: embedding_net_forward.9
$region0: #{embedding_net_forward.9}
  #allocation0 [shape = 'u32[]', space=smem, size = 0x4, offset = 0x4, fixed_abs, tag = 'smem constant byte address 0x4 - core index']
  #allocation1 [shape = 'u32[144,128]{1,0:T(1,128)}', space=vmem, size = 0x12000, scoped, tag = 'internal scratch']
  %s0 = inlined_call_operand.vmem [shape: bf16[8,800], index: 0, kind: input, shape index: {}]
  %s1 = inlined_call_operand.vmem [shape: bf16[800,32], index: 1, kind: input, shape index: {}]
  %s2 = inlined_call_operand.vmem [shape: f32[1,32], index: 2, kind: input, shape index: {}]
  %s3 = inlined_call_operand.vmem [shape: bf16[32,32], index: 3, kind: input, shape index: {}]
  %s4 = inlined_call_operand.vmem [shape: f32[1,32], index: 4, kind: input, shape index: {}]
  %s5 = inlined_call_operand.vmem [shape: bf16[32,2], index: 5, kind: input, shape index: {}]
  %s6 = inlined_call_operand.vmem [shape: f32[1,2], index: 6, kind: input, shape index: {}]
  %s7 = inlined_call_operand.vmem [shape: f32[8,2], index: 7, kind: output, shape index: {}]
  %s8 = sld [smem:[#allocation0]]
  $region38: #{embedding_net_forward.9} parent=0
    _
  %s10 = ssub.s32 1, %s8
  %s11 = scalar_select 0, %s10, %s8
  // Predicated region
  $region2: #{embedding_net_forward.9} parent=0 // pred_check
    _
  $region3: #{embedding_net_forward.9} parent=0 // pred_check_branch
    %13 = sbr.rel (0) target = $region5
  $region4: #{embedding_net_forward.9} parent=0 // pred_region
    _
  $region5: #{embedding_net_forward.9} parent=0 // pred_fallthru
    _
  // Predicated region
  $region6: #{embedding_net_forward.9} parent=0 // pred_check
    _
  $region7: #{embedding_net_forward.9} parent=0 // pred_check_branch
    %15 = sbr.rel (0) target = $region9
  $region8: #{embedding_net_forward.9} parent=0 // pred_region
    _
  $region9: #{embedding_net_forward.9} parent=0 // pred_fallthru
    _
  // Predicated region
  $region10: #{embedding_net_forward.9} parent=0 // pred_check
    _
  $region11: #{embedding_net_forward.9} parent=0 // pred_check_branch
    %17 = sbr.rel (0) target = $region13
  $region12: #{embedding_net_forward.9} parent=0 // pred_region
    _
  $region13: #{embedding_net_forward.9} parent=0 // pred_fallthru
    _
  // Predicated region
  $region14: #{embedding_net_forward.9} parent=0 // pred_check
    _
  $region15: #{embedding_net_forward.9} parent=0 // pred_check_branch
    %19 = sbr.rel (0) target = $region17
  $region16: #{embedding_net_forward.9} parent=0 // pred_region
    _
  $region17: #{embedding_net_forward.9} parent=0 // pred_fallthru
    _
  // Predicated region
  $region18: #{embedding_net_forward.9} parent=0 // pred_check
    _
  $region19: #{embedding_net_forward.9} parent=0 // pred_check_branch
    %21 = sbr.rel (0) target = $region21
  $region20: #{embedding_net_forward.9} parent=0 // pred_region
    _
  $region21: #{embedding_net_forward.9} parent=0 // pred_fallthru
    _
  // Predicated region
  $region22: #{embedding_net_forward.9} parent=0 // pred_check
    _
  $region23: #{embedding_net_forward.9} parent=0 // pred_check_branch
    %23 = sbr.rel (0) target = $region25
  $region24: #{embedding_net_forward.9} parent=0 // pred_region
    _
  $region25: #{embedding_net_forward.9} parent=0 // pred_fallthru
    _
  // Predicated region
  $region26: #{embedding_net_forward.9} parent=0 // pred_check
    _
  $region27: #{embedding_net_forward.9} parent=0 // pred_check_branch
    %25 = sbr.rel (0) target = $region29
  $region28: #{embedding_net_forward.9} parent=0 // pred_region
    _
  $region29: #{embedding_net_forward.9} parent=0 // pred_fallthru
    _
  %v27 = vld [vmem:[%s0] sm:$0xff]
  %v28 = vld [vmem:[%s0 + $0x8] sm:$0xff]
  %v29 = vld [vmem:[%s0 + $0x10] sm:$0xff]
  %v30 = vld [vmem:[%s0 + $0x18] sm:$0xf]
  %v31 = vld [vmem:[%s1] sm:$0xf]
  %v32 = vld [vmem:[%s1 + $0x4] sm:$0xf]
  %v33 = vld [vmem:[%s1 + $0x8] sm:$0xf]
  %v34 = vld [vmem:[%s1 + $0xc] sm:$0xf]
  %v35 = vld [vmem:[%s1 + $0x10] sm:$0xf]
  %v36 = vld [vmem:[%s1 + $0x14] sm:$0xf]
  %v37 = vld [vmem:[%s1 + $0x18] sm:$0xf]
  %v38 = vld [vmem:[%s1 + $0x1c] sm:$0xf]
  %v39 = vld [vmem:[%s1 + $0x20] sm:$0xf]
  %v40 = vld [vmem:[%s1 + $0x24] sm:$0xf]
  %v41 = vld [vmem:[%s1 + $0x28] sm:$0xf]
  %v42 = vld [vmem:[%s1 + $0x2c] sm:$0xf]
  %v43 = vld [vmem:[%s1 + $0x30] sm:$0xf]
  %v44 = vld [vmem:[%s1 + $0x34] sm:$0xf]
  %v45 = vld [vmem:[%s1 + $0x38] sm:$0xf]
  %v46 = vld [vmem:[%s1 + $0x3c] sm:$0xf]
  %v47 = vld [vmem:[%s1 + $0x40] sm:$0xf]
  %v48 = vld [vmem:[%s1 + $0x44] sm:$0xf]
  %v49 = vld [vmem:[%s1 + $0x48] sm:$0xf]
  %v50 = vld [vmem:[%s1 + $0x4c] sm:$0xf]
  %v51 = vld [vmem:[%s1 + $0x50] sm:$0xf]
  %v52 = vld [vmem:[%s1 + $0x54] sm:$0xf]
  %v53 = vld [vmem:[%s1 + $0x58] sm:$0xf]
  %v54 = vld [vmem:[%s1 + $0x5c] sm:$0xf]
  %v55 = vld [vmem:[%s1 + $0x60] sm:$0xf]
  %v56 = vld [vmem:[%s1 + $0x64] sm:$0xf]
  %v57 = vld [vmem:[%s1 + $0x68] sm:$0xf]
  %v58 = vld [vmem:[%s1 + $0x6c] sm:$0xf]
  %v59 = vld [vmem:[%s1 + $0x70] sm:$0xf]
  %v60 = vld [vmem:[%s1 + $0x74] sm:$0xf]
  %v61 = vld [vmem:[%s1 + $0x78] sm:$0xf]
  %v62 = vld [vmem:[%s1 + $0x7c] sm:$0xf]
  %v63 = vld [vmem:[%s1 + $0x80] sm:$0xf]
  %v64 = vld [vmem:[%s1 + $0x84] sm:$0xf]
  %v65 = vld [vmem:[%s1 + $0x88] sm:$0xf]
  %v66 = vld [vmem:[%s1 + $0x8c] sm:$0xf]
  %v67 = vld [vmem:[%s1 + $0x90] sm:$0xf]
  %v68 = vld [vmem:[%s1 + $0x94] sm:$0xf]
  %v69 = vld [vmem:[%s1 + $0x98] sm:$0xf]
  %v70 = vld [vmem:[%s1 + $0x9c] sm:$0xf]
  %v71 = vld [vmem:[%s1 + $0xa0] sm:$0xf]
  %v72 = vld [vmem:[%s1 + $0xa4] sm:$0xf]
  %v73 = vld [vmem:[%s1 + $0xa8] sm:$0xf]
  %v74 = vld [vmem:[%s1 + $0xac] sm:$0xf]
  %v75 = vld [vmem:[%s1 + $0xb0] sm:$0xf]
  %v76 = vld [vmem:[%s1 + $0xb4] sm:$0xf]
  %v77 = vld [vmem:[%s1 + $0xb8] sm:$0xf]
  %v78 = vld [vmem:[%s1 + $0xbc] sm:$0xf]
  %v79 = vld [vmem:[%s1 + $0xc0] sm:$0xf]
  %v80 = vld [vmem:[%s1 + $0xc4] sm:$0xf]
  %v81 = vld [vmem:[%s1 + $0xc8] sm:$0xf]
  %v82 = vld [vmem:[%s1 + $0xcc] sm:$0xf]
  %v83 = vld [vmem:[%s1 + $0xd0] sm:$0xf]
  %v84 = vld [vmem:[%s1 + $0xd4] sm:$0xf]
  %v85 = vld [vmem:[%s1 + $0xd8] sm:$0xf]
  %v86 = vld [vmem:[%s1 + $0xdc] sm:$0xf]
  %v87 = vld [vmem:[%s1 + $0xe0] sm:$0xf]
  %v88 = vld [vmem:[%s1 + $0xe4] sm:$0xf]
  %v89 = vld [vmem:[%s1 + $0xe8] sm:$0xf]
  %v90 = vld [vmem:[%s1 + $0xec] sm:$0xf]
  %v91 = vld [vmem:[%s1 + $0xf0] sm:$0xf]
  %v92 = vld [vmem:[%s1 + $0xf4] sm:$0xf]
  %v93 = vld [vmem:[%s1 + $0xf8] sm:$0xf]
  %v94 = vld [vmem:[%s1 + $0xfc] sm:$0xf]
  %v95 = vld [vmem:[%s1 + $0x100] sm:$0xf]
  %v96 = vld [vmem:[%s1 + $0x104] sm:$0xf]
  %v97 = vld [vmem:[%s1 + $0x108] sm:$0xf]
  %v98 = vld [vmem:[%s1 + $0x10c] sm:$0xf]
  %v99 = vld [vmem:[%s1 + $0x110] sm:$0xf]
  %v100 = vld [vmem:[%s1 + $0x114] sm:$0xf]
  %v101 = vld [vmem:[%s1 + $0x118] sm:$0xf]
  %v102 = vld [vmem:[%s1 + $0x11c] sm:$0xf]
  %v103 = vld [vmem:[%s1 + $0x120] sm:$0xf]
  %v104 = vld [vmem:[%s1 + $0x124] sm:$0xf]
  %v105 = vld [vmem:[%s1 + $0x128] sm:$0xf]
  %v106 = vld [vmem:[%s1 + $0x12c] sm:$0xf]
  %v107 = vld [vmem:[%s1 + $0x130] sm:$0xf]
  %v108 = vld [vmem:[%s1 + $0x134] sm:$0xf]
  %v109 = vld [vmem:[%s1 + $0x138] sm:$0xf]
  %v110 = vld [vmem:[%s1 + $0x13c] sm:$0xf]
  %v111 = vld [vmem:[%s1 + $0x140] sm:$0xf]
  %v112 = vld [vmem:[%s1 + $0x144] sm:$0xf]
  %v113 = vld [vmem:[%s1 + $0x148] sm:$0xf]
  %v114 = vld [vmem:[%s1 + $0x14c] sm:$0xf]
  %v115 = vld [vmem:[%s1 + $0x150] sm:$0xf]
  %v116 = vld [vmem:[%s1 + $0x154] sm:$0xf]
  %v117 = vld [vmem:[%s1 + $0x158] sm:$0xf]
  %v118 = vld [vmem:[%s1 + $0x15c] sm:$0xf]
  %v119 = vld [vmem:[%s1 + $0x160] sm:$0xf]
  %v120 = vld [vmem:[%s1 + $0x164] sm:$0xf]
  %v121 = vld [vmem:[%s1 + $0x168] sm:$0xf]
  %v122 = vld [vmem:[%s1 + $0x16c] sm:$0xf]
  %v123 = vld [vmem:[%s1 + $0x170] sm:$0xf]
  %v124 = vld [vmem:[%s1 + $0x174] sm:$0xf]
  %v125 = vld [vmem:[%s1 + $0x178] sm:$0xf]
  %v126 = vld [vmem:[%s1 + $0x17c] sm:$0xf]
  %v127 = vld [vmem:[%s1 + $0x180] sm:$0xf]
  %v128 = vld [vmem:[%s1 + $0x184] sm:$0xf]
  %v129 = vld [vmem:[%s1 + $0x188] sm:$0xf]
  %v130 = vld [vmem:[%s1 + $0x18c] sm:$0xf]
  %v131 = vld [vmem:[%s2] sm:$0x1]
  %v133 = vlaneseq
  %v134 = vshrl.u32 %v133, 7
  %v135 = vsub.s32 0, %v134
  %v136 = vrot.slane %v131, %v135
  %v142 = vunpack.c.l.b16 %v27
  %v143 = vunpack.c.h.b16 %v27
  %v144 = vunpack.c.l.b16 %v28
  %v145 = vunpack.c.h.b16 %v28
  %v146 = vunpack.c.l.b16 %v29
  %v147 = vunpack.c.h.b16 %v29
  %v148 = vunpack.c.l.b16 %v30
  %v149 = vpack.c.b16 %v142, %v142
  %v150 = vpack.c.b16 %v143, %v143
  %v151 = vpack.c.b16 %v144, %v144
  %v152 = vpack.c.b16 %v145, %v145
  %v153 = vpack.c.b16 %v146, %v146
  %v154 = vpack.c.b16 %v147, %v147
  %v155 = vpack.c.b16 %v148, %v148
  %v262 = vunpack.c.l.b16 %v31
  %v263 = vunpack.c.l.b16 %v32
  %v264 = vunpack.c.l.b16 %v33
  %v265 = vunpack.c.l.b16 %v34
  %v266 = vunpack.c.l.b16 %v35
  %v267 = vunpack.c.l.b16 %v36
  %v268 = vunpack.c.l.b16 %v37
  %v269 = vunpack.c.l.b16 %v38
  %v270 = vunpack.c.l.b16 %v39
  %v271 = vunpack.c.l.b16 %v40
  %v272 = vunpack.c.l.b16 %v41
  %v273 = vunpack.c.l.b16 %v42
  %v274 = vunpack.c.l.b16 %v43
  %v275 = vunpack.c.l.b16 %v44
  %v276 = vunpack.c.l.b16 %v45
  %v277 = vunpack.c.l.b16 %v46
  %v278 = vunpack.c.l.b16 %v47
  %v279 = vunpack.c.l.b16 %v48
  %v280 = vunpack.c.l.b16 %v49
  %v281 = vunpack.c.l.b16 %v50
  %v282 = vunpack.c.l.b16 %v51
  %v283 = vunpack.c.l.b16 %v52
  %v284 = vunpack.c.l.b16 %v53
  %v285 = vunpack.c.l.b16 %v54
  %v286 = vunpack.c.l.b16 %v55
  %v287 = vunpack.c.l.b16 %v56
  %v288 = vunpack.c.l.b16 %v57
  %v289 = vunpack.c.l.b16 %v58
  %v290 = vunpack.c.l.b16 %v59
  %v291 = vunpack.c.l.b16 %v60
  %v292 = vunpack.c.l.b16 %v61
  %v293 = vunpack.c.l.b16 %v62
  %v294 = vunpack.c.l.b16 %v63
  %v295 = vunpack.c.l.b16 %v64
  %v296 = vunpack.c.l.b16 %v65
  %v297 = vunpack.c.l.b16 %v66
  %v298 = vunpack.c.l.b16 %v67
  %v299 = vunpack.c.l.b16 %v68
  %v300 = vunpack.c.l.b16 %v69
  %v301 = vunpack.c.l.b16 %v70
  %v302 = vunpack.c.l.b16 %v71
  %v303 = vunpack.c.l.b16 %v72
  %v304 = vunpack.c.l.b16 %v73
  %v305 = vunpack.c.l.b16 %v74
  %v306 = vunpack.c.l.b16 %v75
  %v307 = vunpack.c.l.b16 %v76
  %v308 = vunpack.c.l.b16 %v77
  %v309 = vunpack.c.l.b16 %v78
  %v310 = vunpack.c.l.b16 %v79
  %v311 = vunpack.c.l.b16 %v80
  %v312 = vunpack.c.l.b16 %v81
  %v313 = vunpack.c.l.b16 %v82
  %v314 = vunpack.c.l.b16 %v83
  %v315 = vunpack.c.l.b16 %v84
  %v316 = vunpack.c.l.b16 %v85
  %v317 = vunpack.c.l.b16 %v86
  %v318 = vunpack.c.l.b16 %v87
  %v319 = vunpack.c.l.b16 %v88
  %v320 = vunpack.c.l.b16 %v89
  %v321 = vunpack.c.l.b16 %v90
  %v322 = vunpack.c.l.b16 %v91
  %v323 = vunpack.c.l.b16 %v92
  %v324 = vunpack.c.l.b16 %v93
  %v325 = vunpack.c.l.b16 %v94
  %v326 = vunpack.c.l.b16 %v95
  %v327 = vunpack.c.l.b16 %v96
  %v328 = vunpack.c.l.b16 %v97
  %v329 = vunpack.c.l.b16 %v98
  %v330 = vunpack.c.l.b16 %v99
  %v331 = vunpack.c.l.b16 %v100
  %v332 = vunpack.c.l.b16 %v101
  %v333 = vunpack.c.l.b16 %v102
  %v334 = vunpack.c.l.b16 %v103
  %v335 = vunpack.c.l.b16 %v104
  %v336 = vunpack.c.l.b16 %v105
  %v337 = vunpack.c.l.b16 %v106
  %v338 = vunpack.c.l.b16 %v107
  %v339 = vunpack.c.l.b16 %v108
  %v340 = vunpack.c.l.b16 %v109
  %v341 = vunpack.c.l.b16 %v110
  %v342 = vunpack.c.l.b16 %v111
  %v343 = vunpack.c.l.b16 %v112
  %v344 = vunpack.c.l.b16 %v113
  %v345 = vunpack.c.l.b16 %v114
  %v346 = vunpack.c.l.b16 %v115
  %v347 = vunpack.c.l.b16 %v116
  %v348 = vunpack.c.l.b16 %v117
  %v349 = vunpack.c.l.b16 %v118
  %v350 = vunpack.c.l.b16 %v119
  %v351 = vunpack.c.l.b16 %v120
  %v352 = vunpack.c.l.b16 %v121
  %v353 = vunpack.c.l.b16 %v122
  %v354 = vunpack.c.l.b16 %v123
  %v355 = vunpack.c.l.b16 %v124
  %v356 = vunpack.c.l.b16 %v125
  %v357 = vunpack.c.l.b16 %v126
  %v358 = vunpack.c.l.b16 %v127
  %v359 = vunpack.c.l.b16 %v128
  %v360 = vunpack.c.l.b16 %v129
  %v361 = vunpack.c.l.b16 %v130
  %v362 = vpack.c.b16 %v263, %v262
  %v363 = vpack.c.b16 %v265, %v264
  %v364 = vpack.c.b16 %v267, %v266
  %v365 = vpack.c.b16 %v269, %v268
  %v366 = vpack.c.b16 %v271, %v270
  %v367 = vpack.c.b16 %v273, %v272
  %v368 = vpack.c.b16 %v275, %v274
  %v369 = vpack.c.b16 %v277, %v276
  %v370 = vpack.c.b16 %v279, %v278
  %v371 = vpack.c.b16 %v281, %v280
  %v372 = vpack.c.b16 %v283, %v282
  %v373 = vpack.c.b16 %v285, %v284
  %v374 = vpack.c.b16 %v287, %v286
  %v375 = vpack.c.b16 %v289, %v288
  %v376 = vpack.c.b16 %v291, %v290
  %v377 = vpack.c.b16 %v293, %v292
  %v378 = vpack.c.b16 %v295, %v294
  %v379 = vpack.c.b16 %v297, %v296
  %v380 = vpack.c.b16 %v299, %v298
  %v381 = vpack.c.b16 %v301, %v300
  %v382 = vpack.c.b16 %v303, %v302
  %v383 = vpack.c.b16 %v305, %v304
  %v384 = vpack.c.b16 %v307, %v306
  %v385 = vpack.c.b16 %v309, %v308
  %v386 = vpack.c.b16 %v311, %v310
  %v387 = vpack.c.b16 %v313, %v312
  %v388 = vpack.c.b16 %v315, %v314
  %v389 = vpack.c.b16 %v317, %v316
  %v390 = vpack.c.b16 %v319, %v318
  %v391 = vpack.c.b16 %v321, %v320
  %v392 = vpack.c.b16 %v323, %v322
  %v393 = vpack.c.b16 %v325, %v324
  %v394 = vpack.c.b16 %v327, %v326
  %v395 = vpack.c.b16 %v329, %v328
  %v396 = vpack.c.b16 %v331, %v330
  %v397 = vpack.c.b16 %v333, %v332
  %v398 = vpack.c.b16 %v335, %v334
  %v399 = vpack.c.b16 %v337, %v336
  %v400 = vpack.c.b16 %v339, %v338
  %v401 = vpack.c.b16 %v341, %v340
  %v402 = vpack.c.b16 %v343, %v342
  %v403 = vpack.c.b16 %v345, %v344
  %v404 = vpack.c.b16 %v347, %v346
  %v405 = vpack.c.b16 %v349, %v348
  %v406 = vpack.c.b16 %v351, %v350
  %v407 = vpack.c.b16 %v353, %v352
  %v408 = vpack.c.b16 %v355, %v354
  %v409 = vpack.c.b16 %v357, %v356
  %v410 = vpack.c.b16 %v359, %v358
  %v411 = vpack.c.b16 %v361, %v360
  %vm462 = vcmask 261120
  %v464 = vsel %vm462, %v155, 0
  %466 = vmatprep.subr.bf16.mxu0 0
  %467 = vmatpush1.bf16.msra.mxu0 %v362
  %468 = vmatprep.subr.bf16.mxu0 0
  %469 = vmatpush1.bf16.msra.mxu0 %v363
  %470 = vmatprep.subr.bf16.mxu0 0
  %471 = vmatpush1.bf16.msra.mxu0 %v364
  %472 = vmatprep.subr.bf16.mxu0 0
  %473 = vmatpush1.bf16.msra.mxu0 %v365
  %474 = vmatprep.subr.bf16.mxu0 0
  %475 = vmatpush1.bf16.msra.mxu0 %v366
  %476 = vmatprep.subr.bf16.mxu0 0
  %477 = vmatpush1.bf16.msra.mxu0 %v367
  %478 = vmatprep.subr.bf16.mxu0 0
  %479 = vmatpush1.bf16.msra.mxu0 %v368
  %480 = vmatprep.subr.bf16.mxu0 0
  %481 = vmatpush1.bf16.msra.mxu0 %v369
  %482 = vmatprep.subr.bf16.mxu0 0
  %483 = vmatpush1.bf16.msra.mxu0 %v370
  %484 = vmatprep.subr.bf16.mxu0 0
  %485 = vmatpush1.bf16.msra.mxu0 %v371
  %486 = vmatprep.subr.bf16.mxu0 0
  %487 = vmatpush1.bf16.msra.mxu0 %v372
  %488 = vmatprep.subr.bf16.mxu0 0
  %489 = vmatpush1.bf16.msra.mxu0 %v373
  %490 = vmatprep.subr.bf16.mxu0 0
  %491 = vmatpush1.bf16.msra.mxu0 %v374
  %492 = vmatprep.subr.bf16.mxu0 0
  %493 = vmatpush1.bf16.msra.mxu0 %v375
  %494 = vmatprep.subr.bf16.mxu0 0
  %495 = vmatpush1.bf16.msra.mxu0 %v376
  %496 = vmatprep.subr.bf16.mxu0 0
  %497 = vmatpush1.bf16.msra.mxu0 %v377
  %498 = vmatprep.mubr.bf16.mxu0 %v150
  %499 = vmatmul.mubr.bf16.gmra.mrb[0].mxu0 %v149
  %v500 = vpop.f32.mrb[0].mxu0
  %v501 = vadd.f32 %v136, %v500
  %v502 = vpop.f32.mrb[0].mxu0
  %v503 = vpop.f32.mrb[0].mxu0
  %v504 = vpop.f32.mrb[0].mxu0
  %505 = vdwg.mxu0
  %506 = vmatprep.subr.bf16.mxu0 0
  %507 = vmatpush1.bf16.msra.mxu0 %v378
  %508 = vmatprep.subr.bf16.mxu0 0
  %509 = vmatpush1.bf16.msra.mxu0 %v379
  %510 = vmatprep.subr.bf16.mxu0 0
  %511 = vmatpush1.bf16.msra.mxu0 %v380
  %512 = vmatprep.subr.bf16.mxu0 0
  %513 = vmatpush1.bf16.msra.mxu0 %v381
  %514 = vmatprep.subr.bf16.mxu0 0
  %515 = vmatpush1.bf16.msra.mxu0 %v382
  %516 = vmatprep.subr.bf16.mxu0 0
  %517 = vmatpush1.bf16.msra.mxu0 %v383
  %518 = vmatprep.subr.bf16.mxu0 0
  %519 = vmatpush1.bf16.msra.mxu0 %v384
  %520 = vmatprep.subr.bf16.mxu0 0
  %521 = vmatpush1.bf16.msra.mxu0 %v385
  %522 = vmatprep.subr.bf16.mxu0 0
  %523 = vmatpush1.bf16.msra.mxu0 %v386
  %524 = vmatprep.subr.bf16.mxu0 0
  %525 = vmatpush1.bf16.msra.mxu0 %v387
  %526 = vmatprep.subr.bf16.mxu0 0
  %527 = vmatpush1.bf16.msra.mxu0 %v388
  %528 = vmatprep.subr.bf16.mxu0 0
  %529 = vmatpush1.bf16.msra.mxu0 %v389
  %530 = vmatprep.subr.bf16.mxu0 0
  %531 = vmatpush1.bf16.msra.mxu0 %v390
  %532 = vmatprep.subr.bf16.mxu0 0
  %533 = vmatpush1.bf16.msra.mxu0 %v391
  %534 = vmatprep.subr.bf16.mxu0 0
  %535 = vmatpush1.bf16.msra.mxu0 %v392
  %536 = vmatprep.subr.bf16.mxu0 0
  %537 = vmatpush1.bf16.msra.mxu0 %v393
  %538 = vmatprep.mubr.bf16.mxu0 %v152
  %539 = vmatmul.mubr.bf16.gmra.mrb[0].mxu0 %v151
  %v540 = vpop.f32.mrb[0].mxu0
  %v541 = vadd.f32 %v501, %v540
  %v542 = vpop.f32.mrb[0].mxu0
  %v543 = vpop.f32.mrb[0].mxu0
  %v544 = vpop.f32.mrb[0].mxu0
  %545 = vdwg.mxu0
  %546 = vmatprep.subr.bf16.mxu0 0
  %547 = vmatpush1.bf16.msra.mxu0 %v394
  %548 = vmatprep.subr.bf16.mxu0 0
  %549 = vmatpush1.bf16.msra.mxu0 %v395
  %550 = vmatprep.subr.bf16.mxu0 0
  %551 = vmatpush1.bf16.msra.mxu0 %v396
  %552 = vmatprep.subr.bf16.mxu0 0
  %553 = vmatpush1.bf16.msra.mxu0 %v397
  %554 = vmatprep.subr.bf16.mxu0 0
  %555 = vmatpush1.bf16.msra.mxu0 %v398
  %556 = vmatprep.subr.bf16.mxu0 0
  %557 = vmatpush1.bf16.msra.mxu0 %v399
  %558 = vmatprep.subr.bf16.mxu0 0
  %559 = vmatpush1.bf16.msra.mxu0 %v400
  %560 = vmatprep.subr.bf16.mxu0 0
  %561 = vmatpush1.bf16.msra.mxu0 %v401
  %562 = vmatprep.subr.bf16.mxu0 0
  %563 = vmatpush1.bf16.msra.mxu0 %v402
  %564 = vmatprep.subr.bf16.mxu0 0
  %565 = vmatpush1.bf16.msra.mxu0 %v403
  %566 = vmatprep.subr.bf16.mxu0 0
  %567 = vmatpush1.bf16.msra.mxu0 %v404
  %568 = vmatprep.subr.bf16.mxu0 0
  %569 = vmatpush1.bf16.msra.mxu0 %v405
  %570 = vmatprep.subr.bf16.mxu0 0
  %571 = vmatpush1.bf16.msra.mxu0 %v406
  %572 = vmatprep.subr.bf16.mxu0 0
  %573 = vmatpush1.bf16.msra.mxu0 %v407
  %574 = vmatprep.subr.bf16.mxu0 0
  %575 = vmatpush1.bf16.msra.mxu0 %v408
  %576 = vmatprep.subr.bf16.mxu0 0
  %577 = vmatpush1.bf16.msra.mxu0 %v409
  %578 = vmatprep.mubr.bf16.mxu0 %v154
  %579 = vmatmul.mubr.bf16.gmra.mrb[0].mxu0 %v153
  %v580 = vpop.f32.mrb[0].mxu0
  %v581 = vadd.f32 %v541, %v580
  %v582 = vpop.f32.mrb[0].mxu0
  %v583 = vpop.f32.mrb[0].mxu0
  %v584 = vpop.f32.mrb[0].mxu0
  %585 = vdwg.mxu0
  %586 = vmatprep.subr.bf16.mxu0 0
  %587 = vmatpush1.bf16.msra.mxu0 %v410
  %588 = vmatprep.subr.bf16.mxu0 0
  %589 = vmatpush1.bf16.msra.mxu0 %v411
  %590 = vmatprep.subr.bf16.mxu0 0
  %591 = vmatpush1.bf16.msra.mxu0 0
  %592 = vmatprep.subr.bf16.mxu0 0
  %593 = vmatpush1.bf16.msra.mxu0 0
  %594 = vmatprep.subr.bf16.mxu0 0
  %595 = vmatpush1.bf16.msra.mxu0 0
  %596 = vmatprep.subr.bf16.mxu0 0
  %597 = vmatpush1.bf16.msra.mxu0 0
  %598 = vmatprep.subr.bf16.mxu0 0
  %599 = vmatpush1.bf16.msra.mxu0 0
  %600 = vmatprep.subr.bf16.mxu0 0
  %601 = vmatpush1.bf16.msra.mxu0 0
  %602 = vmatprep.subr.bf16.mxu0 0
  %603 = vmatpush1.bf16.msra.mxu0 0
  %604 = vmatprep.subr.bf16.mxu0 0
  %605 = vmatpush1.bf16.msra.mxu0 0
  %606 = vmatprep.subr.bf16.mxu0 0
  %607 = vmatpush1.bf16.msra.mxu0 0
  %608 = vmatprep.subr.bf16.mxu0 0
  %609 = vmatpush1.bf16.msra.mxu0 0
  %610 = vmatprep.subr.bf16.mxu0 0
  %611 = vmatpush1.bf16.msra.mxu0 0
  %612 = vmatprep.subr.bf16.mxu0 0
  %613 = vmatpush1.bf16.msra.mxu0 0
  %614 = vmatprep.subr.bf16.mxu0 0
  %615 = vmatpush1.bf16.msra.mxu0 0
  %616 = vmatprep.subr.bf16.mxu0 0
  %617 = vmatpush1.bf16.msra.mxu0 0
  %618 = vmatprep.mubr.bf16.mxu0 0
  %619 = vmatmul.mubr.bf16.gmra.mrb[0].mxu0 %v464
  %v620 = vpop.f32.mrb[0].mxu0
  %v621 = vadd.f32 %v581, %v620
  %v622 = vpop.f32.mrb[0].mxu0
  %v623 = vpop.f32.mrb[0].mxu0
  %v624 = vpop.f32.mrb[0].mxu0
  %625 = vdwg.mxu0
  %vm626 = vcmp.gt.f32.partialorder %v621, 0.0
  %v627 = vmul.f32 %v621, 0.2
  %v628 = vsel %vm626, %v621, %v627
  %v629 = vpack.c.bf16 %v628, %v628
  %v630 = vld [vmem:[%s3] sm:$0xf]
  %v631 = vld [vmem:[%s3 + $0x4] sm:$0xf]
  %v632 = vld [vmem:[%s3 + $0x8] sm:$0xf]
  %v633 = vld [vmem:[%s3 + $0xc] sm:$0xf]
  %v634 = vld [vmem:[%s4] sm:$0x1]
  %v636 = vlaneseq
  %v637 = vshrl.u32 %v636, 7
  %v638 = vsub.s32 0, %v637
  %v639 = vrot.slane %v634, %v638
  %v645 = vunpack.c.l.b16 %v630
  %v646 = vunpack.c.l.b16 %v631
  %v647 = vunpack.c.l.b16 %v632
  %v648 = vunpack.c.l.b16 %v633
  %v649 = vpack.c.b16 %v646, %v645
  %v650 = vpack.c.b16 %v648, %v647
  %v654 = vsel %vm462, %v629, 0
  %656 = vmatprep.subr.bf16.mxu0 0
  %657 = vmatpush1.bf16.msra.mxu0 %v649
  %658 = vmatprep.subr.bf16.mxu0 0
  %659 = vmatpush1.bf16.msra.mxu0 %v650
  %660 = vmatprep.subr.bf16.mxu0 0
  %661 = vmatpush1.bf16.msra.mxu0 0
  %662 = vmatprep.subr.bf16.mxu0 0
  %663 = vmatpush1.bf16.msra.mxu0 0
  %664 = vmatprep.subr.bf16.mxu0 0
  %665 = vmatpush1.bf16.msra.mxu0 0
  %666 = vmatprep.subr.bf16.mxu0 0
  %667 = vmatpush1.bf16.msra.mxu0 0
  %668 = vmatprep.subr.bf16.mxu0 0
  %669 = vmatpush1.bf16.msra.mxu0 0
  %670 = vmatprep.subr.bf16.mxu0 0
  %671 = vmatpush1.bf16.msra.mxu0 0
  %672 = vmatprep.subr.bf16.mxu0 0
  %673 = vmatpush1.bf16.msra.mxu0 0
  %674 = vmatprep.subr.bf16.mxu0 0
  %675 = vmatpush1.bf16.msra.mxu0 0
  %676 = vmatprep.subr.bf16.mxu0 0
  %677 = vmatpush1.bf16.msra.mxu0 0
  %678 = vmatprep.subr.bf16.mxu0 0
  %679 = vmatpush1.bf16.msra.mxu0 0
  %680 = vmatprep.subr.bf16.mxu0 0
  %681 = vmatpush1.bf16.msra.mxu0 0
  %682 = vmatprep.subr.bf16.mxu0 0
  %683 = vmatpush1.bf16.msra.mxu0 0
  %684 = vmatprep.subr.bf16.mxu0 0
  %685 = vmatpush1.bf16.msra.mxu0 0
  %686 = vmatprep.subr.bf16.mxu0 0
  %687 = vmatpush1.bf16.msra.mxu0 0
  %688 = vmatprep.mubr.bf16.mxu0 0
  %689 = vmatmul.mubr.bf16.gmra.mrb[0].mxu0 %v654
  %v690 = vpop.f32.mrb[0].mxu0
  %v691 = vadd.f32 %v639, %v690
  %v692 = vpop.f32.mrb[0].mxu0
  %v693 = vpop.f32.mrb[0].mxu0
  %v694 = vpop.f32.mrb[0].mxu0
  %695 = vdwg.mxu0
  %vm696 = vcmp.gt.f32.partialorder %v691, 0.0
  %v697 = vmul.f32 %v691, 0.2
  %v698 = vsel %vm696, %v691, %v697
  %v699 = vpack.c.bf16 %v698, %v698
  %v700 = vld [vmem:[%s5] sm:$0xf]
  %v701 = vld [vmem:[%s5 + $0x4] sm:$0xf]
  %v702 = vld [vmem:[%s5 + $0x8] sm:$0xf]
  %v703 = vld [vmem:[%s5 + $0xc] sm:$0xf]
  %v704 = vld [vmem:[%s6] sm:$0x1]
  %v706 = vlaneseq
  %v707 = vshrl.u32 %v706, 7
  %v708 = vsub.s32 0, %v707
  %v709 = vrot.slane %v704, %v708
  %v715 = vunpack.c.l.b16 %v700
  %v716 = vunpack.c.l.b16 %v701
  %v717 = vunpack.c.l.b16 %v702
  %v718 = vunpack.c.l.b16 %v703
  %v719 = vpack.c.b16 %v716, %v715
  %v720 = vpack.c.b16 %v718, %v717
  %v724 = vsel %vm462, %v699, 0
  %726 = vmatprep.subr.bf16.mxu0 0
  %727 = vmatpush1.bf16.msra.mxu0 %v719
  %728 = vmatprep.subr.bf16.mxu0 0
  %729 = vmatpush1.bf16.msra.mxu0 %v720
  %730 = vmatprep.subr.bf16.mxu0 0
  %731 = vmatpush1.bf16.msra.mxu0 0
  %732 = vmatprep.subr.bf16.mxu0 0
  %733 = vmatpush1.bf16.msra.mxu0 0
  %734 = vmatprep.subr.bf16.mxu0 0
  %735 = vmatpush1.bf16.msra.mxu0 0
  %736 = vmatprep.subr.bf16.mxu0 0
  %737 = vmatpush1.bf16.msra.mxu0 0
  %738 = vmatprep.subr.bf16.mxu0 0
  %739 = vmatpush1.bf16.msra.mxu0 0
  %740 = vmatprep.subr.bf16.mxu0 0
  %741 = vmatpush1.bf16.msra.mxu0 0
  %742 = vmatprep.subr.bf16.mxu0 0
  %743 = vmatpush1.bf16.msra.mxu0 0
  %744 = vmatprep.subr.bf16.mxu0 0
  %745 = vmatpush1.bf16.msra.mxu0 0
  %746 = vmatprep.subr.bf16.mxu0 0
  %747 = vmatpush1.bf16.msra.mxu0 0
  %748 = vmatprep.subr.bf16.mxu0 0
  %749 = vmatpush1.bf16.msra.mxu0 0
  %750 = vmatprep.subr.bf16.mxu0 0
  %751 = vmatpush1.bf16.msra.mxu0 0
  %752 = vmatprep.subr.bf16.mxu0 0
  %753 = vmatpush1.bf16.msra.mxu0 0
  %754 = vmatprep.subr.bf16.mxu0 0
  %755 = vmatpush1.bf16.msra.mxu0 0
  %756 = vmatprep.subr.bf16.mxu0 0
  %757 = vmatpush1.bf16.msra.mxu0 0
  %758 = vmatprep.mubr.bf16.mxu0 0
  %759 = vmatmul.mubr.bf16.gmra.mrb[0].mxu0 %v724
  %v760 = vpop.f32.mrb[0].mxu0
  %v761 = vadd.f32 %v709, %v760
  %v762 = vpop.f32.mrb[0].mxu0
  %v763 = vpop.f32.mrb[0].mxu0
  %v764 = vpop.f32.mrb[0].mxu0
  %765 = vdwg.mxu0
  %vm766 = vcmask 15360
  %767 = vst.msk [vmem:[%s7] sm:$0xff] %vm766, %v761
  // Predicated region
  $region30: #{embedding_net_forward.9} parent=0 // pred_check
    _
  $region31: #{embedding_net_forward.9} parent=0 // pred_check_branch
    %769 = sbr.rel (0) target = $region33
  $region32: #{embedding_net_forward.9} parent=0 // pred_region
    _
  $region33: #{embedding_net_forward.9} parent=0 // pred_fallthru
    _
  // Predicated region
  $region34: #{embedding_net_forward.9} parent=0 // pred_check
    _
  $region35: #{embedding_net_forward.9} parent=0 // pred_check_branch
    %771 = sbr.rel (0) target = $region37
  $region36: #{embedding_net_forward.9} parent=0 // pred_region
    _
  $region37: #{embedding_net_forward.9} parent=0 // pred_fallthru
    _

</llo_original>
